<compile_context>
chip_gen: v5e
topology: v5e:2x2
jax: 0.10.0
libtpu: 0.0.40
codegen_flags: <defaults>
</compile_context>

<pallas_src>
import math

import jax
import jax.numpy as jnp
from jax import lax
from jax.experimental import pallas as pl
from jax.experimental.pallas import tpu as pltpu

# Scaled-down, lane-aligned configuration consistent with the module
# (original: EMBED_DIM=512, SEQ_LENGTH=25, VOCAB_SIZE=250, num_heads/ff_dim are ctor params).
EMBED_DIM = 256
NUM_HEADS = 2
HEAD_DIM = EMBED_DIM // NUM_HEADS          # 128 -> lane-aligned head slices
FF_DIM = 512
SEQ_LENGTH = 16
VOCAB_SIZE = 256
BATCH = 2

LN_EPS = 1e-5
NEG_BIG = 1e9


def _layernorm(x, gamma, beta):
    mu = jnp.mean(x, axis=-1, keepdims=True)
    var = jnp.mean((x - mu) ** 2, axis=-1, keepdims=True)
    inv = lax.rsqrt(var + LN_EPS)
    return (x - mu) * inv * gamma + beta


def _softmax(x, *, approx):
    m = jnp.max(x, axis=-1, keepdims=True)
    e = jnp.exp(x - m)
    denom = jnp.sum(e, axis=-1, keepdims=True)
    return e * pl.reciprocal(denom, approx=approx)


def _attention(q3, k3, v3, wo, bo, bias):
    """Per-batch multi-head attention core.

    q3, k3, v3 : (B, S, E) bfloat16 (projections, bias added, q pre-scaled)
    wo         : (E, E) bfloat16 out-projection weight; bo: (1, E) float32
    bias       : (B, S, S) or (B, S, 1) float32 additive mask
    returns    : (B*S, E) float32
    """
    B, S, E = q3.shape
    ctx = []
    for h in range(NUM_HEADS):                  # static unroll; HEAD_DIM = 128
        sl = slice(h * HEAD_DIM, (h + 1) * HEAD_DIM)
        s = jnp.einsum('bqd,bkd->bqk', q3[..., sl], k3[..., sl],
                       preferred_element_type=jnp.float32)          # (B, S, S)
        p = _softmax(s + bias, approx=True)
        ctx.append(jnp.einsum('bqk,bkd->bqd', p.astype(jnp.bfloat16), v3[..., sl],
                              preferred_element_type=jnp.float32))  # (B, S, Dh)
    ctx_all = jnp.concatenate(ctx, axis=-1).astype(jnp.bfloat16)     # (B, S, E)
    ctx2 = ctx_all.reshape(B * S, E)
    return jnp.dot(ctx2, wo, preferred_element_type=jnp.float32) + bo


def decoder_block_kernel(
        tok_ref, pos_ref, enc_ref, valid_ref,
        wqkv1_ref, bqkv1_ref, wo1_ref, bo1_ref,
        wq2_ref, bq2_ref, wkv2_ref, bkv2_ref, wo2_ref, bo2_ref,
        wff1_ref, bff1_ref, wff2_ref, bff2_ref,
        g1_ref, be1_ref, g2_ref, be2_ref, g3_ref, be3_ref,
        wout_ref, bout_ref,
        out_ref):
    B, S, E = tok_ref.shape
    M = B * S
    embed_scale = math.sqrt(float(E))
    bf16 = jnp.bfloat16

    # ---- masks built in-kernel from the (B, S) validity vector (f32 {0,1}) ----
    valid = valid_ref[...]                                          # (B, S)
    qi = lax.broadcasted_iota(jnp.int32, (S, S), 0)
    ki = lax.broadcasted_iota(jnp.int32, (S, S), 1)
    causal = (qi >= ki).astype(jnp.float32)                         # (S, S)
    allow_self = causal[None, :, :] * valid[:, None, :]             # (B, S, S)
    bias_self = (allow_self - 1.0) * NEG_BIG                        # 0 or -1e9
    bias_cross = (valid[:, :, None] - 1.0) * NEG_BIG                # (B, S, 1)

    # ---- embeddings: token gather done in wrapper; pos broadcast here ----
    x3 = tok_ref[...] * embed_scale + pos_ref[...]                  # (B,S,E)+(S,E)
    x = x3.reshape(M, E)

    # ---- self attention: fused QKV projection (scale folded into W_q) ----
    qkv = (jnp.dot(x.astype(bf16), wqkv1_ref[...],
                   preferred_element_type=jnp.float32)
           + bqkv1_ref[...]).astype(bf16)                            # (M, 3E) bf16
    qkv3 = qkv.reshape(B, S, 3 * E)
    attn1 = _attention(qkv3[..., :E], qkv3[..., E:2 * E], qkv3[..., 2 * E:],
                       wo1_ref[...], bo1_ref[...], bias_self)
    out1 = _layernorm(x + attn1, g1_ref[...], be1_ref[...])

    # ---- cross attention: fused KV projection of encoder outputs ----
    q2 = (jnp.dot(out1.astype(bf16), wq2_ref[...],
                  preferred_element_type=jnp.float32)
          + bq2_ref[...]).astype(bf16)                               # (M, E) bf16
    enc = enc_ref[...].reshape(M, E)
    kv2 = (jnp.dot(enc.astype(bf16), wkv2_ref[...],
                   preferred_element_type=jnp.float32)
           + bkv2_ref[...]).astype(bf16)                             # (M, 2E) bf16
    q2_3 = q2.reshape(B, S, E)
    kv2_3 = kv2.reshape(B, S, 2 * E)
    attn2 = _attention(q2_3, kv2_3[..., :E], kv2_3[..., E:],
                       wo2_ref[...], bo2_ref[...], bias_cross)
    out2 = _layernorm(out1 + attn2, g2_ref[...], be2_ref[...])

    # ---- feed forward ----
    h = jnp.dot(out2.astype(bf16), wff1_ref[...],
                preferred_element_type=jnp.float32) + bff1_ref[...]
    h = jnp.maximum(h, 0.0)
    ffn = jnp.dot(h.astype(bf16), wff2_ref[...],
                  preferred_element_type=jnp.float32) + bff2_ref[...]
    ffn = _layernorm(ffn + out2, g3_ref[...], be3_ref[...])

    # ---- vocab head + softmax (lane-dense V=256 output) ----
    logits = jnp.dot(ffn.astype(bf16), wout_ref[...],
                     preferred_element_type=jnp.float32) + bout_ref[...]
    out_ref[...] = _softmax(logits, approx=False)


def make_params(key):
    """Raw f32 parameters matching the nn.Module layout."""
    def nrm(k, shape, s=0.02):
        return jax.random.normal(k, shape, jnp.float32) * s

    ks = jax.random.split(key, 8)
    p = {}
    p["tok_table"] = nrm(ks[0], (VOCAB_SIZE, EMBED_DIM))
    p["pos_table"] = nrm(ks[1], (SEQ_LENGTH, EMBED_DIM))
    for i, kk in ((1, ks[2]), (2, ks[3])):
        sub = jax.random.split(kk, 4)
        p[f"wq{i}"] = nrm(sub[0], (EMBED_DIM, EMBED_DIM))
        p[f"wk{i}"] = nrm(sub[1], (EMBED_DIM, EMBED_DIM))
        p[f"wv{i}"] = nrm(sub[2], (EMBED_DIM, EMBED_DIM))
        p[f"wo{i}"] = nrm(sub[3], (EMBED_DIM, EMBED_DIM))
        for n in ("q", "k", "v", "o"):
            p[f"b{n}{i}"] = jnp.zeros((1, EMBED_DIM), jnp.float32)
    p["wff1"] = nrm(ks[4], (EMBED_DIM, FF_DIM))
    p["bff1"] = jnp.zeros((1, FF_DIM), jnp.float32)
    p["wff2"] = nrm(ks[5], (FF_DIM, EMBED_DIM))
    p["bff2"] = jnp.zeros((1, EMBED_DIM), jnp.float32)
    for i in (1, 2, 3):
        p[f"g{i}"] = jnp.ones((1, EMBED_DIM), jnp.float32)
        p[f"be{i}"] = jnp.zeros((1, EMBED_DIM), jnp.float32)
    p["wout"] = nrm(ks[6], (EMBED_DIM, VOCAB_SIZE))
    p["bout"] = jnp.zeros((1, VOCAB_SIZE), jnp.float32)
    return p


def pack_params(p):
    """ONE-TIME offline packing: fuse QKV / KV, fold 1/sqrt(head_dim) into the
    query projection, cast matmul weights to bf16. Done once, NOT per call."""
    bf16 = jnp.bfloat16
    scale = 1.0 / math.sqrt(HEAD_DIM)
    return {
        "tok_table": p["tok_table"],
        "pos_table": p["pos_table"],
        "wqkv1": jnp.concatenate([p["wq1"] * scale, p["wk1"], p["wv1"]],
                                 axis=1).astype(bf16),               # (E, 3E)
        "bqkv1": jnp.concatenate([p["bq1"] * scale, p["bk1"], p["bv1"]], axis=1),
        "wo1": p["wo1"].astype(bf16), "bo1": p["bo1"],
        "wq2": (p["wq2"] * scale).astype(bf16), "bq2": p["bq2"] * scale,
        "wkv2": jnp.concatenate([p["wk2"], p["wv2"]], axis=1).astype(bf16),
        "bkv2": jnp.concatenate([p["bk2"], p["bv2"]], axis=1),
        "wo2": p["wo2"].astype(bf16), "bo2": p["bo2"],
        "wff1": p["wff1"].astype(bf16), "bff1": p["bff1"],
        "wff2": p["wff2"].astype(bf16), "bff2": p["bff2"],
        "g1": p["g1"], "be1": p["be1"],
        "g2": p["g2"], "be2": p["be2"],
        "g3": p["g3"], "be3": p["be3"],
        "wout": p["wout"].astype(bf16), "bout": p["bout"],
    }


@jax.jit
def transformer_decoder_block(input_ids, encoder_outputs, packed):
    B, S = input_ids.shape
    E, V = EMBED_DIM, VOCAB_SIZE
    M = B * S

    # Token gather stays in the wrapper; pos table goes in as (S, E).
    # TODO(synk): move the gather in-kernel via scalar prefetch + pl.Element rows.
    tok = jnp.take(packed["tok_table"], input_ids, axis=0)          # (B, S, E)
    pos = packed["pos_table"][:S]                                   # (S, E)
    valid = (input_ids != 0).astype(jnp.float32)                    # (B, S)

    args = (tok, pos, encoder_outputs, valid,
            packed["wqkv1"], packed["bqkv1"], packed["wo1"], packed["bo1"],
            packed["wq2"], packed["bq2"], packed["wkv2"], packed["bkv2"],
            packed["wo2"], packed["bo2"],
            packed["wff1"], packed["bff1"], packed["wff2"], packed["bff2"],
            packed["g1"], packed["be1"], packed["g2"], packed["be2"],
            packed["g3"], packed["be3"],
            packed["wout"], packed["bout"])

    # Advisory cost estimate so XLA schedules surrounding ops around the call.
    flops = (2 * M * E * (3 * E + E + E + 2 * E + E + V)
             + 4 * M * E * FF_DIM
             + 8 * B * S * S * E)
    transc = 2 * NUM_HEADS * B * S * S + M * V
    bytes_acc = (sum(int(a.size) * a.dtype.itemsize
                     for a in jax.tree_util.tree_leaves(args))
                 + M * V * 4)

    vmem = pl.BlockSpec(memory_space=pltpu.MemorySpace.VMEM)
    out = pl.pallas_call(
        decoder_block_kernel,
        out_shape=jax.ShapeDtypeStruct((M, V), jnp.float32),
        in_specs=[vmem] * len(args),
        out_specs=vmem,
        cost_estimate=pl.CostEstimate(flops=flops, transcendentals=transc,
                                      bytes_accessed=bytes_acc),
    )(*args)
    return out.reshape(B, S, V)


if __name__ == "__main__":
    key = jax.random.PRNGKey(0)
    k_ids, k_enc, k_par = jax.random.split(key, 3)

    input_ids = jax.random.randint(k_ids, (BATCH, SEQ_LENGTH), 0, VOCAB_SIZE,
                                   dtype=jnp.int32)
    # force a few padding tokens so the masks actually do something
    input_ids = input_ids.at[:, -3:].set(0)
    encoder_outputs = jax.random.normal(
        k_enc, (BATCH, SEQ_LENGTH, EMBED_DIM), jnp.float32)

    raw_params = make_params(k_par)
    packed_params = pack_params(raw_params)      # one-time weight packing

    preds = transformer_decoder_block(input_ids, encoder_outputs, packed_params)
    preds = jax.block_until_ready(preds)

    assert preds.shape == (BATCH, SEQ_LENGTH, VOCAB_SIZE)
    assert bool(jnp.all(jnp.isfinite(preds)))
    # softmax rows sum to 1
    assert bool(jnp.allclose(jnp.sum(preds, axis=-1), 1.0, atol=1e-3))
    print("KERNEL_OK")
</pallas_src>

<mosaic_0001>
module attributes {stable_mosaic.version = 11 : i64} {
  func.func @decoder_block_kernel(%arg0: memref<2x16x256xf32, #tpu.memory_space<vmem>>, %arg1: memref<16x256xf32, #tpu.memory_space<vmem>>, %arg2: memref<2x16x256xf32, #tpu.memory_space<vmem>>, %arg3: memref<2x16xf32, #tpu.memory_space<vmem>>, %arg4: memref<256x768xbf16, #tpu.memory_space<vmem>>, %arg5: memref<1x768xf32, #tpu.memory_space<vmem>>, %arg6: memref<256x256xbf16, #tpu.memory_space<vmem>>, %arg7: memref<1x256xf32, #tpu.memory_space<vmem>>, %arg8: memref<256x256xbf16, #tpu.memory_space<vmem>>, %arg9: memref<1x256xf32, #tpu.memory_space<vmem>>, %arg10: memref<256x512xbf16, #tpu.memory_space<vmem>>, %arg11: memref<1x512xf32, #tpu.memory_space<vmem>>, %arg12: memref<256x256xbf16, #tpu.memory_space<vmem>>, %arg13: memref<1x256xf32, #tpu.memory_space<vmem>>, %arg14: memref<256x512xbf16, #tpu.memory_space<vmem>>, %arg15: memref<1x512xf32, #tpu.memory_space<vmem>>, %arg16: memref<512x256xbf16, #tpu.memory_space<vmem>>, %arg17: memref<1x256xf32, #tpu.memory_space<vmem>>, %arg18: memref<1x256xf32, #tpu.memory_space<vmem>>, %arg19: memref<1x256xf32, #tpu.memory_space<vmem>>, %arg20: memref<1x256xf32, #tpu.memory_space<vmem>>, %arg21: memref<1x256xf32, #tpu.memory_space<vmem>>, %arg22: memref<1x256xf32, #tpu.memory_space<vmem>>, %arg23: memref<1x256xf32, #tpu.memory_space<vmem>>, %arg24: memref<256x256xbf16, #tpu.memory_space<vmem>>, %arg25: memref<1x256xf32, #tpu.memory_space<vmem>>, %arg26: memref<32x256xf32, #tpu.memory_space<vmem>>) attributes {dimension_semantics = [], scalar_prefetch = 0 : i64, scratch_operands = 0 : i64, tpu.core_type = #tpu.core_type<tc>} {
    %c0 = arith.constant 0 : index
    %c0_0 = arith.constant 0 : index
    %0 = vector.load %arg3[%c0, %c0_0] : memref<2x16xf32, #tpu.memory_space<vmem>>, vector<2x16xf32>
    %1 = tpu.iota {dimensions = array<i32: 0>} : vector<16x16xi32>
    %2 = tpu.iota {dimensions = array<i32: 1>} : vector<16x16xi32>
    %3 = arith.cmpi sge, %1, %2 : vector<16x16xi32>
    %4 = arith.extui %3 : vector<16x16xi1> to vector<16x16xi32>
    %5 = arith.sitofp %4 : vector<16x16xi32> to vector<16x16xf32>
    %6 = vector.shape_cast %5 : vector<16x16xf32> to vector<1x16x16xf32>
    %7 = vector.shape_cast %0 : vector<2x16xf32> to vector<2x1x16xf32>
    %8 = vector.broadcast %6 : vector<1x16x16xf32> to vector<2x16x16xf32>
    %9 = vector.broadcast %7 : vector<2x1x16xf32> to vector<2x16x16xf32>
    %10 = arith.mulf %8, %9 : vector<2x16x16xf32>
    %cst = arith.constant 1.000000e+00 : f32
    %11 = vector.broadcast %cst : f32 to vector<2x16x16xf32>
    %12 = arith.subf %10, %11 : vector<2x16x16xf32>
    %cst_1 = arith.constant 1.000000e+09 : f32
    %13 = vector.broadcast %cst_1 : f32 to vector<2x16x16xf32>
    %14 = arith.mulf %12, %13 : vector<2x16x16xf32>
    %15 = vector.shape_cast %0 : vector<2x16xf32> to vector<2x16x1xf32>
    %cst_2 = arith.constant 1.000000e+00 : f32
    %16 = vector.broadcast %cst_2 : f32 to vector<2x16x1xf32>
    %17 = arith.subf %15, %16 : vector<2x16x1xf32>
    %cst_3 = arith.constant 1.000000e+09 : f32
    %18 = vector.broadcast %cst_3 : f32 to vector<2x16x1xf32>
    %19 = arith.mulf %17, %18 : vector<2x16x1xf32>
    %c0_4 = arith.constant 0 : index
    %c0_5 = arith.constant 0 : index
    %c0_6 = arith.constant 0 : index
    %20 = vector.load %arg0[%c0_4, %c0_5, %c0_6] : memref<2x16x256xf32, #tpu.memory_space<vmem>>, vector<2x16x256xf32>
    %cst_7 = arith.constant 1.600000e+01 : f32
    %21 = vector.broadcast %cst_7 : f32 to vector<2x16x256xf32>
    %22 = arith.mulf %20, %21 : vector<2x16x256xf32>
    %c0_8 = arith.constant 0 : index
    %c0_9 = arith.constant 0 : index
    %23 = vector.load %arg1[%c0_8, %c0_9] : memref<16x256xf32, #tpu.memory_space<vmem>>, vector<16x256xf32>
    %24 = vector.shape_cast %23 : vector<16x256xf32> to vector<1x16x256xf32>
    %25 = vector.broadcast %24 : vector<1x16x256xf32> to vector<2x16x256xf32>
    %26 = arith.addf %22, %25 : vector<2x16x256xf32>
    %27 = vector.shape_cast %26 : vector<2x16x256xf32> to vector<32x256xf32>
    %28 = arith.truncf %27 : vector<32x256xf32> to vector<32x256xbf16>
    %c0_10 = arith.constant 0 : index
    %c0_11 = arith.constant 0 : index
    %29 = vector.load %arg4[%c0_10, %c0_11] : memref<256x768xbf16, #tpu.memory_space<vmem>>, vector<256x768xbf16>
    %cst_12 = arith.constant dense<0.000000e+00> : vector<32x768xf32>
    %30 = tpu.matmul %28, %29, %cst_12 {dimension_numbers = #tpu.dot_dimension_numbers<[1], [0], [0], [1], [0, 0, 1, 1], [], []>} : vector<32x256xbf16>, vector<256x768xbf16>, vector<32x768xf32> -> vector<32x768xf32>
    %c0_13 = arith.constant 0 : index
    %c0_14 = arith.constant 0 : index
    %31 = vector.load %arg5[%c0_13, %c0_14] : memref<1x768xf32, #tpu.memory_space<vmem>>, vector<1x768xf32>
    %32 = vector.broadcast %31 : vector<1x768xf32> to vector<32x768xf32>
    %33 = arith.addf %30, %32 : vector<32x768xf32>
    %34 = arith.truncf %33 : vector<32x768xf32> to vector<32x768xbf16>
    %35 = vector.shape_cast %34 : vector<32x768xbf16> to vector<2x16x768xbf16>
    %36 = vector.extract_strided_slice %35 {offsets = [0, 0, 0], sizes = [2, 16, 256], strides = [1, 1, 1]} : vector<2x16x768xbf16> to vector<2x16x256xbf16>
    %37 = vector.extract_strided_slice %35 {offsets = [0, 0, 256], sizes = [2, 16, 256], strides = [1, 1, 1]} : vector<2x16x768xbf16> to vector<2x16x256xbf16>
    %38 = vector.extract_strided_slice %35 {offsets = [0, 0, 512], sizes = [2, 16, 256], strides = [1, 1, 1]} : vector<2x16x768xbf16> to vector<2x16x256xbf16>
    %c0_15 = arith.constant 0 : index
    %c0_16 = arith.constant 0 : index
    %39 = vector.load %arg6[%c0_15, %c0_16] : memref<256x256xbf16, #tpu.memory_space<vmem>>, vector<256x256xbf16>
    %c0_17 = arith.constant 0 : index
    %c0_18 = arith.constant 0 : index
    %40 = vector.load %arg7[%c0_17, %c0_18] : memref<1x256xf32, #tpu.memory_space<vmem>>, vector<1x256xf32>
    %41 = vector.extract_strided_slice %36 {offsets = [0, 0, 0], sizes = [2, 16, 128], strides = [1, 1, 1]} : vector<2x16x256xbf16> to vector<2x16x128xbf16>
    %42 = vector.extract_strided_slice %37 {offsets = [0, 0, 0], sizes = [2, 16, 128], strides = [1, 1, 1]} : vector<2x16x256xbf16> to vector<2x16x128xbf16>
    "tpu.trace_start"() <{level = 10 : i32, message = "bqd,bkd->bqk"}> : () -> ()
    %cst_19 = arith.constant dense<0.000000e+00> : vector<2x16x16xf32>
    %43 = tpu.matmul %41, %42, %cst_19 {dimension_numbers = #tpu.dot_dimension_numbers<[2], [2], [1], [1], [0, 0, 0, 1, 1, 1], [0], [0]>} : vector<2x16x128xbf16>, vector<2x16x128xbf16>, vector<2x16x16xf32> -> vector<2x16x16xf32>
    "tpu.trace_stop"() : () -> ()
    %44 = arith.addf %43, %14 : vector<2x16x16xf32>
    %cst_20 = arith.constant dense<0xFF800000> : vector<2x16xf32>
    %45 = vector.multi_reduction <maximumf>, %44, %cst_20 [2] : vector<2x16x16xf32> to vector<2x16xf32>
    %46 = vector.shape_cast %45 : vector<2x16xf32> to vector<2x16x1xf32>
    %47 = vector.broadcast %46 : vector<2x16x1xf32> to vector<2x16x16xf32>
    %48 = arith.subf %44, %47 : vector<2x16x16xf32>
    %49 = math.exp %48 : vector<2x16x16xf32>
    %cst_21 = arith.constant dense<0.000000e+00> : vector<2x16xf32>
    %50 = vector.multi_reduction <add>, %49, %cst_21 [2] : vector<2x16x16xf32> to vector<2x16xf32>
    %51 = vector.shape_cast %50 : vector<2x16xf32> to vector<2x16x1xf32>
    %52 = tpu.reciprocal %51 {approx = true} : vector<2x16x1xf32> -> vector<2x16x1xf32>
    %53 = vector.broadcast %52 : vector<2x16x1xf32> to vector<2x16x16xf32>
    %54 = arith.mulf %49, %53 : vector<2x16x16xf32>
    %55 = arith.truncf %54 : vector<2x16x16xf32> to vector<2x16x16xbf16>
    %56 = vector.extract_strided_slice %38 {offsets = [0, 0, 0], sizes = [2, 16, 128], strides = [1, 1, 1]} : vector<2x16x256xbf16> to vector<2x16x128xbf16>
    "tpu.trace_start"() <{level = 10 : i32, message = "bqk,bkd->bqd"}> : () -> ()
    %cst_22 = arith.constant dense<0.000000e+00> : vector<2x16x128xf32>
    %57 = tpu.matmul %55, %56, %cst_22 {dimension_numbers = #tpu.dot_dimension_numbers<[2], [1], [1], [2], [0, 0, 0, 1, 1, 2], [0], [0]>} : vector<2x16x16xbf16>, vector<2x16x128xbf16>, vector<2x16x128xf32> -> vector<2x16x128xf32>
    "tpu.trace_stop"() : () -> ()
    %58 = vector.extract_strided_slice %36 {offsets = [0, 0, 128], sizes = [2, 16, 128], strides = [1, 1, 1]} : vector<2x16x256xbf16> to vector<2x16x128xbf16>
    %59 = vector.extract_strided_slice %37 {offsets = [0, 0, 128], sizes = [2, 16, 128], strides = [1, 1, 1]} : vector<2x16x256xbf16> to vector<2x16x128xbf16>
    "tpu.trace_start"() <{level = 10 : i32, message = "bqd,bkd->bqk"}> : () -> ()
    %cst_23 = arith.constant dense<0.000000e+00> : vector<2x16x16xf32>
    %60 = tpu.matmul %58, %59, %cst_23 {dimension_numbers = #tpu.dot_dimension_numbers<[2], [2], [1], [1], [0, 0, 0, 1, 1, 1], [0], [0]>} : vector<2x16x128xbf16>, vector<2x16x128xbf16>, vector<2x16x16xf32> -> vector<2x16x16xf32>
    "tpu.trace_stop"() : () -> ()
    %61 = arith.addf %60, %14 : vector<2x16x16xf32>
    %cst_24 = arith.constant dense<0xFF800000> : vector<2x16xf32>
    %62 = vector.multi_reduction <maximumf>, %61, %cst_24 [2] : vector<2x16x16xf32> to vector<2x16xf32>
    %63 = vector.shape_cast %62 : vector<2x16xf32> to vector<2x16x1xf32>
    %64 = vector.broadcast %63 : vector<2x16x1xf32> to vector<2x16x16xf32>
    %65 = arith.subf %61, %64 : vector<2x16x16xf32>
    %66 = math.exp %65 : vector<2x16x16xf32>
    %cst_25 = arith.constant dense<0.000000e+00> : vector<2x16xf32>
    %67 = vector.multi_reduction <add>, %66, %cst_25 [2] : vector<2x16x16xf32> to vector<2x16xf32>
    %68 = vector.shape_cast %67 : vector<2x16xf32> to vector<2x16x1xf32>
    %69 = tpu.reciprocal %68 {approx = true} : vector<2x16x1xf32> -> vector<2x16x1xf32>
    %70 = vector.broadcast %69 : vector<2x16x1xf32> to vector<2x16x16xf32>
    %71 = arith.mulf %66, %70 : vector<2x16x16xf32>
    %72 = arith.truncf %71 : vector<2x16x16xf32> to vector<2x16x16xbf16>
    %73 = vector.extract_strided_slice %38 {offsets = [0, 0, 128], sizes = [2, 16, 128], strides = [1, 1, 1]} : vector<2x16x256xbf16> to vector<2x16x128xbf16>
    "tpu.trace_start"() <{level = 10 : i32, message = "bqk,bkd->bqd"}> : () -> ()
    %cst_26 = arith.constant dense<0.000000e+00> : vector<2x16x128xf32>
    %74 = tpu.matmul %72, %73, %cst_26 {dimension_numbers = #tpu.dot_dimension_numbers<[2], [1], [1], [2], [0, 0, 0, 1, 1, 2], [0], [0]>} : vector<2x16x16xbf16>, vector<2x16x128xbf16>, vector<2x16x128xf32> -> vector<2x16x128xf32>
    "tpu.trace_stop"() : () -> ()
    %75 = tpu.concatenate %57, %74 in 2 : vector<2x16x128xf32>, vector<2x16x128xf32> -> vector<2x16x256xf32>
    %76 = arith.truncf %75 : vector<2x16x256xf32> to vector<2x16x256xbf16>
    %77 = vector.shape_cast %76 : vector<2x16x256xbf16> to vector<32x256xbf16>
    %cst_27 = arith.constant dense<0.000000e+00> : vector<32x256xf32>
    %78 = tpu.matmul %77, %39, %cst_27 {dimension_numbers = #tpu.dot_dimension_numbers<[1], [0], [0], [1], [0, 0, 1, 1], [], []>} : vector<32x256xbf16>, vector<256x256xbf16>, vector<32x256xf32> -> vector<32x256xf32>
    %79 = vector.broadcast %40 : vector<1x256xf32> to vector<32x256xf32>
    %80 = arith.addf %78, %79 : vector<32x256xf32>
    %81 = arith.addf %27, %80 : vector<32x256xf32>
    %c0_28 = arith.constant 0 : index
    %c0_29 = arith.constant 0 : index
    %82 = vector.load %arg18[%c0_28, %c0_29] : memref<1x256xf32, #tpu.memory_space<vmem>>, vector<1x256xf32>
    %c0_30 = arith.constant 0 : index
    %c0_31 = arith.constant 0 : index
    %83 = vector.load %arg19[%c0_30, %c0_31] : memref<1x256xf32, #tpu.memory_space<vmem>>, vector<1x256xf32>
    %cst_32 = arith.constant dense<0.000000e+00> : vector<32xf32>
    %84 = vector.multi_reduction <add>, %81, %cst_32 [1] : vector<32x256xf32> to vector<32xf32>
    %85 = vector.shape_cast %84 : vector<32xf32> to vector<32x1xf32>
    %cst_33 = arith.constant 2.560000e+02 : f32
    %86 = vector.broadcast %cst_33 : f32 to vector<32x1xf32>
    %87 = arith.divf %85, %86 : vector<32x1xf32>
    %88 = vector.broadcast %87 : vector<32x1xf32> to vector<32x256xf32>
    %89 = arith.subf %81, %88 : vector<32x256xf32>
    %90 = arith.mulf %89, %89 : vector<32x256xf32>
    %cst_34 = arith.constant dense<0.000000e+00> : vector<32xf32>
    %91 = vector.multi_reduction <add>, %90, %cst_34 [1] : vector<32x256xf32> to vector<32xf32>
    %92 = vector.shape_cast %91 : vector<32xf32> to vector<32x1xf32>
    %cst_35 = arith.constant 2.560000e+02 : f32
    %93 = vector.broadcast %cst_35 : f32 to vector<32x1xf32>
    %94 = arith.divf %92, %93 : vector<32x1xf32>
    %cst_36 = arith.constant 9.99999974E-6 : f32
    %95 = vector.broadcast %cst_36 : f32 to vector<32x1xf32>
    %96 = arith.addf %94, %95 : vector<32x1xf32>
    %97 = math.rsqrt %96 : vector<32x1xf32>
    %98 = vector.broadcast %87 : vector<32x1xf32> to vector<32x256xf32>
    %99 = arith.subf %81, %98 : vector<32x256xf32>
    %100 = vector.broadcast %97 : vector<32x1xf32> to vector<32x256xf32>
    %101 = arith.mulf %99, %100 : vector<32x256xf32>
    %102 = vector.broadcast %82 : vector<1x256xf32> to vector<32x256xf32>
    %103 = arith.mulf %101, %102 : vector<32x256xf32>
    %104 = vector.broadcast %83 : vector<1x256xf32> to vector<32x256xf32>
    %105 = arith.addf %103, %104 : vector<32x256xf32>
    %106 = arith.truncf %105 : vector<32x256xf32> to vector<32x256xbf16>
    %c0_37 = arith.constant 0 : index
    %c0_38 = arith.constant 0 : index
    %107 = vector.load %arg8[%c0_37, %c0_38] : memref<256x256xbf16, #tpu.memory_space<vmem>>, vector<256x256xbf16>
    %cst_39 = arith.constant dense<0.000000e+00> : vector<32x256xf32>
    %108 = tpu.matmul %106, %107, %cst_39 {dimension_numbers = #tpu.dot_dimension_numbers<[1], [0], [0], [1], [0, 0, 1, 1], [], []>} : vector<32x256xbf16>, vector<256x256xbf16>, vector<32x256xf32> -> vector<32x256xf32>
    %c0_40 = arith.constant 0 : index
    %c0_41 = arith.constant 0 : index
    %109 = vector.load %arg9[%c0_40, %c0_41] : memref<1x256xf32, #tpu.memory_space<vmem>>, vector<1x256xf32>
    %110 = vector.broadcast %109 : vector<1x256xf32> to vector<32x256xf32>
    %111 = arith.addf %108, %110 : vector<32x256xf32>
    %112 = arith.truncf %111 : vector<32x256xf32> to vector<32x256xbf16>
    %c0_42 = arith.constant 0 : index
    %c0_43 = arith.constant 0 : index
    %c0_44 = arith.constant 0 : index
    %113 = vector.load %arg2[%c0_42, %c0_43, %c0_44] : memref<2x16x256xf32, #tpu.memory_space<vmem>>, vector<2x16x256xf32>
    %114 = vector.shape_cast %113 : vector<2x16x256xf32> to vector<32x256xf32>
    %115 = arith.truncf %114 : vector<32x256xf32> to vector<32x256xbf16>
    %c0_45 = arith.constant 0 : index
    %c0_46 = arith.constant 0 : index
    %116 = vector.load %arg10[%c0_45, %c0_46] : memref<256x512xbf16, #tpu.memory_space<vmem>>, vector<256x512xbf16>
    %cst_47 = arith.constant dense<0.000000e+00> : vector<32x512xf32>
    %117 = tpu.matmul %115, %116, %cst_47 {dimension_numbers = #tpu.dot_dimension_numbers<[1], [0], [0], [1], [0, 0, 1, 1], [], []>} : vector<32x256xbf16>, vector<256x512xbf16>, vector<32x512xf32> -> vector<32x512xf32>
    %c0_48 = arith.constant 0 : index
    %c0_49 = arith.constant 0 : index
    %118 = vector.load %arg11[%c0_48, %c0_49] : memref<1x512xf32, #tpu.memory_space<vmem>>, vector<1x512xf32>
    %119 = vector.broadcast %118 : vector<1x512xf32> to vector<32x512xf32>
    %120 = arith.addf %117, %119 : vector<32x512xf32>
    %121 = arith.truncf %120 : vector<32x512xf32> to vector<32x512xbf16>
    %122 = vector.shape_cast %112 : vector<32x256xbf16> to vector<2x16x256xbf16>
    %123 = vector.shape_cast %121 : vector<32x512xbf16> to vector<2x16x512xbf16>
    %124 = vector.extract_strided_slice %123 {offsets = [0, 0, 0], sizes = [2, 16, 256], strides = [1, 1, 1]} : vector<2x16x512xbf16> to vector<2x16x256xbf16>
    %125 = vector.extract_strided_slice %123 {offsets = [0, 0, 256], sizes = [2, 16, 256], strides = [1, 1, 1]} : vector<2x16x512xbf16> to vector<2x16x256xbf16>
    %c0_50 = arith.constant 0 : index
    %c0_51 = arith.constant 0 : index
    %126 = vector.load %arg12[%c0_50, %c0_51] : memref<256x256xbf16, #tpu.memory_space<vmem>>, vector<256x256xbf16>
    %c0_52 = arith.constant 0 : index
    %c0_53 = arith.constant 0 : index
    %127 = vector.load %arg13[%c0_52, %c0_53] : memref<1x256xf32, #tpu.memory_space<vmem>>, vector<1x256xf32>
    %128 = vector.extract_strided_slice %122 {offsets = [0, 0, 0], sizes = [2, 16, 128], strides = [1, 1, 1]} : vector<2x16x256xbf16> to vector<2x16x128xbf16>
    %129 = vector.extract_strided_slice %124 {offsets = [0, 0, 0], sizes = [2, 16, 128], strides = [1, 1, 1]} : vector<2x16x256xbf16> to vector<2x16x128xbf16>
    "tpu.trace_start"() <{level = 10 : i32, message = "bqd,bkd->bqk"}> : () -> ()
    %cst_54 = arith.constant dense<0.000000e+00> : vector<2x16x16xf32>
    %130 = tpu.matmul %128, %129, %cst_54 {dimension_numbers = #tpu.dot_dimension_numbers<[2], [2], [1], [1], [0, 0, 0, 1, 1, 1], [0], [0]>} : vector<2x16x128xbf16>, vector<2x16x128xbf16>, vector<2x16x16xf32> -> vector<2x16x16xf32>
    "tpu.trace_stop"() : () -> ()
    %131 = vector.broadcast %19 : vector<2x16x1xf32> to vector<2x16x16xf32>
    %132 = arith.addf %130, %131 : vector<2x16x16xf32>
    %cst_55 = arith.constant dense<0xFF800000> : vector<2x16xf32>
    %133 = vector.multi_reduction <maximumf>, %132, %cst_55 [2] : vector<2x16x16xf32> to vector<2x16xf32>
    %134 = vector.shape_cast %133 : vector<2x16xf32> to vector<2x16x1xf32>
    %135 = vector.broadcast %134 : vector<2x16x1xf32> to vector<2x16x16xf32>
    %136 = arith.subf %132, %135 : vector<2x16x16xf32>
    %137 = math.exp %136 : vector<2x16x16xf32>
    %cst_56 = arith.constant dense<0.000000e+00> : vector<2x16xf32>
    %138 = vector.multi_reduction <add>, %137, %cst_56 [2] : vector<2x16x16xf32> to vector<2x16xf32>
    %139 = vector.shape_cast %138 : vector<2x16xf32> to vector<2x16x1xf32>
    %140 = tpu.reciprocal %139 {approx = true} : vector<2x16x1xf32> -> vector<2x16x1xf32>
    %141 = vector.broadcast %140 : vector<2x16x1xf32> to vector<2x16x16xf32>
    %142 = arith.mulf %137, %141 : vector<2x16x16xf32>
    %143 = arith.truncf %142 : vector<2x16x16xf32> to vector<2x16x16xbf16>
    %144 = vector.extract_strided_slice %125 {offsets = [0, 0, 0], sizes = [2, 16, 128], strides = [1, 1, 1]} : vector<2x16x256xbf16> to vector<2x16x128xbf16>
    "tpu.trace_start"() <{level = 10 : i32, message = "bqk,bkd->bqd"}> : () -> ()
    %cst_57 = arith.constant dense<0.000000e+00> : vector<2x16x128xf32>
    %145 = tpu.matmul %143, %144, %cst_57 {dimension_numbers = #tpu.dot_dimension_numbers<[2], [1], [1], [2], [0, 0, 0, 1, 1, 2], [0], [0]>} : vector<2x16x16xbf16>, vector<2x16x128xbf16>, vector<2x16x128xf32> -> vector<2x16x128xf32>
    "tpu.trace_stop"() : () -> ()
    %146 = vector.extract_strided_slice %122 {offsets = [0, 0, 128], sizes = [2, 16, 128], strides = [1, 1, 1]} : vector<2x16x256xbf16> to vector<2x16x128xbf16>
    %147 = vector.extract_strided_slice %124 {offsets = [0, 0, 128], sizes = [2, 16, 128], strides = [1, 1, 1]} : vector<2x16x256xbf16> to vector<2x16x128xbf16>
    "tpu.trace_start"() <{level = 10 : i32, message = "bqd,bkd->bqk"}> : () -> ()
    %cst_58 = arith.constant dense<0.000000e+00> : vector<2x16x16xf32>
    %148 = tpu.matmul %146, %147, %cst_58 {dimension_numbers = #tpu.dot_dimension_numbers<[2], [2], [1], [1], [0, 0, 0, 1, 1, 1], [0], [0]>} : vector<2x16x128xbf16>, vector<2x16x128xbf16>, vector<2x16x16xf32> -> vector<2x16x16xf32>
    "tpu.trace_stop"() : () -> ()
    %149 = vector.broadcast %19 : vector<2x16x1xf32> to vector<2x16x16xf32>
    %150 = arith.addf %148, %149 : vector<2x16x16xf32>
    %cst_59 = arith.constant dense<0xFF800000> : vector<2x16xf32>
    %151 = vector.multi_reduction <maximumf>, %150, %cst_59 [2] : vector<2x16x16xf32> to vector<2x16xf32>
    %152 = vector.shape_cast %151 : vector<2x16xf32> to vector<2x16x1xf32>
    %153 = vector.broadcast %152 : vector<2x16x1xf32> to vector<2x16x16xf32>
    %154 = arith.subf %150, %153 : vector<2x16x16xf32>
    %155 = math.exp %154 : vector<2x16x16xf32>
    %cst_60 = arith.constant dense<0.000000e+00> : vector<2x16xf32>
    %156 = vector.multi_reduction <add>, %155, %cst_60 [2] : vector<2x16x16xf32> to vector<2x16xf32>
    %157 = vector.shape_cast %156 : vector<2x16xf32> to vector<2x16x1xf32>
    %158 = tpu.reciprocal %157 {approx = true} : vector<2x16x1xf32> -> vector<2x16x1xf32>
    %159 = vector.broadcast %158 : vector<2x16x1xf32> to vector<2x16x16xf32>
    %160 = arith.mulf %155, %159 : vector<2x16x16xf32>
    %161 = arith.truncf %160 : vector<2x16x16xf32> to vector<2x16x16xbf16>
    %162 = vector.extract_strided_slice %125 {offsets = [0, 0, 128], sizes = [2, 16, 128], strides = [1, 1, 1]} : vector<2x16x256xbf16> to vector<2x16x128xbf16>
    "tpu.trace_start"() <{level = 10 : i32, message = "bqk,bkd->bqd"}> : () -> ()
    %cst_61 = arith.constant dense<0.000000e+00> : vector<2x16x128xf32>
    %163 = tpu.matmul %161, %162, %cst_61 {dimension_numbers = #tpu.dot_dimension_numbers<[2], [1], [1], [2], [0, 0, 0, 1, 1, 2], [0], [0]>} : vector<2x16x16xbf16>, vector<2x16x128xbf16>, vector<2x16x128xf32> -> vector<2x16x128xf32>
    "tpu.trace_stop"() : () -> ()
    %164 = tpu.concatenate %145, %163 in 2 : vector<2x16x128xf32>, vector<2x16x128xf32> -> vector<2x16x256xf32>
    %165 = arith.truncf %164 : vector<2x16x256xf32> to vector<2x16x256xbf16>
    %166 = vector.shape_cast %165 : vector<2x16x256xbf16> to vector<32x256xbf16>
    %cst_62 = arith.constant dense<0.000000e+00> : vector<32x256xf32>
    %167 = tpu.matmul %166, %126, %cst_62 {dimension_numbers = #tpu.dot_dimension_numbers<[1], [0], [0], [1], [0, 0, 1, 1], [], []>} : vector<32x256xbf16>, vector<256x256xbf16>, vector<32x256xf32> -> vector<32x256xf32>
    %168 = vector.broadcast %127 : vector<1x256xf32> to vector<32x256xf32>
    %169 = arith.addf %167, %168 : vector<32x256xf32>
    %170 = arith.addf %105, %169 : vector<32x256xf32>
    %c0_63 = arith.constant 0 : index
    %c0_64 = arith.constant 0 : index
    %171 = vector.load %arg20[%c0_63, %c0_64] : memref<1x256xf32, #tpu.memory_space<vmem>>, vector<1x256xf32>
    %c0_65 = arith.constant 0 : index
    %c0_66 = arith.constant 0 : index
    %172 = vector.load %arg21[%c0_65, %c0_66] : memref<1x256xf32, #tpu.memory_space<vmem>>, vector<1x256xf32>
    %cst_67 = arith.constant dense<0.000000e+00> : vector<32xf32>
    %173 = vector.multi_reduction <add>, %170, %cst_67 [1] : vector<32x256xf32> to vector<32xf32>
    %174 = vector.shape_cast %173 : vector<32xf32> to vector<32x1xf32>
    %cst_68 = arith.constant 2.560000e+02 : f32
    %175 = vector.broadcast %cst_68 : f32 to vector<32x1xf32>
    %176 = arith.divf %174, %175 : vector<32x1xf32>
    %177 = vector.broadcast %176 : vector<32x1xf32> to vector<32x256xf32>
    %178 = arith.subf %170, %177 : vector<32x256xf32>
    %179 = arith.mulf %178, %178 : vector<32x256xf32>
    %cst_69 = arith.constant dense<0.000000e+00> : vector<32xf32>
    %180 = vector.multi_reduction <add>, %179, %cst_69 [1] : vector<32x256xf32> to vector<32xf32>
    %181 = vector.shape_cast %180 : vector<32xf32> to vector<32x1xf32>
    %cst_70 = arith.constant 2.560000e+02 : f32
    %182 = vector.broadcast %cst_70 : f32 to vector<32x1xf32>
    %183 = arith.divf %181, %182 : vector<32x1xf32>
    %cst_71 = arith.constant 9.99999974E-6 : f32
    %184 = vector.broadcast %cst_71 : f32 to vector<32x1xf32>
    %185 = arith.addf %183, %184 : vector<32x1xf32>
    %186 = math.rsqrt %185 : vector<32x1xf32>
    %187 = vector.broadcast %176 : vector<32x1xf32> to vector<32x256xf32>
    %188 = arith.subf %170, %187 : vector<32x256xf32>
    %189 = vector.broadcast %186 : vector<32x1xf32> to vector<32x256xf32>
    %190 = arith.mulf %188, %189 : vector<32x256xf32>
    %191 = vector.broadcast %171 : vector<1x256xf32> to vector<32x256xf32>
    %192 = arith.mulf %190, %191 : vector<32x256xf32>
    %193 = vector.broadcast %172 : vector<1x256xf32> to vector<32x256xf32>
    %194 = arith.addf %192, %193 : vector<32x256xf32>
    %195 = arith.truncf %194 : vector<32x256xf32> to vector<32x256xbf16>
    %c0_72 = arith.constant 0 : index
    %c0_73 = arith.constant 0 : index
    %196 = vector.load %arg14[%c0_72, %c0_73] : memref<256x512xbf16, #tpu.memory_space<vmem>>, vector<256x512xbf16>
    %cst_74 = arith.constant dense<0.000000e+00> : vector<32x512xf32>
    %197 = tpu.matmul %195, %196, %cst_74 {dimension_numbers = #tpu.dot_dimension_numbers<[1], [0], [0], [1], [0, 0, 1, 1], [], []>} : vector<32x256xbf16>, vector<256x512xbf16>, vector<32x512xf32> -> vector<32x512xf32>
    %c0_75 = arith.constant 0 : index
    %c0_76 = arith.constant 0 : index
    %198 = vector.load %arg15[%c0_75, %c0_76] : memref<1x512xf32, #tpu.memory_space<vmem>>, vector<1x512xf32>
    %199 = vector.broadcast %198 : vector<1x512xf32> to vector<32x512xf32>
    %200 = arith.addf %197, %199 : vector<32x512xf32>
    %cst_77 = arith.constant 0.000000e+00 : f32
    %201 = vector.broadcast %cst_77 : f32 to vector<32x512xf32>
    %202 = arith.maximumf %200, %201 : vector<32x512xf32>
    %203 = arith.truncf %202 : vector<32x512xf32> to vector<32x512xbf16>
    %c0_78 = arith.constant 0 : index
    %c0_79 = arith.constant 0 : index
    %204 = vector.load %arg16[%c0_78, %c0_79] : memref<512x256xbf16, #tpu.memory_space<vmem>>, vector<512x256xbf16>
    %cst_80 = arith.constant dense<0.000000e+00> : vector<32x256xf32>
    %205 = tpu.matmul %203, %204, %cst_80 {dimension_numbers = #tpu.dot_dimension_numbers<[1], [0], [0], [1], [0, 0, 1, 1], [], []>} : vector<32x512xbf16>, vector<512x256xbf16>, vector<32x256xf32> -> vector<32x256xf32>
    %c0_81 = arith.constant 0 : index
    %c0_82 = arith.constant 0 : index
    %206 = vector.load %arg17[%c0_81, %c0_82] : memref<1x256xf32, #tpu.memory_space<vmem>>, vector<1x256xf32>
    %207 = vector.broadcast %206 : vector<1x256xf32> to vector<32x256xf32>
    %208 = arith.addf %205, %207 : vector<32x256xf32>
    %209 = arith.addf %208, %194 : vector<32x256xf32>
    %c0_83 = arith.constant 0 : index
    %c0_84 = arith.constant 0 : index
    %210 = vector.load %arg22[%c0_83, %c0_84] : memref<1x256xf32, #tpu.memory_space<vmem>>, vector<1x256xf32>
    %c0_85 = arith.constant 0 : index
    %c0_86 = arith.constant 0 : index
    %211 = vector.load %arg23[%c0_85, %c0_86] : memref<1x256xf32, #tpu.memory_space<vmem>>, vector<1x256xf32>
    %cst_87 = arith.constant dense<0.000000e+00> : vector<32xf32>
    %212 = vector.multi_reduction <add>, %209, %cst_87 [1] : vector<32x256xf32> to vector<32xf32>
    %213 = vector.shape_cast %212 : vector<32xf32> to vector<32x1xf32>
    %cst_88 = arith.constant 2.560000e+02 : f32
    %214 = vector.broadcast %cst_88 : f32 to vector<32x1xf32>
    %215 = arith.divf %213, %214 : vector<32x1xf32>
    %216 = vector.broadcast %215 : vector<32x1xf32> to vector<32x256xf32>
    %217 = arith.subf %209, %216 : vector<32x256xf32>
    %218 = arith.mulf %217, %217 : vector<32x256xf32>
    %cst_89 = arith.constant dense<0.000000e+00> : vector<32xf32>
    %219 = vector.multi_reduction <add>, %218, %cst_89 [1] : vector<32x256xf32> to vector<32xf32>
    %220 = vector.shape_cast %219 : vector<32xf32> to vector<32x1xf32>
    %cst_90 = arith.constant 2.560000e+02 : f32
    %221 = vector.broadcast %cst_90 : f32 to vector<32x1xf32>
    %222 = arith.divf %220, %221 : vector<32x1xf32>
    %cst_91 = arith.constant 9.99999974E-6 : f32
    %223 = vector.broadcast %cst_91 : f32 to vector<32x1xf32>
    %224 = arith.addf %222, %223 : vector<32x1xf32>
    %225 = math.rsqrt %224 : vector<32x1xf32>
    %226 = vector.broadcast %215 : vector<32x1xf32> to vector<32x256xf32>
    %227 = arith.subf %209, %226 : vector<32x256xf32>
    %228 = vector.broadcast %225 : vector<32x1xf32> to vector<32x256xf32>
    %229 = arith.mulf %227, %228 : vector<32x256xf32>
    %230 = vector.broadcast %210 : vector<1x256xf32> to vector<32x256xf32>
    %231 = arith.mulf %229, %230 : vector<32x256xf32>
    %232 = vector.broadcast %211 : vector<1x256xf32> to vector<32x256xf32>
    %233 = arith.addf %231, %232 : vector<32x256xf32>
    %234 = arith.truncf %233 : vector<32x256xf32> to vector<32x256xbf16>
    %c0_92 = arith.constant 0 : index
    %c0_93 = arith.constant 0 : index
    %235 = vector.load %arg24[%c0_92, %c0_93] : memref<256x256xbf16, #tpu.memory_space<vmem>>, vector<256x256xbf16>
    %cst_94 = arith.constant dense<0.000000e+00> : vector<32x256xf32>
    %236 = tpu.matmul %234, %235, %cst_94 {dimension_numbers = #tpu.dot_dimension_numbers<[1], [0], [0], [1], [0, 0, 1, 1], [], []>} : vector<32x256xbf16>, vector<256x256xbf16>, vector<32x256xf32> -> vector<32x256xf32>
    %c0_95 = arith.constant 0 : index
    %c0_96 = arith.constant 0 : index
    %237 = vector.load %arg25[%c0_95, %c0_96] : memref<1x256xf32, #tpu.memory_space<vmem>>, vector<1x256xf32>
    %238 = vector.broadcast %237 : vector<1x256xf32> to vector<32x256xf32>
    %239 = arith.addf %236, %238 : vector<32x256xf32>
    %cst_97 = arith.constant dense<0xFF800000> : vector<32xf32>
    %240 = vector.multi_reduction <maximumf>, %239, %cst_97 [1] : vector<32x256xf32> to vector<32xf32>
    %241 = vector.shape_cast %240 : vector<32xf32> to vector<32x1xf32>
    %242 = vector.broadcast %241 : vector<32x1xf32> to vector<32x256xf32>
    %243 = arith.subf %239, %242 : vector<32x256xf32>
    %244 = math.exp %243 : vector<32x256xf32>
    %cst_98 = arith.constant dense<0.000000e+00> : vector<32xf32>
    %245 = vector.multi_reduction <add>, %244, %cst_98 [1] : vector<32x256xf32> to vector<32xf32>
    %246 = vector.shape_cast %245 : vector<32xf32> to vector<32x1xf32>
    %247 = tpu.reciprocal %246 : vector<32x1xf32> -> vector<32x1xf32>
    %248 = vector.broadcast %247 : vector<32x1xf32> to vector<32x256xf32>
    %249 = arith.mulf %244, %248 : vector<32x256xf32>
    %c0_99 = arith.constant 0 : index
    %c0_100 = arith.constant 0 : index
    %250 = vector.load %arg26[%c0_99, %c0_100] : memref<32x256xf32, #tpu.memory_space<vmem>>, vector<32x256xf32>
    tpu.vector_store %arg26[%c0_99, %c0_100], %249 {strides = array<i32>} : memref<32x256xf32, #tpu.memory_space<vmem>>, vector<32x256xf32>,
    return
  }
}

</mosaic_0001>

<llo_original>
// kernel: transformer_decoder_block.1
$region0: #{transformer_decoder_block.1}
  #allocation0 [shape = 'u32[]', space=smem, size = 0x4, offset = 0x4, fixed_abs, tag = 'smem constant byte address 0x4 - core index']
  #allocation1 [shape = 'u32[72,128]{1,0:T(1,128)}', space=vmem, size = 0x9000, scoped, tag = 'internal scratch']
  %s0 = inlined_call_operand.vmem [shape: f32[2,16,256], index: 0, kind: input, shape index: {}]
  %s1 = inlined_call_operand.vmem [shape: f32[16,256], index: 1, kind: input, shape index: {}]
  %s2 = inlined_call_operand.vmem [shape: f32[2,16,256], index: 2, kind: input, shape index: {}]
  %s3 = inlined_call_operand.vmem [shape: f32[2,16], index: 3, kind: input, shape index: {}]
  %s4 = inlined_call_operand.hbm [shape: bf16[256,768], index: 4, kind: input, shape index: {}]
  %s5 = inlined_call_operand.vmem [shape: f32[1,768], index: 5, kind: input, shape index: {}]
  %s6 = inlined_call_operand.hbm [shape: bf16[256,256], index: 6, kind: input, shape index: {}]
  %s7 = inlined_call_operand.vmem [shape: f32[1,256], index: 7, kind: input, shape index: {}]
  %s8 = inlined_call_operand.hbm [shape: bf16[256,256], index: 8, kind: input, shape index: {}]
  %s9 = inlined_call_operand.vmem [shape: f32[1,256], index: 9, kind: input, shape index: {}]
  %s10 = inlined_call_operand.vmem [shape: bf16[256,512], index: 10, kind: input, shape index: {}]
  %s11 = inlined_call_operand.vmem [shape: f32[1,512], index: 11, kind: input, shape index: {}]
  %s12 = inlined_call_operand.hbm [shape: bf16[256,256], index: 12, kind: input, shape index: {}]
  %s13 = inlined_call_operand.vmem [shape: f32[1,256], index: 13, kind: input, shape index: {}]
  %s14 = inlined_call_operand.hbm [shape: bf16[256,512], index: 14, kind: input, shape index: {}]
  %s15 = inlined_call_operand.vmem [shape: f32[1,512], index: 15, kind: input, shape index: {}]
  %s16 = inlined_call_operand.hbm [shape: bf16[512,256], index: 16, kind: input, shape index: {}]
  %s17 = inlined_call_operand.vmem [shape: f32[1,256], index: 17, kind: input, shape index: {}]
  %s18 = inlined_call_operand.vmem [shape: f32[1,256], index: 18, kind: input, shape index: {}]
  %s19 = inlined_call_operand.vmem [shape: f32[1,256], index: 19, kind: input, shape index: {}]
  %s20 = inlined_call_operand.vmem [shape: f32[1,256], index: 20, kind: input, shape index: {}]
  %s21 = inlined_call_operand.vmem [shape: f32[1,256], index: 21, kind: input, shape index: {}]
  %s22 = inlined_call_operand.vmem [shape: f32[1,256], index: 22, kind: input, shape index: {}]
  %s23 = inlined_call_operand.vmem [shape: f32[1,256], index: 23, kind: input, shape index: {}]
  %s24 = inlined_call_operand.hbm [shape: bf16[256,256], index: 24, kind: input, shape index: {}]
  %s25 = inlined_call_operand.vmem [shape: f32[1,256], index: 25, kind: input, shape index: {}]
  %s26 = inlined_call_operand.hbm [shape: f32[32,256], index: 26, kind: output, shape index: {}]
  %s27 = sld [smem:[#allocation0]]
  $region142: #{transformer_decoder_block.1} parent=0
    _
  %s29 = ssub.s32 1, %s27
  %s30 = scalar_select 0, %s29, %s27
  $region1: #{transformer_decoder_block.1} parent=0
    #allocation2 [shape = 'u8[393216]{0}', space=vmem, size = 0x60000, scoped, tag = 'input window, operand 4, single buffered']
    #allocation3 [shape = 's32[1]{0}', space=sflag, size = 0x4, scoped, tag = 'scoped memory for transformer_decoder_block.1']
    #allocation4 [shape = 's32[1]{0}', space=sflag, size = 0x4, scoped, tag = 'scoped memory for transformer_decoder_block.1']
    #allocation5 [shape = 'u8[131072]{0}', space=vmem, size = 0x20000, scoped, tag = 'input window, operand 6, single buffered']
    #allocation6 [shape = 's32[1]{0}', space=sflag, size = 0x4, scoped, tag = 'scoped memory for transformer_decoder_block.1']
    #allocation7 [shape = 'u8[131072]{0}', space=vmem, size = 0x20000, scoped, tag = 'input window, operand 8, single buffered']
    #allocation8 [shape = 'u8[131072]{0}', space=vmem, size = 0x20000, scoped, tag = 'input window, operand 12, single buffered']
    #allocation9 [shape = 's32[1]{0}', space=sflag, size = 0x4, scoped, tag = 'scoped memory for transformer_decoder_block.1']
    #allocation10 [shape = 'u8[262144]{0}', space=vmem, size = 0x40000, scoped, tag = 'input window, operand 14, single buffered']
    #allocation11 [shape = 'u8[262144]{0}', space=vmem, size = 0x40000, scoped, tag = 'input window, operand 16, single buffered']
    #allocation12 [shape = 's32[1]{0}', space=sflag, size = 0x4, scoped, tag = 'scoped memory for transformer_decoder_block.1']
    #allocation13 [shape = 'u8[131072]{0}', space=vmem, size = 0x20000, scoped, tag = 'input window, operand 24, single buffered']
    #allocation14 [shape = 'u8[32768]{0}', space=vmem, size = 0x8000, scoped, tag = 'output window, operand 0, single buffered']
    %31 = vsyncpa [#allocation3], 0
    %32 = vsyncpa [#allocation6], 0
    %33 = vsyncpa [#allocation9], 0
    %34 = vsyncpa [#allocation12], 0
    %35 = vsyncpa [#allocation4], 0
    // Predicated region
    $region2: #{transformer_decoder_block.1} parent=1 // pred_check
      _
    $region3: #{transformer_decoder_block.1} parent=1 // pred_check_branch
      %37 = sbr.rel (0) target = $region5
    $region4: #{transformer_decoder_block.1} parent=1 // pred_region
      _
    $region5: #{transformer_decoder_block.1} parent=1 // pred_fallthru
      _
    // Predicated region
    $region6: #{transformer_decoder_block.1} parent=1 // pred_check
      _
    $region7: #{transformer_decoder_block.1} parent=1 // pred_check_branch
      %39 = sbr.rel (0) target = $region9
    $region8: #{transformer_decoder_block.1} parent=1 // pred_region
      _
    $region9: #{transformer_decoder_block.1} parent=1 // pred_fallthru
      _
    // Predicated region
    $region10: #{transformer_decoder_block.1} parent=1 // pred_check
      _
    $region11: #{transformer_decoder_block.1} parent=1 // pred_check_branch
      %41 = sbr.rel (0) target = $region13
    $region12: #{transformer_decoder_block.1} parent=1 // pred_region
      _
    $region13: #{transformer_decoder_block.1} parent=1 // pred_fallthru
      _
    // Predicated region
    $region14: #{transformer_decoder_block.1} parent=1 // pred_check
      _
    $region15: #{transformer_decoder_block.1} parent=1 // pred_check_branch
      %43 = sbr.rel (0) target = $region17
    $region16: #{transformer_decoder_block.1} parent=1 // pred_region
      _
    $region17: #{transformer_decoder_block.1} parent=1 // pred_fallthru
      _
    // Predicated region
    $region18: #{transformer_decoder_block.1} parent=1 // pred_check
      _
    $region19: #{transformer_decoder_block.1} parent=1 // pred_check_branch
      %45 = sbr.rel (0) target = $region21
    $region20: #{transformer_decoder_block.1} parent=1 // pred_region
      %47 = vsyncadd [#allocation3], 0
      %s48 = sshll.u32 %s4, 4
      %s49 = int_to_ptr.hbm [resolvable:$true] %s48
      %s50 = sshll.u32 [#allocation2], 4
      %s51 = int_to_ptr.vmem [resolvable:$true] %s50
      %56 = dma.hbm_to_vmem [thread:$0]  %s49, 12288, %s51, [#allocation3], 384, 384, 24
    $region21: #{transformer_decoder_block.1} parent=1 // pred_fallthru
      _
    // Predicated region
    $region22: #{transformer_decoder_block.1} parent=1 // pred_check
      _
    $region23: #{transformer_decoder_block.1} parent=1 // pred_check_branch
      %58 = sbr.rel (0) target = $region25
    $region24: #{transformer_decoder_block.1} parent=1 // pred_region
      _
    $region25: #{transformer_decoder_block.1} parent=1 // pred_fallthru
      _
    // Predicated region
    $region26: #{transformer_decoder_block.1} parent=1 // pred_check
      _
    $region27: #{transformer_decoder_block.1} parent=1 // pred_check_branch
      %60 = sbr.rel (0) target = $region29
    $region28: #{transformer_decoder_block.1} parent=1 // pred_region
      %62 = vsyncadd [#allocation6], 0
      %s63 = sshll.u32 %s6, 4
      %s64 = int_to_ptr.hbm [resolvable:$true] %s63
      %s65 = sshll.u32 [#allocation5], 4
      %s66 = int_to_ptr.vmem [resolvable:$true] %s65
      %71 = dma.hbm_to_vmem [thread:$0]  %s64, 4096, %s66, [#allocation6], 128, 128, 8
    $region29: #{transformer_decoder_block.1} parent=1 // pred_fallthru
      _
    // Predicated region
    $region30: #{transformer_decoder_block.1} parent=1 // pred_check
      _
    $region31: #{transformer_decoder_block.1} parent=1 // pred_check_branch
      %73 = sbr.rel (0) target = $region33
    $region32: #{transformer_decoder_block.1} parent=1 // pred_region
      _
    $region33: #{transformer_decoder_block.1} parent=1 // pred_fallthru
      _
    // Predicated region
    $region34: #{transformer_decoder_block.1} parent=1 // pred_check
      _
    $region35: #{transformer_decoder_block.1} parent=1 // pred_check_branch
      %75 = sbr.rel (0) target = $region37
    $region36: #{transformer_decoder_block.1} parent=1 // pred_region
      %77 = vsyncadd [#allocation6], 0
      %s78 = sshll.u32 %s8, 4
      %s79 = int_to_ptr.hbm [resolvable:$true] %s78
      %s80 = sshll.u32 [#allocation7], 4
      %s81 = int_to_ptr.vmem [resolvable:$true] %s80
      %86 = dma.hbm_to_vmem [thread:$0]  %s79, 4096, %s81, [#allocation6], 128, 128, 8
    $region37: #{transformer_decoder_block.1} parent=1 // pred_fallthru
      _
    // Predicated region
    $region38: #{transformer_decoder_block.1} parent=1 // pred_check
      _
    $region39: #{transformer_decoder_block.1} parent=1 // pred_check_branch
      %88 = sbr.rel (0) target = $region41
    $region40: #{transformer_decoder_block.1} parent=1 // pred_region
      _
    $region41: #{transformer_decoder_block.1} parent=1 // pred_fallthru
      _
    // Predicated region
    $region42: #{transformer_decoder_block.1} parent=1 // pred_check
      _
    $region43: #{transformer_decoder_block.1} parent=1 // pred_check_branch
      %90 = sbr.rel (0) target = $region45
    $region44: #{transformer_decoder_block.1} parent=1 // pred_region
      _
    $region45: #{transformer_decoder_block.1} parent=1 // pred_fallthru
      _
    // Predicated region
    $region46: #{transformer_decoder_block.1} parent=1 // pred_check
      _
    $region47: #{transformer_decoder_block.1} parent=1 // pred_check_branch
      %92 = sbr.rel (0) target = $region49
    $region48: #{transformer_decoder_block.1} parent=1 // pred_region
      _
    $region49: #{transformer_decoder_block.1} parent=1 // pred_fallthru
      _
    // Predicated region
    $region50: #{transformer_decoder_block.1} parent=1 // pred_check
      _
    $region51: #{transformer_decoder_block.1} parent=1 // pred_check_branch
      %94 = sbr.rel (0) target = $region53
    $region52: #{transformer_decoder_block.1} parent=1 // pred_region
      %96 = vsyncadd [#allocation9], 0
      %s97 = sshll.u32 %s12, 4
      %s98 = int_to_ptr.hbm [resolvable:$true] %s97
      %s99 = sshll.u32 [#allocation8], 4
      %s100 = int_to_ptr.vmem [resolvable:$true] %s99
      %105 = dma.hbm_to_vmem [thread:$0]  %s98, 4096, %s100, [#allocation9], 128, 128, 8
    $region53: #{transformer_decoder_block.1} parent=1 // pred_fallthru
      _
    // Predicated region
    $region54: #{transformer_decoder_block.1} parent=1 // pred_check
      _
    $region55: #{transformer_decoder_block.1} parent=1 // pred_check_branch
      %107 = sbr.rel (0) target = $region57
    $region56: #{transformer_decoder_block.1} parent=1 // pred_region
      _
    $region57: #{transformer_decoder_block.1} parent=1 // pred_fallthru
      _
    // Predicated region
    $region58: #{transformer_decoder_block.1} parent=1 // pred_check
      _
    $region59: #{transformer_decoder_block.1} parent=1 // pred_check_branch
      %109 = sbr.rel (0) target = $region61
    $region60: #{transformer_decoder_block.1} parent=1 // pred_region
      %111 = vsyncadd [#allocation9], 0
      %s112 = sshll.u32 %s14, 4
      %s113 = int_to_ptr.hbm [resolvable:$true] %s112
      %s114 = sshll.u32 [#allocation10], 4
      %s115 = int_to_ptr.vmem [resolvable:$true] %s114
      %120 = dma.hbm_to_vmem [thread:$0]  %s113, 8192, %s115, [#allocation9], 256, 256, 16
    $region61: #{transformer_decoder_block.1} parent=1 // pred_fallthru
      _
    // Predicated region
    $region62: #{transformer_decoder_block.1} parent=1 // pred_check
      _
    $region63: #{transformer_decoder_block.1} parent=1 // pred_check_branch
      %122 = sbr.rel (0) target = $region65
    $region64: #{transformer_decoder_block.1} parent=1 // pred_region
      _
    $region65: #{transformer_decoder_block.1} parent=1 // pred_fallthru
      _
    // Predicated region
    $region66: #{transformer_decoder_block.1} parent=1 // pred_check
      _
    $region67: #{transformer_decoder_block.1} parent=1 // pred_check_branch
      %124 = sbr.rel (0) target = $region69
    $region68: #{transformer_decoder_block.1} parent=1 // pred_region
      %126 = vsyncadd [#allocation12], 0
      %s127 = sshll.u32 %s16, 4
      %s128 = int_to_ptr.hbm [resolvable:$true] %s127
      %s129 = sshll.u32 [#allocation11], 4
      %s130 = int_to_ptr.vmem [resolvable:$true] %s129
      %135 = dma.hbm_to_vmem [thread:$0]  %s128, 8192, %s130, [#allocation12], 128, 128, 8
    $region69: #{transformer_decoder_block.1} parent=1 // pred_fallthru
      _
    // Predicated region
    $region70: #{transformer_decoder_block.1} parent=1 // pred_check
      _
    $region71: #{transformer_decoder_block.1} parent=1 // pred_check_branch
      %137 = sbr.rel (0) target = $region73
    $region72: #{transformer_decoder_block.1} parent=1 // pred_region
      _
    $region73: #{transformer_decoder_block.1} parent=1 // pred_fallthru
      _
    // Predicated region
    $region74: #{transformer_decoder_block.1} parent=1 // pred_check
      _
    $region75: #{transformer_decoder_block.1} parent=1 // pred_check_branch
      %139 = sbr.rel (0) target = $region77
    $region76: #{transformer_decoder_block.1} parent=1 // pred_region
      _
    $region77: #{transformer_decoder_block.1} parent=1 // pred_fallthru
      _
    // Predicated region
    $region78: #{transformer_decoder_block.1} parent=1 // pred_check
      _
    $region79: #{transformer_decoder_block.1} parent=1 // pred_check_branch
      %141 = sbr.rel (0) target = $region81
    $region80: #{transformer_decoder_block.1} parent=1 // pred_region
      _
    $region81: #{transformer_decoder_block.1} parent=1 // pred_fallthru
      _
    // Predicated region
    $region82: #{transformer_decoder_block.1} parent=1 // pred_check
      _
    $region83: #{transformer_decoder_block.1} parent=1 // pred_check_branch
      %143 = sbr.rel (0) target = $region85
    $region84: #{transformer_decoder_block.1} parent=1 // pred_region
      _
    $region85: #{transformer_decoder_block.1} parent=1 // pred_fallthru
      _
    // Predicated region
    $region86: #{transformer_decoder_block.1} parent=1 // pred_check
      _
    $region87: #{transformer_decoder_block.1} parent=1 // pred_check_branch
      %145 = sbr.rel (0) target = $region89
    $region88: #{transformer_decoder_block.1} parent=1 // pred_region
      _
    $region89: #{transformer_decoder_block.1} parent=1 // pred_fallthru
      _
    // Predicated region
    $region90: #{transformer_decoder_block.1} parent=1 // pred_check
      _
    $region91: #{transformer_decoder_block.1} parent=1 // pred_check_branch
      %147 = sbr.rel (0) target = $region93
    $region92: #{transformer_decoder_block.1} parent=1 // pred_region
      _
    $region93: #{transformer_decoder_block.1} parent=1 // pred_fallthru
      _
    // Predicated region
    $region94: #{transformer_decoder_block.1} parent=1 // pred_check
      _
    $region95: #{transformer_decoder_block.1} parent=1 // pred_check_branch
      %149 = sbr.rel (0) target = $region97
    $region96: #{transformer_decoder_block.1} parent=1 // pred_region
      _
    $region97: #{transformer_decoder_block.1} parent=1 // pred_fallthru
      _
    // Predicated region
    $region98: #{transformer_decoder_block.1} parent=1 // pred_check
      _
    $region99: #{transformer_decoder_block.1} parent=1 // pred_check_branch
      %151 = sbr.rel (0) target = $region101
    $region100: #{transformer_decoder_block.1} parent=1 // pred_region
      %153 = vsyncadd [#allocation12], 0
      %s154 = sshll.u32 %s24, 4
      %s155 = int_to_ptr.hbm [resolvable:$true] %s154
      %s156 = sshll.u32 [#allocation13], 4
      %s157 = int_to_ptr.vmem [resolvable:$true] %s156
      %162 = dma.hbm_to_vmem [thread:$0]  %s155, 4096, %s157, [#allocation12], 128, 128, 8
    $region101: #{transformer_decoder_block.1} parent=1 // pred_fallthru
      _
    // Predicated region
    $region102: #{transformer_decoder_block.1} parent=1 // pred_check
      _
    $region103: #{transformer_decoder_block.1} parent=1 // pred_check_branch
      %164 = sbr.rel (0) target = $region105
    $region104: #{transformer_decoder_block.1} parent=1 // pred_region
      _
    $region105: #{transformer_decoder_block.1} parent=1 // pred_fallthru
      _
    // Predicated region
    $region106: #{transformer_decoder_block.1} parent=1 // pred_check
      _
    $region107: #{transformer_decoder_block.1} parent=1 // pred_check_branch
      %166 = sbr.rel (0) target = $region109
    $region108: #{transformer_decoder_block.1} parent=1 // pred_region
      %168 = dma.done [#allocation3], 12288
    $region109: #{transformer_decoder_block.1} parent=1 // pred_fallthru
      _
    // Predicated region
    $region110: #{transformer_decoder_block.1} parent=1 // pred_check
      _
    $region111: #{transformer_decoder_block.1} parent=1 // pred_check_branch
      %170 = sbr.rel (0) target = $region113
    $region112: #{transformer_decoder_block.1} parent=1 // pred_region
      %172 = dma.done [#allocation6], 4096
    $region113: #{transformer_decoder_block.1} parent=1 // pred_fallthru
      _
    // Predicated region
    $region114: #{transformer_decoder_block.1} parent=1 // pred_check
      _
    $region115: #{transformer_decoder_block.1} parent=1 // pred_check_branch
      %174 = sbr.rel (0) target = $region117
    $region116: #{transformer_decoder_block.1} parent=1 // pred_region
      %176 = dma.done [#allocation6], 4096
    $region117: #{transformer_decoder_block.1} parent=1 // pred_fallthru
      _
    // Predicated region
    $region118: #{transformer_decoder_block.1} parent=1 // pred_check
      _
    $region119: #{transformer_decoder_block.1} parent=1 // pred_check_branch
      %178 = sbr.rel (0) target = $region121
    $region120: #{transformer_decoder_block.1} parent=1 // pred_region
      %180 = dma.done [#allocation9], 4096
    $region121: #{transformer_decoder_block.1} parent=1 // pred_fallthru
      _
    // Predicated region
    $region122: #{transformer_decoder_block.1} parent=1 // pred_check
      _
    $region123: #{transformer_decoder_block.1} parent=1 // pred_check_branch
      %182 = sbr.rel (0) target = $region125
    $region124: #{transformer_decoder_block.1} parent=1 // pred_region
      %184 = dma.done [#allocation9], 8192
    $region125: #{transformer_decoder_block.1} parent=1 // pred_fallthru
      _
    // Predicated region
    $region126: #{transformer_decoder_block.1} parent=1 // pred_check
      _
    $region127: #{transformer_decoder_block.1} parent=1 // pred_check_branch
      %186 = sbr.rel (0) target = $region129
    $region128: #{transformer_decoder_block.1} parent=1 // pred_region
      %188 = dma.done [#allocation12], 8192
    $region129: #{transformer_decoder_block.1} parent=1 // pred_fallthru
      _
    // Predicated region
    $region130: #{transformer_decoder_block.1} parent=1 // pred_check
      _
    $region131: #{transformer_decoder_block.1} parent=1 // pred_check_branch
      %190 = sbr.rel (0) target = $region133
    $region132: #{transformer_decoder_block.1} parent=1 // pred_region
      %192 = dma.done [#allocation12], 4096
    $region133: #{transformer_decoder_block.1} parent=1 // pred_fallthru
      _
    %v194 = vld [vmem:[%s3] sm:$0x3]
    %v195 = vlaneseq
    %v196 = vshrl.u32 %v195, 7
    %v197 = vadd.s32 %v196, 8
    %v198 = vlaneseq
    %v199 = vand.u32 %v198, 127
    %vm200 = vcmp.ge.s32.totalorder %v196, %v199
    %vm201 = vcmp.ge.s32.totalorder %v197, %v199
    %v202 = vsel %vm200, 1, 0
    %v203 = vsel %vm201, 1, 0
    %v204 = vcvt.s32.f32 %v202
    %v205 = vcvt.s32.f32 %v203
    %v207 = vrot.slane %v194, 1
    %v208 = vperm.slane %v194, 0
    %v209 = vperm.slane %v207, 0
    %v212 = vmul.f32 %v204, %v208
    %v213 = vmul.f32 %v205, %v208
    %v214 = vmul.f32 %v204, %v209
    %v215 = vmul.f32 %v205, %v209
    %v216 = vsub.f32 %v212, 1.0
    %v217 = vsub.f32 %v213, 1.0
    %v218 = vsub.f32 %v214, 1.0
    %v219 = vsub.f32 %v215, 1.0
    %v220 = vmul.f32 %v216, 1e+09
    %v221 = vmul.f32 %v217, 1e+09
    %v222 = vmul.f32 %v218, 1e+09
    %v223 = vmul.f32 %v219, 1e+09
    %v224 = vperm.slane %v194, 0
    %v225 = vlaneseq
    %v226 = vshrl.u32 %v225, 7
    %228 = vset.pattern.permute.xlu0 %v226
    %229 = vperm.xlu0 %228, %v224
    %v230 = vpop.permute.xlu0 %229
    %v231 = vlaneseq
    %v232 = vshrl.u32 %v231, 7
    %v233 = vadd.s32 %v232, 8
    %234 = vset.pattern.permute.xlu0 %v233
    %235 = vperm.xlu0 %234, %v224
    %v236 = vpop.permute.xlu0 %235
    %v237 = vperm.slane %v194, 1
    %v238 = vlaneseq
    %v239 = vshrl.u32 %v238, 7
    %241 = vset.pattern.permute.xlu0 %v239
    %242 = vperm.xlu0 %241, %v237
    %v243 = vpop.permute.xlu0 %242
    %v244 = vlaneseq
    %v245 = vshrl.u32 %v244, 7
    %v246 = vadd.s32 %v245, 8
    %247 = vset.pattern.permute.xlu0 %v246
    %248 = vperm.xlu0 %247, %v237
    %v249 = vpop.permute.xlu0 %248
    %v250 = vsub.f32 %v230, 1.0
    %v251 = vsub.f32 %v236, 1.0
    %v252 = vsub.f32 %v243, 1.0
    %v253 = vsub.f32 %v249, 1.0
    %v254 = vmul.f32 %v250, 1e+09
    %v255 = vmul.f32 %v251, 1e+09
    %v256 = vmul.f32 %v252, 1e+09
    %v257 = vmul.f32 %v253, 1e+09
    %v258 = vld [vmem:[%s0] sm:$0xff]
    %v259 = vld [vmem:[%s0 + $0x8] sm:$0xff]
    %v260 = vld [vmem:[%s0 + $0x10] sm:$0xff]
    %v261 = vld [vmem:[%s0 + $0x18] sm:$0xff]
    %v262 = vld [vmem:[%s0 + $0x20] sm:$0xff]
    %v263 = vld [vmem:[%s0 + $0x28] sm:$0xff]
    %v264 = vld [vmem:[%s0 + $0x30] sm:$0xff]
    %v265 = vld [vmem:[%s0 + $0x38] sm:$0xff]
    %v266 = vmul.f32 %v258, 16.0
    %v267 = vmul.f32 %v259, 16.0
    %v268 = vmul.f32 %v260, 16.0
    %v269 = vmul.f32 %v261, 16.0
    %v270 = vmul.f32 %v262, 16.0
    %v271 = vmul.f32 %v263, 16.0
    %v272 = vmul.f32 %v264, 16.0
    %v273 = vmul.f32 %v265, 16.0
    %v274 = vld [vmem:[%s1] sm:$0xff]
    %v275 = vld [vmem:[%s1 + $0x8] sm:$0xff]
    %v276 = vld [vmem:[%s1 + $0x10] sm:$0xff]
    %v277 = vld [vmem:[%s1 + $0x18] sm:$0xff]
    %v278 = vadd.f32 %v266, %v274
    %v279 = vadd.f32 %v267, %v275
    %v280 = vadd.f32 %v268, %v276
    %v281 = vadd.f32 %v269, %v277
    %v282 = vadd.f32 %v270, %v274
    %v283 = vadd.f32 %v271, %v275
    %v284 = vadd.f32 %v272, %v276
    %v285 = vadd.f32 %v273, %v277
    %v286 = vpack.c.bf16 %v280, %v278
    %v287 = vpack.c.bf16 %v281, %v279
    %v288 = vpack.c.bf16 %v284, %v282
    %v289 = vpack.c.bf16 %v285, %v283
    %v290 = vld [vmem:[#allocation2] sm:$0xff]
    %v291 = vld [vmem:[#allocation2 + $0x8] sm:$0xff]
    %v292 = vld [vmem:[#allocation2 + $0x10] sm:$0xff]
    %v293 = vld [vmem:[#allocation2 + $0x18] sm:$0xff]
    %v294 = vld [vmem:[#allocation2 + $0x20] sm:$0xff]
    %v295 = vld [vmem:[#allocation2 + $0x28] sm:$0xff]
    %v296 = vld [vmem:[#allocation2 + $0x30] sm:$0xff]
    %v297 = vld [vmem:[#allocation2 + $0x38] sm:$0xff]
    %v298 = vld [vmem:[#allocation2 + $0x40] sm:$0xff]
    %v299 = vld [vmem:[#allocation2 + $0x48] sm:$0xff]
    %v300 = vld [vmem:[#allocation2 + $0x50] sm:$0xff]
    %v301 = vld [vmem:[#allocation2 + $0x58] sm:$0xff]
    %v302 = vld [vmem:[#allocation2 + $0x60] sm:$0xff]
    %v303 = vld [vmem:[#allocation2 + $0x68] sm:$0xff]
    %v304 = vld [vmem:[#allocation2 + $0x70] sm:$0xff]
    %v305 = vld [vmem:[#allocation2 + $0x78] sm:$0xff]
    %v306 = vld [vmem:[#allocation2 + $0x80] sm:$0xff]
    %v307 = vld [vmem:[#allocation2 + $0x88] sm:$0xff]
    %v308 = vld [vmem:[#allocation2 + $0x90] sm:$0xff]
    %v309 = vld [vmem:[#allocation2 + $0x98] sm:$0xff]
    %v310 = vld [vmem:[#allocation2 + $0xa0] sm:$0xff]
    %v311 = vld [vmem:[#allocation2 + $0xa8] sm:$0xff]
    %v312 = vld [vmem:[#allocation2 + $0xb0] sm:$0xff]
    %v313 = vld [vmem:[#allocation2 + $0xb8] sm:$0xff]
    %v314 = vld [vmem:[#allocation2 + $0xc0] sm:$0xff]
    %v315 = vld [vmem:[#allocation2 + $0xc8] sm:$0xff]
    %v316 = vld [vmem:[#allocation2 + $0xd0] sm:$0xff]
    %v317 = vld [vmem:[#allocation2 + $0xd8] sm:$0xff]
    %v318 = vld [vmem:[#allocation2 + $0xe0] sm:$0xff]
    %v319 = vld [vmem:[#allocation2 + $0xe8] sm:$0xff]
    %v320 = vld [vmem:[#allocation2 + $0xf0] sm:$0xff]
    %v321 = vld [vmem:[#allocation2 + $0xf8] sm:$0xff]
    %v322 = vld [vmem:[#allocation2 + $0x100] sm:$0xff]
    %v323 = vld [vmem:[#allocation2 + $0x108] sm:$0xff]
    %v324 = vld [vmem:[#allocation2 + $0x110] sm:$0xff]
    %v325 = vld [vmem:[#allocation2 + $0x118] sm:$0xff]
    %v326 = vld [vmem:[#allocation2 + $0x120] sm:$0xff]
    %v327 = vld [vmem:[#allocation2 + $0x128] sm:$0xff]
    %v328 = vld [vmem:[#allocation2 + $0x130] sm:$0xff]
    %v329 = vld [vmem:[#allocation2 + $0x138] sm:$0xff]
    %v330 = vld [vmem:[#allocation2 + $0x140] sm:$0xff]
    %v331 = vld [vmem:[#allocation2 + $0x148] sm:$0xff]
    %v332 = vld [vmem:[#allocation2 + $0x150] sm:$0xff]
    %v333 = vld [vmem:[#allocation2 + $0x158] sm:$0xff]
    %v334 = vld [vmem:[#allocation2 + $0x160] sm:$0xff]
    %v335 = vld [vmem:[#allocation2 + $0x168] sm:$0xff]
    %v336 = vld [vmem:[#allocation2 + $0x170] sm:$0xff]
    %v337 = vld [vmem:[#allocation2 + $0x178] sm:$0xff]
    %v338 = vld [vmem:[#allocation2 + $0x180] sm:$0xff]
    %v339 = vld [vmem:[#allocation2 + $0x188] sm:$0xff]
    %v340 = vld [vmem:[#allocation2 + $0x190] sm:$0xff]
    %v341 = vld [vmem:[#allocation2 + $0x198] sm:$0xff]
    %v342 = vld [vmem:[#allocation2 + $0x1a0] sm:$0xff]
    %v343 = vld [vmem:[#allocation2 + $0x1a8] sm:$0xff]
    %v344 = vld [vmem:[#allocation2 + $0x1b0] sm:$0xff]
    %v345 = vld [vmem:[#allocation2 + $0x1b8] sm:$0xff]
    %v346 = vld [vmem:[#allocation2 + $0x1c0] sm:$0xff]
    %v347 = vld [vmem:[#allocation2 + $0x1c8] sm:$0xff]
    %v348 = vld [vmem:[#allocation2 + $0x1d0] sm:$0xff]
    %v349 = vld [vmem:[#allocation2 + $0x1d8] sm:$0xff]
    %v350 = vld [vmem:[#allocation2 + $0x1e0] sm:$0xff]
    %v351 = vld [vmem:[#allocation2 + $0x1e8] sm:$0xff]
    %v352 = vld [vmem:[#allocation2 + $0x1f0] sm:$0xff]
    %v353 = vld [vmem:[#allocation2 + $0x1f8] sm:$0xff]
    %v354 = vld [vmem:[#allocation2 + $0x200] sm:$0xff]
    %v355 = vld [vmem:[#allocation2 + $0x208] sm:$0xff]
    %v356 = vld [vmem:[#allocation2 + $0x210] sm:$0xff]
    %v357 = vld [vmem:[#allocation2 + $0x218] sm:$0xff]
    %v358 = vld [vmem:[#allocation2 + $0x220] sm:$0xff]
    %v359 = vld [vmem:[#allocation2 + $0x228] sm:$0xff]
    %v360 = vld [vmem:[#allocation2 + $0x230] sm:$0xff]
    %v361 = vld [vmem:[#allocation2 + $0x238] sm:$0xff]
    %v362 = vld [vmem:[#allocation2 + $0x240] sm:$0xff]
    %v363 = vld [vmem:[#allocation2 + $0x248] sm:$0xff]
    %v364 = vld [vmem:[#allocation2 + $0x250] sm:$0xff]
    %v365 = vld [vmem:[#allocation2 + $0x258] sm:$0xff]
    %v366 = vld [vmem:[#allocation2 + $0x260] sm:$0xff]
    %v367 = vld [vmem:[#allocation2 + $0x268] sm:$0xff]
    %v368 = vld [vmem:[#allocation2 + $0x270] sm:$0xff]
    %v369 = vld [vmem:[#allocation2 + $0x278] sm:$0xff]
    %v370 = vld [vmem:[#allocation2 + $0x280] sm:$0xff]
    %v371 = vld [vmem:[#allocation2 + $0x288] sm:$0xff]
    %v372 = vld [vmem:[#allocation2 + $0x290] sm:$0xff]
    %v373 = vld [vmem:[#allocation2 + $0x298] sm:$0xff]
    %v374 = vld [vmem:[#allocation2 + $0x2a0] sm:$0xff]
    %v375 = vld [vmem:[#allocation2 + $0x2a8] sm:$0xff]
    %v376 = vld [vmem:[#allocation2 + $0x2b0] sm:$0xff]
    %v377 = vld [vmem:[#allocation2 + $0x2b8] sm:$0xff]
    %v378 = vld [vmem:[#allocation2 + $0x2c0] sm:$0xff]
    %v379 = vld [vmem:[#allocation2 + $0x2c8] sm:$0xff]
    %v380 = vld [vmem:[#allocation2 + $0x2d0] sm:$0xff]
    %v381 = vld [vmem:[#allocation2 + $0x2d8] sm:$0xff]
    %v382 = vld [vmem:[#allocation2 + $0x2e0] sm:$0xff]
    %v383 = vld [vmem:[#allocation2 + $0x2e8] sm:$0xff]
    %v384 = vld [vmem:[#allocation2 + $0x2f0] sm:$0xff]
    %v385 = vld [vmem:[#allocation2 + $0x2f8] sm:$0xff]
    %v386 = vld [vmem:[%s5] sm:$0x3f]
    %v388 = vperm.slane %v386, 0
    %v389 = vperm.slane %v386, 1
    %v390 = vperm.slane %v386, 2
    %v391 = vperm.slane %v386, 3
    %v392 = vperm.slane %v386, 4
    %v393 = vperm.slane %v386, 5
    %v496 = vunpack.c.l.b16 %v290
    %v497 = vunpack.c.h.b16 %v290
    %v498 = vunpack.c.l.b16 %v291
    %v499 = vunpack.c.h.b16 %v291
    %v500 = vunpack.c.l.b16 %v292
    %v501 = vunpack.c.h.b16 %v292
    %v502 = vunpack.c.l.b16 %v293
    %v503 = vunpack.c.h.b16 %v293
    %v504 = vunpack.c.l.b16 %v294
    %v505 = vunpack.c.h.b16 %v294
    %v506 = vunpack.c.l.b16 %v295
    %v507 = vunpack.c.h.b16 %v295
    %v508 = vunpack.c.l.b16 %v296
    %v509 = vunpack.c.h.b16 %v296
    %v510 = vunpack.c.l.b16 %v297
    %v511 = vunpack.c.h.b16 %v297
    %v512 = vunpack.c.l.b16 %v298
    %v513 = vunpack.c.h.b16 %v298
    %v514 = vunpack.c.l.b16 %v299
    %v515 = vunpack.c.h.b16 %v299
    %v516 = vunpack.c.l.b16 %v300
    %v517 = vunpack.c.h.b16 %v300
    %v518 = vunpack.c.l.b16 %v301
    %v519 = vunpack.c.h.b16 %v301
    %v520 = vunpack.c.l.b16 %v302
    %v521 = vunpack.c.h.b16 %v302
    %v522 = vunpack.c.l.b16 %v303
    %v523 = vunpack.c.h.b16 %v303
    %v524 = vunpack.c.l.b16 %v304
    %v525 = vunpack.c.h.b16 %v304
    %v526 = vunpack.c.l.b16 %v305
    %v527 = vunpack.c.h.b16 %v305
    %v528 = vunpack.c.l.b16 %v306
    %v529 = vunpack.c.h.b16 %v306
    %v530 = vunpack.c.l.b16 %v307
    %v531 = vunpack.c.h.b16 %v307
    %v532 = vunpack.c.l.b16 %v308
    %v533 = vunpack.c.h.b16 %v308
    %v534 = vunpack.c.l.b16 %v309
    %v535 = vunpack.c.h.b16 %v309
    %v536 = vunpack.c.l.b16 %v310
    %v537 = vunpack.c.h.b16 %v310
    %v538 = vunpack.c.l.b16 %v311
    %v539 = vunpack.c.h.b16 %v311
    %v540 = vunpack.c.l.b16 %v312
    %v541 = vunpack.c.h.b16 %v312
    %v542 = vunpack.c.l.b16 %v313
    %v543 = vunpack.c.h.b16 %v313
    %v544 = vunpack.c.l.b16 %v314
    %v545 = vunpack.c.h.b16 %v314
    %v546 = vunpack.c.l.b16 %v315
    %v547 = vunpack.c.h.b16 %v315
    %v548 = vunpack.c.l.b16 %v316
    %v549 = vunpack.c.h.b16 %v316
    %v550 = vunpack.c.l.b16 %v317
    %v551 = vunpack.c.h.b16 %v317
    %v552 = vunpack.c.l.b16 %v318
    %v553 = vunpack.c.h.b16 %v318
    %v554 = vunpack.c.l.b16 %v319
    %v555 = vunpack.c.h.b16 %v319
    %v556 = vunpack.c.l.b16 %v320
    %v557 = vunpack.c.h.b16 %v320
    %v558 = vunpack.c.l.b16 %v321
    %v559 = vunpack.c.h.b16 %v321
    %v560 = vunpack.c.l.b16 %v322
    %v561 = vunpack.c.h.b16 %v322
    %v562 = vunpack.c.l.b16 %v323
    %v563 = vunpack.c.h.b16 %v323
    %v564 = vunpack.c.l.b16 %v324
    %v565 = vunpack.c.h.b16 %v324
    %v566 = vunpack.c.l.b16 %v325
    %v567 = vunpack.c.h.b16 %v325
    %v568 = vunpack.c.l.b16 %v326
    %v569 = vunpack.c.h.b16 %v326
    %v570 = vunpack.c.l.b16 %v327
    %v571 = vunpack.c.h.b16 %v327
    %v572 = vunpack.c.l.b16 %v328
    %v573 = vunpack.c.h.b16 %v328
    %v574 = vunpack.c.l.b16 %v329
    %v575 = vunpack.c.h.b16 %v329
    %v576 = vunpack.c.l.b16 %v330
    %v577 = vunpack.c.h.b16 %v330
    %v578 = vunpack.c.l.b16 %v331
    %v579 = vunpack.c.h.b16 %v331
    %v580 = vunpack.c.l.b16 %v332
    %v581 = vunpack.c.h.b16 %v332
    %v582 = vunpack.c.l.b16 %v333
    %v583 = vunpack.c.h.b16 %v333
    %v584 = vunpack.c.l.b16 %v334
    %v585 = vunpack.c.h.b16 %v334
    %v586 = vunpack.c.l.b16 %v335
    %v587 = vunpack.c.h.b16 %v335
    %v588 = vunpack.c.l.b16 %v336
    %v589 = vunpack.c.h.b16 %v336
    %v590 = vunpack.c.l.b16 %v337
    %v591 = vunpack.c.h.b16 %v337
    %v592 = vunpack.c.l.b16 %v338
    %v593 = vunpack.c.h.b16 %v338
    %v594 = vunpack.c.l.b16 %v339
    %v595 = vunpack.c.h.b16 %v339
    %v596 = vunpack.c.l.b16 %v340
    %v597 = vunpack.c.h.b16 %v340
    %v598 = vunpack.c.l.b16 %v341
    %v599 = vunpack.c.h.b16 %v341
    %v600 = vunpack.c.l.b16 %v342
    %v601 = vunpack.c.h.b16 %v342
    %v602 = vunpack.c.l.b16 %v343
    %v603 = vunpack.c.h.b16 %v343
    %v604 = vunpack.c.l.b16 %v344
    %v605 = vunpack.c.h.b16 %v344
    %v606 = vunpack.c.l.b16 %v345
    %v607 = vunpack.c.h.b16 %v345
    %v608 = vunpack.c.l.b16 %v346
    %v609 = vunpack.c.h.b16 %v346
    %v610 = vunpack.c.l.b16 %v347
    %v611 = vunpack.c.h.b16 %v347
    %v612 = vunpack.c.l.b16 %v348
    %v613 = vunpack.c.h.b16 %v348
    %v614 = vunpack.c.l.b16 %v349
    %v615 = vunpack.c.h.b16 %v349
    %v616 = vunpack.c.l.b16 %v350
    %v617 = vunpack.c.h.b16 %v350
    %v618 = vunpack.c.l.b16 %v351
    %v619 = vunpack.c.h.b16 %v351
    %v620 = vunpack.c.l.b16 %v352
    %v621 = vunpack.c.h.b16 %v352
    %v622 = vunpack.c.l.b16 %v353
    %v623 = vunpack.c.h.b16 %v353
    %v624 = vunpack.c.l.b16 %v354
    %v625 = vunpack.c.h.b16 %v354
    %v626 = vunpack.c.l.b16 %v355
    %v627 = vunpack.c.h.b16 %v355
    %v628 = vunpack.c.l.b16 %v356
    %v629 = vunpack.c.h.b16 %v356
    %v630 = vunpack.c.l.b16 %v357
    %v631 = vunpack.c.h.b16 %v357
    %v632 = vunpack.c.l.b16 %v358
    %v633 = vunpack.c.h.b16 %v358
    %v634 = vunpack.c.l.b16 %v359
    %v635 = vunpack.c.h.b16 %v359
    %v636 = vunpack.c.l.b16 %v360
    %v637 = vunpack.c.h.b16 %v360
    %v638 = vunpack.c.l.b16 %v361
    %v639 = vunpack.c.h.b16 %v361
    %v640 = vunpack.c.l.b16 %v362
    %v641 = vunpack.c.h.b16 %v362
    %v642 = vunpack.c.l.b16 %v363
    %v643 = vunpack.c.h.b16 %v363
    %v644 = vunpack.c.l.b16 %v364
    %v645 = vunpack.c.h.b16 %v364
    %v646 = vunpack.c.l.b16 %v365
    %v647 = vunpack.c.h.b16 %v365
    %v648 = vunpack.c.l.b16 %v366
    %v649 = vunpack.c.h.b16 %v366
    %v650 = vunpack.c.l.b16 %v367
    %v651 = vunpack.c.h.b16 %v367
    %v652 = vunpack.c.l.b16 %v368
    %v653 = vunpack.c.h.b16 %v368
    %v654 = vunpack.c.l.b16 %v369
    %v655 = vunpack.c.h.b16 %v369
    %v656 = vunpack.c.l.b16 %v370
    %v657 = vunpack.c.h.b16 %v370
    %v658 = vunpack.c.l.b16 %v371
    %v659 = vunpack.c.h.b16 %v371
    %v660 = vunpack.c.l.b16 %v372
    %v661 = vunpack.c.h.b16 %v372
    %v662 = vunpack.c.l.b16 %v373
    %v663 = vunpack.c.h.b16 %v373
    %v664 = vunpack.c.l.b16 %v374
    %v665 = vunpack.c.h.b16 %v374
    %v666 = vunpack.c.l.b16 %v375
    %v667 = vunpack.c.h.b16 %v375
    %v668 = vunpack.c.l.b16 %v376
    %v669 = vunpack.c.h.b16 %v376
    %v670 = vunpack.c.l.b16 %v377
    %v671 = vunpack.c.h.b16 %v377
    %v672 = vunpack.c.l.b16 %v378
    %v673 = vunpack.c.h.b16 %v378
    %v674 = vunpack.c.l.b16 %v379
    %v675 = vunpack.c.h.b16 %v379
    %v676 = vunpack.c.l.b16 %v380
    %v677 = vunpack.c.h.b16 %v380
    %v678 = vunpack.c.l.b16 %v381
    %v679 = vunpack.c.h.b16 %v381
    %v680 = vunpack.c.l.b16 %v382
    %v681 = vunpack.c.h.b16 %v382
    %v682 = vunpack.c.l.b16 %v383
    %v683 = vunpack.c.h.b16 %v383
    %v684 = vunpack.c.l.b16 %v384
    %v685 = vunpack.c.h.b16 %v384
    %v686 = vunpack.c.l.b16 %v385
    %v687 = vunpack.c.h.b16 %v385
    %v688 = vpack.c.b16 %v502, %v496
    %v689 = vpack.c.b16 %v503, %v497
    %v690 = vpack.c.b16 %v504, %v498
    %v691 = vpack.c.b16 %v505, %v499
    %v692 = vpack.c.b16 %v506, %v500
    %v693 = vpack.c.b16 %v507, %v501
    %v694 = vpack.c.b16 %v514, %v508
    %v695 = vpack.c.b16 %v515, %v509
    %v696 = vpack.c.b16 %v516, %v510
    %v697 = vpack.c.b16 %v517, %v511
    %v698 = vpack.c.b16 %v518, %v512
    %v699 = vpack.c.b16 %v519, %v513
    %v700 = vpack.c.b16 %v526, %v520
    %v701 = vpack.c.b16 %v527, %v521
    %v702 = vpack.c.b16 %v528, %v522
    %v703 = vpack.c.b16 %v529, %v523
    %v704 = vpack.c.b16 %v530, %v524
    %v705 = vpack.c.b16 %v531, %v525
    %v706 = vpack.c.b16 %v538, %v532
    %v707 = vpack.c.b16 %v539, %v533
    %v708 = vpack.c.b16 %v540, %v534
    %v709 = vpack.c.b16 %v541, %v535
    %v710 = vpack.c.b16 %v542, %v536
    %v711 = vpack.c.b16 %v543, %v537
    %v712 = vpack.c.b16 %v550, %v544
    %v713 = vpack.c.b16 %v551, %v545
    %v714 = vpack.c.b16 %v552, %v546
    %v715 = vpack.c.b16 %v553, %v547
    %v716 = vpack.c.b16 %v554, %v548
    %v717 = vpack.c.b16 %v555, %v549
    %v718 = vpack.c.b16 %v562, %v556
    %v719 = vpack.c.b16 %v563, %v557
    %v720 = vpack.c.b16 %v564, %v558
    %v721 = vpack.c.b16 %v565, %v559
    %v722 = vpack.c.b16 %v566, %v560
    %v723 = vpack.c.b16 %v567, %v561
    %v724 = vpack.c.b16 %v574, %v568
    %v725 = vpack.c.b16 %v575, %v569
    %v726 = vpack.c.b16 %v576, %v570
    %v727 = vpack.c.b16 %v577, %v571
    %v728 = vpack.c.b16 %v578, %v572
    %v729 = vpack.c.b16 %v579, %v573
    %v730 = vpack.c.b16 %v586, %v580
    %v731 = vpack.c.b16 %v587, %v581
    %v732 = vpack.c.b16 %v588, %v582
    %v733 = vpack.c.b16 %v589, %v583
    %v734 = vpack.c.b16 %v590, %v584
    %v735 = vpack.c.b16 %v591, %v585
    %v736 = vpack.c.b16 %v598, %v592
    %v737 = vpack.c.b16 %v599, %v593
    %v738 = vpack.c.b16 %v600, %v594
    %v739 = vpack.c.b16 %v601, %v595
    %v740 = vpack.c.b16 %v602, %v596
    %v741 = vpack.c.b16 %v603, %v597
    %v742 = vpack.c.b16 %v610, %v604
    %v743 = vpack.c.b16 %v611, %v605
    %v744 = vpack.c.b16 %v612, %v606
    %v745 = vpack.c.b16 %v613, %v607
    %v746 = vpack.c.b16 %v614, %v608
    %v747 = vpack.c.b16 %v615, %v609
    %v748 = vpack.c.b16 %v622, %v616
    %v749 = vpack.c.b16 %v623, %v617
    %v750 = vpack.c.b16 %v624, %v618
    %v751 = vpack.c.b16 %v625, %v619
    %v752 = vpack.c.b16 %v626, %v620
    %v753 = vpack.c.b16 %v627, %v621
    %v754 = vpack.c.b16 %v634, %v628
    %v755 = vpack.c.b16 %v635, %v629
    %v756 = vpack.c.b16 %v636, %v630
    %v757 = vpack.c.b16 %v637, %v631
    %v758 = vpack.c.b16 %v638, %v632
    %v759 = vpack.c.b16 %v639, %v633
    %v760 = vpack.c.b16 %v646, %v640
    %v761 = vpack.c.b16 %v647, %v641
    %v762 = vpack.c.b16 %v648, %v642
    %v763 = vpack.c.b16 %v649, %v643
    %v764 = vpack.c.b16 %v650, %v644
    %v765 = vpack.c.b16 %v651, %v645
    %v766 = vpack.c.b16 %v658, %v652
    %v767 = vpack.c.b16 %v659, %v653
    %v768 = vpack.c.b16 %v660, %v654
    %v769 = vpack.c.b16 %v661, %v655
    %v770 = vpack.c.b16 %v662, %v656
    %v771 = vpack.c.b16 %v663, %v657
    %v772 = vpack.c.b16 %v670, %v664
    %v773 = vpack.c.b16 %v671, %v665
    %v774 = vpack.c.b16 %v672, %v666
    %v775 = vpack.c.b16 %v673, %v667
    %v776 = vpack.c.b16 %v674, %v668
    %v777 = vpack.c.b16 %v675, %v669
    %v778 = vpack.c.b16 %v682, %v676
    %v779 = vpack.c.b16 %v683, %v677
    %v780 = vpack.c.b16 %v684, %v678
    %v781 = vpack.c.b16 %v685, %v679
    %v782 = vpack.c.b16 %v686, %v680
    %v783 = vpack.c.b16 %v687, %v681
    %880 = vmatpush.bf16.msra.mxu0 %v730
    %881 = vmatpush.bf16.msra.mxu0 %v724
    %882 = vmatpush.bf16.msra.mxu0 %v718
    %883 = vmatpush.bf16.msra.mxu0 %v712
    %884 = vmatpush.bf16.msra.mxu0 %v706
    %885 = vmatpush.bf16.msra.mxu0 %v700
    %886 = vmatpush.bf16.msra.mxu0 %v694
    %887 = vmatpush.bf16.msra.mxu0 %v688
    %888 = vmatmul.bf16.gmra.mxu0 %v286
    %v889 = vpop.f32.mrf.mxu0
    %v890 = vadd.f32 %v388, %v889
    %v891 = vpop.f32.mrf.mxu0
    %v892 = vadd.f32 %v388, %v891
    %893 = vmatmul.bf16.gmra.mxu0 %v288
    %v894 = vpop.f32.mrf.mxu0
    %v895 = vadd.f32 %v388, %v894
    %v896 = vpop.f32.mrf.mxu0
    %v897 = vadd.f32 %v388, %v896
    %898 = vdwg.mxu0
    %899 = vmatpush.bf16.msra.mxu0 %v778
    %900 = vmatpush.bf16.msra.mxu0 %v772
    %901 = vmatpush.bf16.msra.mxu0 %v766
    %902 = vmatpush.bf16.msra.mxu0 %v760
    %903 = vmatpush.bf16.msra.mxu0 %v754
    %904 = vmatpush.bf16.msra.mxu0 %v748
    %905 = vmatpush.bf16.msra.mxu0 %v742
    %906 = vmatpush.bf16.msra.mxu0 %v736
    %907 = vmatmul.bf16.gmra.mxu0 %v287
    %v908 = vpop.f32.mrf.mxu0
    %v909 = vadd.f32 %v890, %v908
    %v910 = vpop.f32.mrf.mxu0
    %v911 = vadd.f32 %v892, %v910
    %912 = vmatmul.bf16.gmra.mxu0 %v289
    %v913 = vpop.f32.mrf.mxu0
    %v914 = vadd.f32 %v895, %v913
    %v915 = vpop.f32.mrf.mxu0
    %v916 = vadd.f32 %v897, %v915
    %917 = vdwg.mxu0
    %918 = vmatpush.bf16.msra.mxu0 %v731
    %919 = vmatpush.bf16.msra.mxu0 %v725
    %920 = vmatpush.bf16.msra.mxu0 %v719
    %921 = vmatpush.bf16.msra.mxu0 %v713
    %922 = vmatpush.bf16.msra.mxu0 %v707
    %923 = vmatpush.bf16.msra.mxu0 %v701
    %924 = vmatpush.bf16.msra.mxu0 %v695
    %925 = vmatpush.bf16.msra.mxu0 %v689
    %926 = vmatmul.bf16.gmra.mxu0 %v286
    %v927 = vpop.f32.mrf.mxu0
    %v928 = vadd.f32 %v389, %v927
    %v929 = vpop.f32.mrf.mxu0
    %v930 = vadd.f32 %v389, %v929
    %931 = vmatmul.bf16.gmra.mxu0 %v288
    %v932 = vpop.f32.mrf.mxu0
    %v933 = vadd.f32 %v389, %v932
    %v934 = vpop.f32.mrf.mxu0
    %v935 = vadd.f32 %v389, %v934
    %936 = vdwg.mxu0
    %937 = vmatpush.bf16.msra.mxu0 %v779
    %938 = vmatpush.bf16.msra.mxu0 %v773
    %939 = vmatpush.bf16.msra.mxu0 %v767
    %940 = vmatpush.bf16.msra.mxu0 %v761
    %941 = vmatpush.bf16.msra.mxu0 %v755
    %942 = vmatpush.bf16.msra.mxu0 %v749
    %943 = vmatpush.bf16.msra.mxu0 %v743
    %944 = vmatpush.bf16.msra.mxu0 %v737
    %945 = vmatmul.bf16.gmra.mxu0 %v287
    %v946 = vpop.f32.mrf.mxu0
    %v947 = vadd.f32 %v928, %v946
    %v948 = vpop.f32.mrf.mxu0
    %v949 = vadd.f32 %v930, %v948
    %950 = vmatmul.bf16.gmra.mxu0 %v289
    %v951 = vpop.f32.mrf.mxu0
    %v952 = vadd.f32 %v933, %v951
    %v953 = vpop.f32.mrf.mxu0
    %v954 = vadd.f32 %v935, %v953
    %955 = vdwg.mxu0
    %956 = vmatpush.bf16.msra.mxu0 %v732
    %957 = vmatpush.bf16.msra.mxu0 %v726
    %958 = vmatpush.bf16.msra.mxu0 %v720
    %959 = vmatpush.bf16.msra.mxu0 %v714
    %960 = vmatpush.bf16.msra.mxu0 %v708
    %961 = vmatpush.bf16.msra.mxu0 %v702
    %962 = vmatpush.bf16.msra.mxu0 %v696
    %963 = vmatpush.bf16.msra.mxu0 %v690
    %964 = vmatmul.bf16.gmra.mxu0 %v286
    %v965 = vpop.f32.mrf.mxu0
    %v966 = vadd.f32 %v390, %v965
    %v967 = vpop.f32.mrf.mxu0
    %v968 = vadd.f32 %v390, %v967
    %969 = vmatmul.bf16.gmra.mxu0 %v288
    %v970 = vpop.f32.mrf.mxu0
    %v971 = vadd.f32 %v390, %v970
    %v972 = vpop.f32.mrf.mxu0
    %v973 = vadd.f32 %v390, %v972
    %974 = vdwg.mxu0
    %975 = vmatpush.bf16.msra.mxu0 %v780
    %976 = vmatpush.bf16.msra.mxu0 %v774
    %977 = vmatpush.bf16.msra.mxu0 %v768
    %978 = vmatpush.bf16.msra.mxu0 %v762
    %979 = vmatpush.bf16.msra.mxu0 %v756
    %980 = vmatpush.bf16.msra.mxu0 %v750
    %981 = vmatpush.bf16.msra.mxu0 %v744
    %982 = vmatpush.bf16.msra.mxu0 %v738
    %983 = vmatmul.bf16.gmra.mxu0 %v287
    %v984 = vpop.f32.mrf.mxu0
    %v985 = vadd.f32 %v966, %v984
    %v986 = vpop.f32.mrf.mxu0
    %v987 = vadd.f32 %v968, %v986
    %988 = vmatmul.bf16.gmra.mxu0 %v289
    %v989 = vpop.f32.mrf.mxu0
    %v990 = vadd.f32 %v971, %v989
    %v991 = vpop.f32.mrf.mxu0
    %v992 = vadd.f32 %v973, %v991
    %993 = vdwg.mxu0
    %994 = vmatpush.bf16.msra.mxu0 %v733
    %995 = vmatpush.bf16.msra.mxu0 %v727
    %996 = vmatpush.bf16.msra.mxu0 %v721
    %997 = vmatpush.bf16.msra.mxu0 %v715
    %998 = vmatpush.bf16.msra.mxu0 %v709
    %999 = vmatpush.bf16.msra.mxu0 %v703
    %1000 = vmatpush.bf16.msra.mxu0 %v697
    %1001 = vmatpush.bf16.msra.mxu0 %v691
    %1002 = vmatmul.bf16.gmra.mxu0 %v286
    %v1003 = vpop.f32.mrf.mxu0
    %v1004 = vadd.f32 %v391, %v1003
    %v1005 = vpop.f32.mrf.mxu0
    %v1006 = vadd.f32 %v391, %v1005
    %1007 = vmatmul.bf16.gmra.mxu0 %v288
    %v1008 = vpop.f32.mrf.mxu0
    %v1009 = vadd.f32 %v391, %v1008
    %v1010 = vpop.f32.mrf.mxu0
    %v1011 = vadd.f32 %v391, %v1010
    %1012 = vdwg.mxu0
    %1013 = vmatpush.bf16.msra.mxu0 %v781
    %1014 = vmatpush.bf16.msra.mxu0 %v775
    %1015 = vmatpush.bf16.msra.mxu0 %v769
    %1016 = vmatpush.bf16.msra.mxu0 %v763
    %1017 = vmatpush.bf16.msra.mxu0 %v757
    %1018 = vmatpush.bf16.msra.mxu0 %v751
    %1019 = vmatpush.bf16.msra.mxu0 %v745
    %1020 = vmatpush.bf16.msra.mxu0 %v739
    %1021 = vmatmul.bf16.gmra.mxu0 %v287
    %v1022 = vpop.f32.mrf.mxu0
    %v1023 = vadd.f32 %v1004, %v1022
    %v1024 = vpop.f32.mrf.mxu0
    %v1025 = vadd.f32 %v1006, %v1024
    %1026 = vmatmul.bf16.gmra.mxu0 %v289
    %v1027 = vpop.f32.mrf.mxu0
    %v1028 = vadd.f32 %v1009, %v1027
    %v1029 = vpop.f32.mrf.mxu0
    %v1030 = vadd.f32 %v1011, %v1029
    %1031 = vdwg.mxu0
    %1032 = vmatpush.bf16.msra.mxu0 %v734
    %1033 = vmatpush.bf16.msra.mxu0 %v728
    %1034 = vmatpush.bf16.msra.mxu0 %v722
    %1035 = vmatpush.bf16.msra.mxu0 %v716
    %1036 = vmatpush.bf16.msra.mxu0 %v710
    %1037 = vmatpush.bf16.msra.mxu0 %v704
    %1038 = vmatpush.bf16.msra.mxu0 %v698
    %1039 = vmatpush.bf16.msra.mxu0 %v692
    %1040 = vmatmul.bf16.gmra.mxu0 %v286
    %v1041 = vpop.f32.mrf.mxu0
    %v1042 = vadd.f32 %v392, %v1041
    %v1043 = vpop.f32.mrf.mxu0
    %v1044 = vadd.f32 %v392, %v1043
    %1045 = vmatmul.bf16.gmra.mxu0 %v288
    %v1046 = vpop.f32.mrf.mxu0
    %v1047 = vadd.f32 %v392, %v1046
    %v1048 = vpop.f32.mrf.mxu0
    %v1049 = vadd.f32 %v392, %v1048
    %1050 = vdwg.mxu0
    %1051 = vmatpush.bf16.msra.mxu0 %v782
    %1052 = vmatpush.bf16.msra.mxu0 %v776
    %1053 = vmatpush.bf16.msra.mxu0 %v770
    %1054 = vmatpush.bf16.msra.mxu0 %v764
    %1055 = vmatpush.bf16.msra.mxu0 %v758
    %1056 = vmatpush.bf16.msra.mxu0 %v752
    %1057 = vmatpush.bf16.msra.mxu0 %v746
    %1058 = vmatpush.bf16.msra.mxu0 %v740
    %1059 = vmatmul.bf16.gmra.mxu0 %v287
    %v1060 = vpop.f32.mrf.mxu0
    %v1061 = vadd.f32 %v1042, %v1060
    %v1062 = vpop.f32.mrf.mxu0
    %v1063 = vadd.f32 %v1044, %v1062
    %1064 = vmatmul.bf16.gmra.mxu0 %v289
    %v1065 = vpop.f32.mrf.mxu0
    %v1066 = vadd.f32 %v1047, %v1065
    %v1067 = vpop.f32.mrf.mxu0
    %v1068 = vadd.f32 %v1049, %v1067
    %1069 = vdwg.mxu0
    %1070 = vmatpush.bf16.msra.mxu0 %v735
    %1071 = vmatpush.bf16.msra.mxu0 %v729
    %1072 = vmatpush.bf16.msra.mxu0 %v723
    %1073 = vmatpush.bf16.msra.mxu0 %v717
    %1074 = vmatpush.bf16.msra.mxu0 %v711
    %1075 = vmatpush.bf16.msra.mxu0 %v705
    %1076 = vmatpush.bf16.msra.mxu0 %v699
    %1077 = vmatpush.bf16.msra.mxu0 %v693
    %1078 = vmatmul.bf16.gmra.mxu0 %v286
    %v1079 = vpop.f32.mrf.mxu0
    %v1080 = vadd.f32 %v393, %v1079
    %v1081 = vpop.f32.mrf.mxu0
    %v1082 = vadd.f32 %v393, %v1081
    %1083 = vmatmul.bf16.gmra.mxu0 %v288
    %v1084 = vpop.f32.mrf.mxu0
    %v1085 = vadd.f32 %v393, %v1084
    %v1086 = vpop.f32.mrf.mxu0
    %v1087 = vadd.f32 %v393, %v1086
    %1088 = vdwg.mxu0
    %1089 = vmatpush.bf16.msra.mxu0 %v783
    %1090 = vmatpush.bf16.msra.mxu0 %v777
    %1091 = vmatpush.bf16.msra.mxu0 %v771
    %1092 = vmatpush.bf16.msra.mxu0 %v765
    %1093 = vmatpush.bf16.msra.mxu0 %v759
    %1094 = vmatpush.bf16.msra.mxu0 %v753
    %1095 = vmatpush.bf16.msra.mxu0 %v747
    %1096 = vmatpush.bf16.msra.mxu0 %v741
    %1097 = vmatmul.bf16.gmra.mxu0 %v287
    %v1098 = vpop.f32.mrf.mxu0
    %v1099 = vadd.f32 %v1080, %v1098
    %v1100 = vpop.f32.mrf.mxu0
    %v1101 = vadd.f32 %v1082, %v1100
    %1102 = vmatmul.bf16.gmra.mxu0 %v289
    %v1103 = vpop.f32.mrf.mxu0
    %v1104 = vadd.f32 %v1085, %v1103
    %v1105 = vpop.f32.mrf.mxu0
    %v1106 = vadd.f32 %v1087, %v1105
    %1107 = vdwg.mxu0
    %v1108 = vpack.c.bf16 %v947, %v909
    %v1109 = vpack.c.bf16 %v1023, %v985
    %v1110 = vpack.c.bf16 %v1099, %v1061
    %v1111 = vpack.c.bf16 %v949, %v911
    %v1112 = vpack.c.bf16 %v1025, %v987
    %v1113 = vpack.c.bf16 %v1101, %v1063
    %v1114 = vpack.c.bf16 %v952, %v914
    %v1115 = vpack.c.bf16 %v1028, %v990
    %v1116 = vpack.c.bf16 %v1104, %v1066
    %v1117 = vpack.c.bf16 %v954, %v916
    %v1118 = vpack.c.bf16 %v1030, %v992
    %v1119 = vpack.c.bf16 %v1106, %v1068
    %v1120 = vld [vmem:[#allocation5] sm:$0xff]
    %v1121 = vld [vmem:[#allocation5 + $0x8] sm:$0xff]
    %v1122 = vld [vmem:[#allocation5 + $0x10] sm:$0xff]
    %v1123 = vld [vmem:[#allocation5 + $0x18] sm:$0xff]
    %v1124 = vld [vmem:[#allocation5 + $0x20] sm:$0xff]
    %v1125 = vld [vmem:[#allocation5 + $0x28] sm:$0xff]
    %v1126 = vld [vmem:[#allocation5 + $0x30] sm:$0xff]
    %v1127 = vld [vmem:[#allocation5 + $0x38] sm:$0xff]
    %v1128 = vld [vmem:[#allocation5 + $0x40] sm:$0xff]
    %v1129 = vld [vmem:[#allocation5 + $0x48] sm:$0xff]
    %v1130 = vld [vmem:[#allocation5 + $0x50] sm:$0xff]
    %v1131 = vld [vmem:[#allocation5 + $0x58] sm:$0xff]
    %v1132 = vld [vmem:[#allocation5 + $0x60] sm:$0xff]
    %v1133 = vld [vmem:[#allocation5 + $0x68] sm:$0xff]
    %v1134 = vld [vmem:[#allocation5 + $0x70] sm:$0xff]
    %v1135 = vld [vmem:[#allocation5 + $0x78] sm:$0xff]
    %v1136 = vld [vmem:[#allocation5 + $0x80] sm:$0xff]
    %v1137 = vld [vmem:[#allocation5 + $0x88] sm:$0xff]
    %v1138 = vld [vmem:[#allocation5 + $0x90] sm:$0xff]
    %v1139 = vld [vmem:[#allocation5 + $0x98] sm:$0xff]
    %v1140 = vld [vmem:[#allocation5 + $0xa0] sm:$0xff]
    %v1141 = vld [vmem:[#allocation5 + $0xa8] sm:$0xff]
    %v1142 = vld [vmem:[#allocation5 + $0xb0] sm:$0xff]
    %v1143 = vld [vmem:[#allocation5 + $0xb8] sm:$0xff]
    %v1144 = vld [vmem:[#allocation5 + $0xc0] sm:$0xff]
    %v1145 = vld [vmem:[#allocation5 + $0xc8] sm:$0xff]
    %v1146 = vld [vmem:[#allocation5 + $0xd0] sm:$0xff]
    %v1147 = vld [vmem:[#allocation5 + $0xd8] sm:$0xff]
    %v1148 = vld [vmem:[#allocation5 + $0xe0] sm:$0xff]
    %v1149 = vld [vmem:[#allocation5 + $0xe8] sm:$0xff]
    %v1150 = vld [vmem:[#allocation5 + $0xf0] sm:$0xff]
    %v1151 = vld [vmem:[#allocation5 + $0xf8] sm:$0xff]
    %v1152 = vld [vmem:[%s7] sm:$0x3]
    %v1155 = vunpack.c.l.b16 %v1108
    %v1156 = vunpack.c.l.b16 %v1111
    %v1157 = vpack.c.b16 %v1156, %v1155
    %v1161 = vunpack.c.l.b16 %v1109
    %v1162 = vunpack.c.l.b16 %v1112
    %v1163 = vpack.c.b16 %v1162, %v1161
    %1165 = vmatpush.bf16.xpose.msra.mxu0 0
    %1166 = vmatpush.bf16.xpose.msra.mxu0 0
    %1167 = vmatpush.bf16.xpose.msra.mxu0 0
    %1168 = vmatpush.bf16.xpose.msra.mxu0 0
    %1169 = vmatpush.bf16.xpose.msra.mxu0 0
    %1170 = vmatpush.bf16.xpose.msra.mxu0 0
    %1171 = vmatpush.bf16.xpose.msra.mxu0 0
    %1172 = vmatpush.bf16.xpose.msra.mxu0 %v1163
    %1173 = vmatmul.bf16.gmra.mxu0 %v1157
    %v1174 = vpop.f32.mrf.mxu0
    %v1175 = vadd.f32 %v220, %v1174
    %v1176 = vpop.f32.mrf.mxu0
    %v1177 = vadd.f32 %v221, %v1176
    %1178 = vdwg.mxu0
    %v1181 = vunpack.c.l.b16 %v1114
    %v1182 = vunpack.c.l.b16 %v1117
    %v1183 = vpack.c.b16 %v1182, %v1181
    %v1187 = vunpack.c.l.b16 %v1115
    %v1188 = vunpack.c.l.b16 %v1118
    %v1189 = vpack.c.b16 %v1188, %v1187
    %1191 = vmatpush.bf16.xpose.msra.mxu0 0
    %1192 = vmatpush.bf16.xpose.msra.mxu0 0
    %1193 = vmatpush.bf16.xpose.msra.mxu0 0
    %1194 = vmatpush.bf16.xpose.msra.mxu0 0
    %1195 = vmatpush.bf16.xpose.msra.mxu0 0
    %1196 = vmatpush.bf16.xpose.msra.mxu0 0
    %1197 = vmatpush.bf16.xpose.msra.mxu0 0
    %1198 = vmatpush.bf16.xpose.msra.mxu0 %v1189
    %1199 = vmatmul.bf16.gmra.mxu0 %v1183
    %v1200 = vpop.f32.mrf.mxu0
    %v1201 = vadd.f32 %v222, %v1200
    %v1202 = vpop.f32.mrf.mxu0
    %v1203 = vadd.f32 %v223, %v1202
    %1204 = vdwg.mxu0
    %vm1205 = vcmask 130048
    %v1206 = vsel %vm1205, %v1175, -inf
    %1207 = vmax.xlane.f32.xlu0 %v1206
    %v1208 = vpop.xlane.xlu0 %1207
    %v1209 = vsel %vm1205, %v1177, -inf
    %1210 = vmax.xlane.f32.xlu0 %v1209
    %v1211 = vpop.xlane.xlu0 %1210
    %v1212 = vsel %vm1205, %v1201, -inf
    %1213 = vmax.xlane.f32.xlu0 %v1212
    %v1214 = vpop.xlane.xlu0 %1213
    %v1215 = vsel %vm1205, %v1203, -inf
    %1216 = vmax.xlane.f32.xlu0 %v1215
    %v1217 = vpop.xlane.xlu0 %1216
    %v1218 = vsub.f32 %v1175, %v1208
    %v1219 = vsub.f32 %v1177, %v1211
    %v1220 = vsub.f32 %v1201, %v1214
    %v1221 = vsub.f32 %v1203, %v1217
    %v1222 = vmul.f32 %v1218, 1.442695
    %v1223 = vpow.pop %v1222
    %v1224 = vmul.f32 %v1219, 1.442695
    %v1225 = vpow.pop %v1224
    %v1226 = vmul.f32 %v1220, 1.442695
    %v1227 = vpow.pop %v1226
    %v1228 = vmul.f32 %v1221, 1.442695
    %v1229 = vpow.pop %v1228
    %v1230 = vsel %vm1205, %v1223, 0.0
    %1231 = vadd.xlane.f32.xlu0 %v1230
    %v1232 = vpop.xlane.xlu0 %1231
    %v1233 = vsel %vm1205, %v1225, 0.0
    %1234 = vadd.xlane.f32.xlu0 %v1233
    %v1235 = vpop.xlane.xlu0 %1234
    %v1236 = vsel %vm1205, %v1227, 0.0
    %1237 = vadd.xlane.f32.xlu0 %v1236
    %v1238 = vpop.xlane.xlu0 %1237
    %v1239 = vsel %vm1205, %v1229, 0.0
    %1240 = vadd.xlane.f32.xlu0 %v1239
    %v1241 = vpop.xlane.xlu0 %1240
    %v1242 = vrcp.pop %v1232
    %v1243 = vrcp.pop %v1235
    %v1244 = vrcp.pop %v1238
    %v1245 = vrcp.pop %v1241
    %v1246 = vmul.f32 %v1223, %v1242
    %v1247 = vmul.f32 %v1225, %v1243
    %v1248 = vmul.f32 %v1227, %v1244
    %v1249 = vmul.f32 %v1229, %v1245
    %v1250 = vpack.c.bf16 %v1246, %v1246
    %v1251 = vpack.c.bf16 %v1247, %v1247
    %v1252 = vpack.c.bf16 %v1248, %v1248
    %v1253 = vpack.c.bf16 %v1249, %v1249
    %v1256 = vunpack.c.l.b16 %v1250
    %v1257 = vunpack.c.l.b16 %v1251
    %v1258 = vpack.c.b16 %v1257, %v1256
    %v1261 = vunpack.c.l.b16 %v1110
    %v1262 = vunpack.c.l.b16 %v1113
    %v1263 = vpack.c.b16 %v1262, %v1261
    %v1266 = vsel %vm1205, %v1258, 0
    %1268 = vmatpush.bf16.msra.mxu0 0
    %1269 = vmatpush.bf16.msra.mxu0 0
    %1270 = vmatpush.bf16.msra.mxu0 0
    %1271 = vmatpush.bf16.msra.mxu0 0
    %1272 = vmatpush.bf16.msra.mxu0 0
    %1273 = vmatpush.bf16.msra.mxu0 0
    %1274 = vmatpush.bf16.msra.mxu0 0
    %1275 = vmatpush.bf16.msra.mxu0 %v1263
    %1276 = vmatmul.bf16.gmra.mxu0 %v1266
    %v1277 = vpop.f32.mrf.mxu0
    %v1278 = vadd.f32 0.0, %v1277
    %v1279 = vpop.f32.mrf.mxu0
    %v1280 = vadd.f32 0.0, %v1279
    %1281 = vdwg.mxu0
    %v1284 = vunpack.c.l.b16 %v1252
    %v1285 = vunpack.c.l.b16 %v1253
    %v1286 = vpack.c.b16 %v1285, %v1284
    %v1289 = vunpack.c.l.b16 %v1116
    %v1290 = vunpack.c.l.b16 %v1119
    %v1291 = vpack.c.b16 %v1290, %v1289
    %v1294 = vsel %vm1205, %v1286, 0
    %1296 = vmatpush.bf16.msra.mxu0 0
    %1297 = vmatpush.bf16.msra.mxu0 0
    %1298 = vmatpush.bf16.msra.mxu0 0
    %1299 = vmatpush.bf16.msra.mxu0 0
    %1300 = vmatpush.bf16.msra.mxu0 0
    %1301 = vmatpush.bf16.msra.mxu0 0
    %1302 = vmatpush.bf16.msra.mxu0 0
    %1303 = vmatpush.bf16.msra.mxu0 %v1291
    %1304 = vmatmul.bf16.gmra.mxu0 %v1294
    %v1305 = vpop.f32.mrf.mxu0
    %v1306 = vadd.f32 0.0, %v1305
    %v1307 = vpop.f32.mrf.mxu0
    %v1308 = vadd.f32 0.0, %v1307
    %1309 = vdwg.mxu0
    %v1310 = vrot.slane %v1108, 4
    %v1311 = vrot.slane %v1111, 4
    %v1312 = vrot.slane %v1109, 4
    %v1313 = vrot.slane %v1112, 4
    %v1314 = vunpack.c.l.b16 %v1310
    %v1315 = vunpack.c.l.b16 %v1311
    %v1316 = vpack.c.b16 %v1315, %v1314
    %v1318 = vunpack.c.l.b16 %v1312
    %v1319 = vunpack.c.l.b16 %v1313
    %v1320 = vpack.c.b16 %v1319, %v1318
    %1322 = vmatpush.bf16.xpose.msra.mxu0 0
    %1323 = vmatpush.bf16.xpose.msra.mxu0 0
    %1324 = vmatpush.bf16.xpose.msra.mxu0 0
    %1325 = vmatpush.bf16.xpose.msra.mxu0 0
    %1326 = vmatpush.bf16.xpose.msra.mxu0 0
    %1327 = vmatpush.bf16.xpose.msra.mxu0 0
    %1328 = vmatpush.bf16.xpose.msra.mxu0 0
    %1329 = vmatpush.bf16.xpose.msra.mxu0 %v1320
    %1330 = vmatmul.bf16.gmra.mxu0 %v1316
    %v1331 = vpop.f32.mrf.mxu0
    %v1332 = vadd.f32 %v220, %v1331
    %v1333 = vpop.f32.mrf.mxu0
    %v1334 = vadd.f32 %v221, %v1333
    %1335 = vdwg.mxu0
    %v1336 = vrot.slane %v1114, 4
    %v1337 = vrot.slane %v1117, 4
    %v1338 = vrot.slane %v1115, 4
    %v1339 = vrot.slane %v1118, 4
    %v1340 = vunpack.c.l.b16 %v1336
    %v1341 = vunpack.c.l.b16 %v1337
    %v1342 = vpack.c.b16 %v1341, %v1340
    %v1344 = vunpack.c.l.b16 %v1338
    %v1345 = vunpack.c.l.b16 %v1339
    %v1346 = vpack.c.b16 %v1345, %v1344
    %1348 = vmatpush.bf16.xpose.msra.mxu0 0
    %1349 = vmatpush.bf16.xpose.msra.mxu0 0
    %1350 = vmatpush.bf16.xpose.msra.mxu0 0
    %1351 = vmatpush.bf16.xpose.msra.mxu0 0
    %1352 = vmatpush.bf16.xpose.msra.mxu0 0
    %1353 = vmatpush.bf16.xpose.msra.mxu0 0
    %1354 = vmatpush.bf16.xpose.msra.mxu0 0
    %1355 = vmatpush.bf16.xpose.msra.mxu0 %v1346
    %1356 = vmatmul.bf16.gmra.mxu0 %v1342
    %v1357 = vpop.f32.mrf.mxu0
    %v1358 = vadd.f32 %v222, %v1357
    %v1359 = vpop.f32.mrf.mxu0
    %v1360 = vadd.f32 %v223, %v1359
    %1361 = vdwg.mxu0
    %v1362 = vsel %vm1205, %v1332, -inf
    %1363 = vmax.xlane.f32.xlu0 %v1362
    %v1364 = vpop.xlane.xlu0 %1363
    %v1365 = vsel %vm1205, %v1334, -inf
    %1366 = vmax.xlane.f32.xlu0 %v1365
    %v1367 = vpop.xlane.xlu0 %1366
    %v1368 = vsel %vm1205, %v1358, -inf
    %1369 = vmax.xlane.f32.xlu0 %v1368
    %v1370 = vpop.xlane.xlu0 %1369
    %v1371 = vsel %vm1205, %v1360, -inf
    %1372 = vmax.xlane.f32.xlu0 %v1371
    %v1373 = vpop.xlane.xlu0 %1372
    %v1374 = vsub.f32 %v1332, %v1364
    %v1375 = vsub.f32 %v1334, %v1367
    %v1376 = vsub.f32 %v1358, %v1370
    %v1377 = vsub.f32 %v1360, %v1373
    %v1378 = vmul.f32 %v1374, 1.442695
    %v1379 = vpow.pop %v1378
    %v1380 = vmul.f32 %v1375, 1.442695
    %v1381 = vpow.pop %v1380
    %v1382 = vmul.f32 %v1376, 1.442695
    %v1383 = vpow.pop %v1382
    %v1384 = vmul.f32 %v1377, 1.442695
    %v1385 = vpow.pop %v1384
    %v1386 = vsel %vm1205, %v1379, 0.0
    %1387 = vadd.xlane.f32.xlu0 %v1386
    %v1388 = vpop.xlane.xlu0 %1387
    %v1389 = vsel %vm1205, %v1381, 0.0
    %1390 = vadd.xlane.f32.xlu0 %v1389
    %v1391 = vpop.xlane.xlu0 %1390
    %v1392 = vsel %vm1205, %v1383, 0.0
    %1393 = vadd.xlane.f32.xlu0 %v1392
    %v1394 = vpop.xlane.xlu0 %1393
    %v1395 = vsel %vm1205, %v1385, 0.0
    %1396 = vadd.xlane.f32.xlu0 %v1395
    %v1397 = vpop.xlane.xlu0 %1396
    %v1398 = vrcp.pop %v1388
    %v1399 = vrcp.pop %v1391
    %v1400 = vrcp.pop %v1394
    %v1401 = vrcp.pop %v1397
    %v1402 = vmul.f32 %v1379, %v1398
    %v1403 = vmul.f32 %v1381, %v1399
    %v1404 = vmul.f32 %v1383, %v1400
    %v1405 = vmul.f32 %v1385, %v1401
    %v1406 = vpack.c.bf16 %v1402, %v1402
    %v1407 = vpack.c.bf16 %v1403, %v1403
    %v1408 = vpack.c.bf16 %v1404, %v1404
    %v1409 = vpack.c.bf16 %v1405, %v1405
    %v1410 = vrot.slane %v1110, 4
    %v1411 = vrot.slane %v1113, 4
    %v1414 = vunpack.c.l.b16 %v1406
    %v1415 = vunpack.c.l.b16 %v1407
    %v1416 = vpack.c.b16 %v1415, %v1414
    %v1417 = vunpack.c.l.b16 %v1410
    %v1418 = vunpack.c.l.b16 %v1411
    %v1419 = vpack.c.b16 %v1418, %v1417
    %v1422 = vsel %vm1205, %v1416, 0
    %1424 = vmatpush.bf16.msra.mxu0 0
    %1425 = vmatpush.bf16.msra.mxu0 0
    %1426 = vmatpush.bf16.msra.mxu0 0
    %1427 = vmatpush.bf16.msra.mxu0 0
    %1428 = vmatpush.bf16.msra.mxu0 0
    %1429 = vmatpush.bf16.msra.mxu0 0
    %1430 = vmatpush.bf16.msra.mxu0 0
    %1431 = vmatpush.bf16.msra.mxu0 %v1419
    %1432 = vmatmul.bf16.gmra.mxu0 %v1422
    %v1433 = vpop.f32.mrf.mxu0
    %v1434 = vadd.f32 0.0, %v1433
    %v1435 = vpop.f32.mrf.mxu0
    %v1436 = vadd.f32 0.0, %v1435
    %1437 = vdwg.mxu0
    %v1438 = vrot.slane %v1116, 4
    %v1439 = vrot.slane %v1119, 4
    %v1442 = vunpack.c.l.b16 %v1408
    %v1443 = vunpack.c.l.b16 %v1409
    %v1444 = vpack.c.b16 %v1443, %v1442
    %v1445 = vunpack.c.l.b16 %v1438
    %v1446 = vunpack.c.l.b16 %v1439
    %v1447 = vpack.c.b16 %v1446, %v1445
    %v1450 = vsel %vm1205, %v1444, 0
    %1452 = vmatpush.bf16.msra.mxu0 0
    %1453 = vmatpush.bf16.msra.mxu0 0
    %1454 = vmatpush.bf16.msra.mxu0 0
    %1455 = vmatpush.bf16.msra.mxu0 0
    %1456 = vmatpush.bf16.msra.mxu0 0
    %1457 = vmatpush.bf16.msra.mxu0 0
    %1458 = vmatpush.bf16.msra.mxu0 0
    %1459 = vmatpush.bf16.msra.mxu0 %v1447
    %1460 = vmatmul.bf16.gmra.mxu0 %v1450
    %v1461 = vpop.f32.mrf.mxu0
    %v1462 = vadd.f32 0.0, %v1461
    %v1463 = vpop.f32.mrf.mxu0
    %v1464 = vadd.f32 0.0, %v1463
    %1465 = vdwg.mxu0
    %v1466 = vpack.c.bf16 %v1434, %v1278
    %v1467 = vpack.c.bf16 %v1436, %v1280
    %v1468 = vpack.c.bf16 %v1462, %v1306
    %v1469 = vpack.c.bf16 %v1464, %v1308
    %v1471 = vperm.slane %v1152, 0
    %v1472 = vperm.slane %v1152, 1
    %v1479 = vunpack.c.l.b16 %v1466
    %v1480 = vunpack.c.h.b16 %v1466
    %v1481 = vunpack.c.l.b16 %v1467
    %v1482 = vunpack.c.h.b16 %v1467
    %v1483 = vunpack.c.l.b16 %v1468
    %v1484 = vunpack.c.h.b16 %v1468
    %v1485 = vunpack.c.l.b16 %v1469
    %v1486 = vunpack.c.h.b16 %v1469
    %v1487 = vpack.c.b16 %v1481, %v1479
    %v1488 = vpack.c.b16 %v1482, %v1480
    %v1489 = vpack.c.b16 %v1485, %v1483
    %v1490 = vpack.c.b16 %v1486, %v1484
    %v1527 = vunpack.c.l.b16 %v1120
    %v1528 = vunpack.c.h.b16 %v1120
    %v1529 = vunpack.c.l.b16 %v1121
    %v1530 = vunpack.c.h.b16 %v1121
    %v1531 = vunpack.c.l.b16 %v1122
    %v1532 = vunpack.c.h.b16 %v1122
    %v1533 = vunpack.c.l.b16 %v1123
    %v1534 = vunpack.c.h.b16 %v1123
    %v1535 = vunpack.c.l.b16 %v1124
    %v1536 = vunpack.c.h.b16 %v1124
    %v1537 = vunpack.c.l.b16 %v1125
    %v1538 = vunpack.c.h.b16 %v1125
    %v1539 = vunpack.c.l.b16 %v1126
    %v1540 = vunpack.c.h.b16 %v1126
    %v1541 = vunpack.c.l.b16 %v1127
    %v1542 = vunpack.c.h.b16 %v1127
    %v1543 = vunpack.c.l.b16 %v1128
    %v1544 = vunpack.c.h.b16 %v1128
    %v1545 = vunpack.c.l.b16 %v1129
    %v1546 = vunpack.c.h.b16 %v1129
    %v1547 = vunpack.c.l.b16 %v1130
    %v1548 = vunpack.c.h.b16 %v1130
    %v1549 = vunpack.c.l.b16 %v1131
    %v1550 = vunpack.c.h.b16 %v1131
    %v1551 = vunpack.c.l.b16 %v1132
    %v1552 = vunpack.c.h.b16 %v1132
    %v1553 = vunpack.c.l.b16 %v1133
    %v1554 = vunpack.c.h.b16 %v1133
    %v1555 = vunpack.c.l.b16 %v1134
    %v1556 = vunpack.c.h.b16 %v1134
    %v1557 = vunpack.c.l.b16 %v1135
    %v1558 = vunpack.c.h.b16 %v1135
    %v1559 = vunpack.c.l.b16 %v1136
    %v1560 = vunpack.c.h.b16 %v1136
    %v1561 = vunpack.c.l.b16 %v1137
    %v1562 = vunpack.c.h.b16 %v1137
    %v1563 = vunpack.c.l.b16 %v1138
    %v1564 = vunpack.c.h.b16 %v1138
    %v1565 = vunpack.c.l.b16 %v1139
    %v1566 = vunpack.c.h.b16 %v1139
    %v1567 = vunpack.c.l.b16 %v1140
    %v1568 = vunpack.c.h.b16 %v1140
    %v1569 = vunpack.c.l.b16 %v1141
    %v1570 = vunpack.c.h.b16 %v1141
    %v1571 = vunpack.c.l.b16 %v1142
    %v1572 = vunpack.c.h.b16 %v1142
    %v1573 = vunpack.c.l.b16 %v1143
    %v1574 = vunpack.c.h.b16 %v1143
    %v1575 = vunpack.c.l.b16 %v1144
    %v1576 = vunpack.c.h.b16 %v1144
    %v1577 = vunpack.c.l.b16 %v1145
    %v1578 = vunpack.c.h.b16 %v1145
    %v1579 = vunpack.c.l.b16 %v1146
    %v1580 = vunpack.c.h.b16 %v1146
    %v1581 = vunpack.c.l.b16 %v1147
    %v1582 = vunpack.c.h.b16 %v1147
    %v1583 = vunpack.c.l.b16 %v1148
    %v1584 = vunpack.c.h.b16 %v1148
    %v1585 = vunpack.c.l.b16 %v1149
    %v1586 = vunpack.c.h.b16 %v1149
    %v1587 = vunpack.c.l.b16 %v1150
    %v1588 = vunpack.c.h.b16 %v1150
    %v1589 = vunpack.c.l.b16 %v1151
    %v1590 = vunpack.c.h.b16 %v1151
    %v1591 = vpack.c.b16 %v1529, %v1527
    %v1592 = vpack.c.b16 %v1530, %v1528
    %v1593 = vpack.c.b16 %v1533, %v1531
    %v1594 = vpack.c.b16 %v1534, %v1532
    %v1595 = vpack.c.b16 %v1537, %v1535
    %v1596 = vpack.c.b16 %v1538, %v1536
    %v1597 = vpack.c.b16 %v1541, %v1539
    %v1598 = vpack.c.b16 %v1542, %v1540
    %v1599 = vpack.c.b16 %v1545, %v1543
    %v1600 = vpack.c.b16 %v1546, %v1544
    %v1601 = vpack.c.b16 %v1549, %v1547
    %v1602 = vpack.c.b16 %v1550, %v1548
    %v1603 = vpack.c.b16 %v1553, %v1551
    %v1604 = vpack.c.b16 %v1554, %v1552
    %v1605 = vpack.c.b16 %v1557, %v1555
    %v1606 = vpack.c.b16 %v1558, %v1556
    %v1607 = vpack.c.b16 %v1561, %v1559
    %v1608 = vpack.c.b16 %v1562, %v1560
    %v1609 = vpack.c.b16 %v1565, %v1563
    %v1610 = vpack.c.b16 %v1566, %v1564
    %v1611 = vpack.c.b16 %v1569, %v1567
    %v1612 = vpack.c.b16 %v1570, %v1568
    %v1613 = vpack.c.b16 %v1573, %v1571
    %v1614 = vpack.c.b16 %v1574, %v1572
    %v1615 = vpack.c.b16 %v1577, %v1575
    %v1616 = vpack.c.b16 %v1578, %v1576
    %v1617 = vpack.c.b16 %v1581, %v1579
    %v1618 = vpack.c.b16 %v1582, %v1580
    %v1619 = vpack.c.b16 %v1585, %v1583
    %v1620 = vpack.c.b16 %v1586, %v1584
    %v1621 = vpack.c.b16 %v1589, %v1587
    %v1622 = vpack.c.b16 %v1590, %v1588
    %1655 = vmatpush.bf16.msra.mxu0 %v1605
    %1656 = vmatpush.bf16.msra.mxu0 %v1603
    %1657 = vmatpush.bf16.msra.mxu0 %v1601
    %1658 = vmatpush.bf16.msra.mxu0 %v1599
    %1659 = vmatpush.bf16.msra.mxu0 %v1597
    %1660 = vmatpush.bf16.msra.mxu0 %v1595
    %1661 = vmatpush.bf16.msra.mxu0 %v1593
    %1662 = vmatpush.bf16.msra.mxu0 %v1591
    %1663 = vmatmul.bf16.gmra.mxu0 %v1487
    %v1664 = vpop.f32.mrf.mxu0
    %v1665 = vadd.f32 %v1471, %v1664
    %v1666 = vpop.f32.mrf.mxu0
    %v1667 = vadd.f32 %v1471, %v1666
    %1668 = vmatmul.bf16.gmra.mxu0 %v1489
    %v1669 = vpop.f32.mrf.mxu0
    %v1670 = vadd.f32 %v1471, %v1669
    %v1671 = vpop.f32.mrf.mxu0
    %v1672 = vadd.f32 %v1471, %v1671
    %1673 = vdwg.mxu0
    %1674 = vmatpush.bf16.msra.mxu0 %v1621
    %1675 = vmatpush.bf16.msra.mxu0 %v1619
    %1676 = vmatpush.bf16.msra.mxu0 %v1617
    %1677 = vmatpush.bf16.msra.mxu0 %v1615
    %1678 = vmatpush.bf16.msra.mxu0 %v1613
    %1679 = vmatpush.bf16.msra.mxu0 %v1611
    %1680 = vmatpush.bf16.msra.mxu0 %v1609
    %1681 = vmatpush.bf16.msra.mxu0 %v1607
    %1682 = vmatmul.bf16.gmra.mxu0 %v1488
    %v1683 = vpop.f32.mrf.mxu0
    %v1684 = vadd.f32 %v1665, %v1683
    %v1685 = vpop.f32.mrf.mxu0
    %v1686 = vadd.f32 %v1667, %v1685
    %1687 = vmatmul.bf16.gmra.mxu0 %v1490
    %v1688 = vpop.f32.mrf.mxu0
    %v1689 = vadd.f32 %v1670, %v1688
    %v1690 = vpop.f32.mrf.mxu0
    %v1691 = vadd.f32 %v1672, %v1690
    %1692 = vdwg.mxu0
    %1693 = vmatpush.bf16.msra.mxu0 %v1606
    %1694 = vmatpush.bf16.msra.mxu0 %v1604
    %1695 = vmatpush.bf16.msra.mxu0 %v1602
    %1696 = vmatpush.bf16.msra.mxu0 %v1600
    %1697 = vmatpush.bf16.msra.mxu0 %v1598
    %1698 = vmatpush.bf16.msra.mxu0 %v1596
    %1699 = vmatpush.bf16.msra.mxu0 %v1594
    %1700 = vmatpush.bf16.msra.mxu0 %v1592
    %1701 = vmatmul.bf16.gmra.mxu0 %v1487
    %v1702 = vpop.f32.mrf.mxu0
    %v1703 = vadd.f32 %v1472, %v1702
    %v1704 = vpop.f32.mrf.mxu0
    %v1705 = vadd.f32 %v1472, %v1704
    %1706 = vmatmul.bf16.gmra.mxu0 %v1489
    %v1707 = vpop.f32.mrf.mxu0
    %v1708 = vadd.f32 %v1472, %v1707
    %v1709 = vpop.f32.mrf.mxu0
    %v1710 = vadd.f32 %v1472, %v1709
    %1711 = vdwg.mxu0
    %1712 = vmatpush.bf16.msra.mxu0 %v1622
    %1713 = vmatpush.bf16.msra.mxu0 %v1620
    %1714 = vmatpush.bf16.msra.mxu0 %v1618
    %1715 = vmatpush.bf16.msra.mxu0 %v1616
    %1716 = vmatpush.bf16.msra.mxu0 %v1614
    %1717 = vmatpush.bf16.msra.mxu0 %v1612
    %1718 = vmatpush.bf16.msra.mxu0 %v1610
    %1719 = vmatpush.bf16.msra.mxu0 %v1608
    %1720 = vmatmul.bf16.gmra.mxu0 %v1488
    %v1721 = vpop.f32.mrf.mxu0
    %v1722 = vadd.f32 %v1703, %v1721
    %v1723 = vpop.f32.mrf.mxu0
    %v1724 = vadd.f32 %v1705, %v1723
    %1725 = vmatmul.bf16.gmra.mxu0 %v1490
    %v1726 = vpop.f32.mrf.mxu0
    %v1727 = vadd.f32 %v1708, %v1726
    %v1728 = vpop.f32.mrf.mxu0
    %v1729 = vadd.f32 %v1710, %v1728
    %1730 = vdwg.mxu0
    %v1731 = vadd.f32 %v278, %v1684
    %v1732 = vadd.f32 %v279, %v1722
    %v1733 = vadd.f32 %v280, %v1686
    %v1734 = vadd.f32 %v281, %v1724
    %v1735 = vadd.f32 %v282, %v1689
    %v1736 = vadd.f32 %v283, %v1727
    %v1737 = vadd.f32 %v284, %v1691
    %v1738 = vadd.f32 %v285, %v1729
    %v1739 = vld [vmem:[%s18] sm:$0x3]
    %v1740 = vld [vmem:[%s19] sm:$0x3]
    %v1741 = vadd.f32 %v1731, %v1732
    %1742 = vadd.xlane.f32.xlu0 %v1741
    %v1743 = vpop.xlane.xlu0 %1742
    %v1744 = vadd.f32 %v1733, %v1734
    %1745 = vadd.xlane.f32.xlu0 %v1744
    %v1746 = vpop.xlane.xlu0 %1745
    %v1747 = vadd.f32 %v1735, %v1736
    %1748 = vadd.xlane.f32.xlu0 %v1747
    %v1749 = vpop.xlane.xlu0 %1748
    %v1750 = vadd.f32 %v1737, %v1738
    %1751 = vadd.xlane.f32.xlu0 %v1750
    %v1752 = vpop.xlane.xlu0 %1751
    %v1753 = vrcp.pop 256.0
    %v1754 = vmul.f32 256.0, %v1753
    %v1755 = vsub.f32 1.0, %v1754
    %v1756 = vmul.f32 %v1753, %v1755
    %v1757 = vadd.f32 %v1753, %v1756
    %vm1758 = vweird.f32 %v1753
    %v1759 = vsel %vm1758, %v1753, %v1757
    %v1760 = vmul.f32 %v1743, %v1759
    %v1761 = vmul.f32 %v1746, %v1759
    %v1762 = vmul.f32 %v1749, %v1759
    %v1763 = vmul.f32 %v1752, %v1759
    %v1764 = vsub.f32 %v1731, %v1760
    %v1765 = vsub.f32 %v1732, %v1760
    %v1766 = vsub.f32 %v1733, %v1761
    %v1767 = vsub.f32 %v1734, %v1761
    %v1768 = vsub.f32 %v1735, %v1762
    %v1769 = vsub.f32 %v1736, %v1762
    %v1770 = vsub.f32 %v1737, %v1763
    %v1771 = vsub.f32 %v1738, %v1763
    %v1772 = vmul.f32 %v1764, %v1764
    %v1773 = vmul.f32 %v1765, %v1765
    %v1774 = vmul.f32 %v1766, %v1766
    %v1775 = vmul.f32 %v1767, %v1767
    %v1776 = vmul.f32 %v1768, %v1768
    %v1777 = vmul.f32 %v1769, %v1769
    %v1778 = vmul.f32 %v1770, %v1770
    %v1779 = vmul.f32 %v1771, %v1771
    %v1780 = vadd.f32 %v1772, %v1773
    %1781 = vadd.xlane.f32.xlu0 %v1780
    %v1782 = vpop.xlane.xlu0 %1781
    %v1783 = vadd.f32 %v1774, %v1775
    %1784 = vadd.xlane.f32.xlu0 %v1783
    %v1785 = vpop.xlane.xlu0 %1784
    %v1786 = vadd.f32 %v1776, %v1777
    %1787 = vadd.xlane.f32.xlu0 %v1786
    %v1788 = vpop.xlane.xlu0 %1787
    %v1789 = vadd.f32 %v1778, %v1779
    %1790 = vadd.xlane.f32.xlu0 %v1789
    %v1791 = vpop.xlane.xlu0 %1790
    %v1792 = vmul.f32 %v1782, %v1759
    %v1793 = vmul.f32 %v1785, %v1759
    %v1794 = vmul.f32 %v1788, %v1759
    %v1795 = vmul.f32 %v1791, %v1759
    %v1796 = vadd.f32 %v1792, 1e-05
    %v1797 = vadd.f32 %v1793, 1e-05
    %v1798 = vadd.f32 %v1794, 1e-05
    %v1799 = vadd.f32 %v1795, 1e-05
    %v1800 = vrsqrt.pop %v1796
    %v1801 = vmul.f32 %v1800, %v1796
    %v1802 = vmul.f32 %v1801, %v1800
    %v1803 = vmul.f32 0.5, %v1802
    %v1804 = vsub.f32 1.5, %v1803
    %v1805 = vmul.f32 %v1800, %v1804
    %vm1806 = vweird.f32 %v1796
    %vm1807 = vweird.f32 %v1800
    %vm1808 = vmor %vm1806, %vm1807
    %v1809 = vsel %vm1808, %v1800, %v1805
    %v1810 = vrsqrt.pop %v1797
    %v1811 = vmul.f32 %v1810, %v1797
    %v1812 = vmul.f32 %v1811, %v1810
    %v1813 = vmul.f32 0.5, %v1812
    %v1814 = vsub.f32 1.5, %v1813
    %v1815 = vmul.f32 %v1810, %v1814
    %vm1816 = vweird.f32 %v1797
    %vm1817 = vweird.f32 %v1810
    %vm1818 = vmor %vm1816, %vm1817
    %v1819 = vsel %vm1818, %v1810, %v1815
    %v1820 = vrsqrt.pop %v1798
    %v1821 = vmul.f32 %v1820, %v1798
    %v1822 = vmul.f32 %v1821, %v1820
    %v1823 = vmul.f32 0.5, %v1822
    %v1824 = vsub.f32 1.5, %v1823
    %v1825 = vmul.f32 %v1820, %v1824
    %vm1826 = vweird.f32 %v1798
    %vm1827 = vweird.f32 %v1820
    %vm1828 = vmor %vm1826, %vm1827
    %v1829 = vsel %vm1828, %v1820, %v1825
    %v1830 = vrsqrt.pop %v1799
    %v1831 = vmul.f32 %v1830, %v1799
    %v1832 = vmul.f32 %v1831, %v1830
    %v1833 = vmul.f32 0.5, %v1832
    %v1834 = vsub.f32 1.5, %v1833
    %v1835 = vmul.f32 %v1830, %v1834
    %vm1836 = vweird.f32 %v1799
    %vm1837 = vweird.f32 %v1830
    %vm1838 = vmor %vm1836, %vm1837
    %v1839 = vsel %vm1838, %v1830, %v1835
    %v1840 = vmul.f32 %v1764, %v1809
    %v1841 = vmul.f32 %v1765, %v1809
    %v1842 = vmul.f32 %v1766, %v1819
    %v1843 = vmul.f32 %v1767, %v1819
    %v1844 = vmul.f32 %v1768, %v1829
    %v1845 = vmul.f32 %v1769, %v1829
    %v1846 = vmul.f32 %v1770, %v1839
    %v1847 = vmul.f32 %v1771, %v1839
    %v1849 = vperm.slane %v1739, 0
    %v1850 = vperm.slane %v1739, 1
    %v1853 = vmul.f32 %v1840, %v1849
    %v1854 = vmul.f32 %v1841, %v1850
    %v1855 = vmul.f32 %v1842, %v1849
    %v1856 = vmul.f32 %v1843, %v1850
    %v1857 = vmul.f32 %v1844, %v1849
    %v1858 = vmul.f32 %v1845, %v1850
    %v1859 = vmul.f32 %v1846, %v1849
    %v1860 = vmul.f32 %v1847, %v1850
    %v1862 = vperm.slane %v1740, 0
    %v1863 = vperm.slane %v1740, 1
    %v1866 = vadd.f32 %v1853, %v1862
    %v1867 = vadd.f32 %v1854, %v1863
    %v1868 = vadd.f32 %v1855, %v1862
    %v1869 = vadd.f32 %v1856, %v1863
    %v1870 = vadd.f32 %v1857, %v1862
    %v1871 = vadd.f32 %v1858, %v1863
    %v1872 = vadd.f32 %v1859, %v1862
    %v1873 = vadd.f32 %v1860, %v1863
    %v1874 = vpack.c.bf16 %v1868, %v1866
    %v1875 = vpack.c.bf16 %v1869, %v1867
    %v1876 = vpack.c.bf16 %v1872, %v1870
    %v1877 = vpack.c.bf16 %v1873, %v1871
    %v1878 = vld [vmem:[#allocation7] sm:$0xff]
    %v1879 = vld [vmem:[#allocation7 + $0x8] sm:$0xff]
    %v1880 = vld [vmem:[#allocation7 + $0x10] sm:$0xff]
    %v1881 = vld [vmem:[#allocation7 + $0x18] sm:$0xff]
    %v1882 = vld [vmem:[#allocation7 + $0x20] sm:$0xff]
    %v1883 = vld [vmem:[#allocation7 + $0x28] sm:$0xff]
    %v1884 = vld [vmem:[#allocation7 + $0x30] sm:$0xff]
    %v1885 = vld [vmem:[#allocation7 + $0x38] sm:$0xff]
    %v1886 = vld [vmem:[#allocation7 + $0x40] sm:$0xff]
    %v1887 = vld [vmem:[#allocation7 + $0x48] sm:$0xff]
    %v1888 = vld [vmem:[#allocation7 + $0x50] sm:$0xff]
    %v1889 = vld [vmem:[#allocation7 + $0x58] sm:$0xff]
    %v1890 = vld [vmem:[#allocation7 + $0x60] sm:$0xff]
    %v1891 = vld [vmem:[#allocation7 + $0x68] sm:$0xff]
    %v1892 = vld [vmem:[#allocation7 + $0x70] sm:$0xff]
    %v1893 = vld [vmem:[#allocation7 + $0x78] sm:$0xff]
    %v1894 = vld [vmem:[#allocation7 + $0x80] sm:$0xff]
    %v1895 = vld [vmem:[#allocation7 + $0x88] sm:$0xff]
    %v1896 = vld [vmem:[#allocation7 + $0x90] sm:$0xff]
    %v1897 = vld [vmem:[#allocation7 + $0x98] sm:$0xff]
    %v1898 = vld [vmem:[#allocation7 + $0xa0] sm:$0xff]
    %v1899 = vld [vmem:[#allocation7 + $0xa8] sm:$0xff]
    %v1900 = vld [vmem:[#allocation7 + $0xb0] sm:$0xff]
    %v1901 = vld [vmem:[#allocation7 + $0xb8] sm:$0xff]
    %v1902 = vld [vmem:[#allocation7 + $0xc0] sm:$0xff]
    %v1903 = vld [vmem:[#allocation7 + $0xc8] sm:$0xff]
    %v1904 = vld [vmem:[#allocation7 + $0xd0] sm:$0xff]
    %v1905 = vld [vmem:[#allocation7 + $0xd8] sm:$0xff]
    %v1906 = vld [vmem:[#allocation7 + $0xe0] sm:$0xff]
    %v1907 = vld [vmem:[#allocation7 + $0xe8] sm:$0xff]
    %v1908 = vld [vmem:[#allocation7 + $0xf0] sm:$0xff]
    %v1909 = vld [vmem:[#allocation7 + $0xf8] sm:$0xff]
    %v1910 = vld [vmem:[%s9] sm:$0x3]
    %v1912 = vperm.slane %v1910, 0
    %v1913 = vperm.slane %v1910, 1
    %v1948 = vunpack.c.l.b16 %v1878
    %v1949 = vunpack.c.h.b16 %v1878
    %v1950 = vunpack.c.l.b16 %v1879
    %v1951 = vunpack.c.h.b16 %v1879
    %v1952 = vunpack.c.l.b16 %v1880
    %v1953 = vunpack.c.h.b16 %v1880
    %v1954 = vunpack.c.l.b16 %v1881
    %v1955 = vunpack.c.h.b16 %v1881
    %v1956 = vunpack.c.l.b16 %v1882
    %v1957 = vunpack.c.h.b16 %v1882
    %v1958 = vunpack.c.l.b16 %v1883
    %v1959 = vunpack.c.h.b16 %v1883
    %v1960 = vunpack.c.l.b16 %v1884
    %v1961 = vunpack.c.h.b16 %v1884
    %v1962 = vunpack.c.l.b16 %v1885
    %v1963 = vunpack.c.h.b16 %v1885
    %v1964 = vunpack.c.l.b16 %v1886
    %v1965 = vunpack.c.h.b16 %v1886
    %v1966 = vunpack.c.l.b16 %v1887
    %v1967 = vunpack.c.h.b16 %v1887
    %v1968 = vunpack.c.l.b16 %v1888
    %v1969 = vunpack.c.h.b16 %v1888
    %v1970 = vunpack.c.l.b16 %v1889
    %v1971 = vunpack.c.h.b16 %v1889
    %v1972 = vunpack.c.l.b16 %v1890
    %v1973 = vunpack.c.h.b16 %v1890
    %v1974 = vunpack.c.l.b16 %v1891
    %v1975 = vunpack.c.h.b16 %v1891
    %v1976 = vunpack.c.l.b16 %v1892
    %v1977 = vunpack.c.h.b16 %v1892
    %v1978 = vunpack.c.l.b16 %v1893
    %v1979 = vunpack.c.h.b16 %v1893
    %v1980 = vunpack.c.l.b16 %v1894
    %v1981 = vunpack.c.h.b16 %v1894
    %v1982 = vunpack.c.l.b16 %v1895
    %v1983 = vunpack.c.h.b16 %v1895
    %v1984 = vunpack.c.l.b16 %v1896
    %v1985 = vunpack.c.h.b16 %v1896
    %v1986 = vunpack.c.l.b16 %v1897
    %v1987 = vunpack.c.h.b16 %v1897
    %v1988 = vunpack.c.l.b16 %v1898
    %v1989 = vunpack.c.h.b16 %v1898
    %v1990 = vunpack.c.l.b16 %v1899
    %v1991 = vunpack.c.h.b16 %v1899
    %v1992 = vunpack.c.l.b16 %v1900
    %v1993 = vunpack.c.h.b16 %v1900
    %v1994 = vunpack.c.l.b16 %v1901
    %v1995 = vunpack.c.h.b16 %v1901
    %v1996 = vunpack.c.l.b16 %v1902
    %v1997 = vunpack.c.h.b16 %v1902
    %v1998 = vunpack.c.l.b16 %v1903
    %v1999 = vunpack.c.h.b16 %v1903
    %v2000 = vunpack.c.l.b16 %v1904
    %v2001 = vunpack.c.h.b16 %v1904
    %v2002 = vunpack.c.l.b16 %v1905
    %v2003 = vunpack.c.h.b16 %v1905
    %v2004 = vunpack.c.l.b16 %v1906
    %v2005 = vunpack.c.h.b16 %v1906
    %v2006 = vunpack.c.l.b16 %v1907
    %v2007 = vunpack.c.h.b16 %v1907
    %v2008 = vunpack.c.l.b16 %v1908
    %v2009 = vunpack.c.h.b16 %v1908
    %v2010 = vunpack.c.l.b16 %v1909
    %v2011 = vunpack.c.h.b16 %v1909
    %v2012 = vpack.c.b16 %v1950, %v1948
    %v2013 = vpack.c.b16 %v1951, %v1949
    %v2014 = vpack.c.b16 %v1954, %v1952
    %v2015 = vpack.c.b16 %v1955, %v1953
    %v2016 = vpack.c.b16 %v1958, %v1956
    %v2017 = vpack.c.b16 %v1959, %v1957
    %v2018 = vpack.c.b16 %v1962, %v1960
    %v2019 = vpack.c.b16 %v1963, %v1961
    %v2020 = vpack.c.b16 %v1966, %v1964
    %v2021 = vpack.c.b16 %v1967, %v1965
    %v2022 = vpack.c.b16 %v1970, %v1968
    %v2023 = vpack.c.b16 %v1971, %v1969
    %v2024 = vpack.c.b16 %v1974, %v1972
    %v2025 = vpack.c.b16 %v1975, %v1973
    %v2026 = vpack.c.b16 %v1978, %v1976
    %v2027 = vpack.c.b16 %v1979, %v1977
    %v2028 = vpack.c.b16 %v1982, %v1980
    %v2029 = vpack.c.b16 %v1983, %v1981
    %v2030 = vpack.c.b16 %v1986, %v1984
    %v2031 = vpack.c.b16 %v1987, %v1985
    %v2032 = vpack.c.b16 %v1990, %v1988
    %v2033 = vpack.c.b16 %v1991, %v1989
    %v2034 = vpack.c.b16 %v1994, %v1992
    %v2035 = vpack.c.b16 %v1995, %v1993
    %v2036 = vpack.c.b16 %v1998, %v1996
    %v2037 = vpack.c.b16 %v1999, %v1997
    %v2038 = vpack.c.b16 %v2002, %v2000
    %v2039 = vpack.c.b16 %v2003, %v2001
    %v2040 = vpack.c.b16 %v2006, %v2004
    %v2041 = vpack.c.b16 %v2007, %v2005
    %v2042 = vpack.c.b16 %v2010, %v2008
    %v2043 = vpack.c.b16 %v2011, %v2009
    %2076 = vmatpush.bf16.msra.mxu0 %v2026
    %2077 = vmatpush.bf16.msra.mxu0 %v2024
    %2078 = vmatpush.bf16.msra.mxu0 %v2022
    %2079 = vmatpush.bf16.msra.mxu0 %v2020
    %2080 = vmatpush.bf16.msra.mxu0 %v2018
    %2081 = vmatpush.bf16.msra.mxu0 %v2016
    %2082 = vmatpush.bf16.msra.mxu0 %v2014
    %2083 = vmatpush.bf16.msra.mxu0 %v2012
    %2084 = vmatmul.bf16.gmra.mxu0 %v1874
    %v2085 = vpop.f32.mrf.mxu0
    %v2086 = vadd.f32 %v1912, %v2085
    %v2087 = vpop.f32.mrf.mxu0
    %v2088 = vadd.f32 %v1912, %v2087
    %2089 = vmatmul.bf16.gmra.mxu0 %v1876
    %v2090 = vpop.f32.mrf.mxu0
    %v2091 = vadd.f32 %v1912, %v2090
    %v2092 = vpop.f32.mrf.mxu0
    %v2093 = vadd.f32 %v1912, %v2092
    %2094 = vdwg.mxu0
    %2095 = vmatpush.bf16.msra.mxu0 %v2042
    %2096 = vmatpush.bf16.msra.mxu0 %v2040
    %2097 = vmatpush.bf16.msra.mxu0 %v2038
    %2098 = vmatpush.bf16.msra.mxu0 %v2036
    %2099 = vmatpush.bf16.msra.mxu0 %v2034
    %2100 = vmatpush.bf16.msra.mxu0 %v2032
    %2101 = vmatpush.bf16.msra.mxu0 %v2030
    %2102 = vmatpush.bf16.msra.mxu0 %v2028
    %2103 = vmatmul.bf16.gmra.mxu0 %v1875
    %v2104 = vpop.f32.mrf.mxu0
    %v2105 = vadd.f32 %v2086, %v2104
    %v2106 = vpop.f32.mrf.mxu0
    %v2107 = vadd.f32 %v2088, %v2106
    %2108 = vmatmul.bf16.gmra.mxu0 %v1877
    %v2109 = vpop.f32.mrf.mxu0
    %v2110 = vadd.f32 %v2091, %v2109
    %v2111 = vpop.f32.mrf.mxu0
    %v2112 = vadd.f32 %v2093, %v2111
    %2113 = vdwg.mxu0
    %2114 = vmatpush.bf16.msra.mxu0 %v2027
    %2115 = vmatpush.bf16.msra.mxu0 %v2025
    %2116 = vmatpush.bf16.msra.mxu0 %v2023
    %2117 = vmatpush.bf16.msra.mxu0 %v2021
    %2118 = vmatpush.bf16.msra.mxu0 %v2019
    %2119 = vmatpush.bf16.msra.mxu0 %v2017
    %2120 = vmatpush.bf16.msra.mxu0 %v2015
    %2121 = vmatpush.bf16.msra.mxu0 %v2013
    %2122 = vmatmul.bf16.gmra.mxu0 %v1874
    %v2123 = vpop.f32.mrf.mxu0
    %v2124 = vadd.f32 %v1913, %v2123
    %v2125 = vpop.f32.mrf.mxu0
    %v2126 = vadd.f32 %v1913, %v2125
    %2127 = vmatmul.bf16.gmra.mxu0 %v1876
    %v2128 = vpop.f32.mrf.mxu0
    %v2129 = vadd.f32 %v1913, %v2128
    %v2130 = vpop.f32.mrf.mxu0
    %v2131 = vadd.f32 %v1913, %v2130
    %2132 = vdwg.mxu0
    %2133 = vmatpush.bf16.msra.mxu0 %v2043
    %2134 = vmatpush.bf16.msra.mxu0 %v2041
    %2135 = vmatpush.bf16.msra.mxu0 %v2039
    %2136 = vmatpush.bf16.msra.mxu0 %v2037
    %2137 = vmatpush.bf16.msra.mxu0 %v2035
    %2138 = vmatpush.bf16.msra.mxu0 %v2033
    %2139 = vmatpush.bf16.msra.mxu0 %v2031
    %2140 = vmatpush.bf16.msra.mxu0 %v2029
    %2141 = vmatmul.bf16.gmra.mxu0 %v1875
    %v2142 = vpop.f32.mrf.mxu0
    %v2143 = vadd.f32 %v2124, %v2142
    %v2144 = vpop.f32.mrf.mxu0
    %v2145 = vadd.f32 %v2126, %v2144
    %2146 = vmatmul.bf16.gmra.mxu0 %v1877
    %v2147 = vpop.f32.mrf.mxu0
    %v2148 = vadd.f32 %v2129, %v2147
    %v2149 = vpop.f32.mrf.mxu0
    %v2150 = vadd.f32 %v2131, %v2149
    %2151 = vdwg.mxu0
    %v2152 = vpack.c.bf16 %v2143, %v2105
    %v2153 = vpack.c.bf16 %v2145, %v2107
    %v2154 = vpack.c.bf16 %v2148, %v2110
    %v2155 = vpack.c.bf16 %v2150, %v2112
    %v2156 = vld [vmem:[%s2] sm:$0xff]
    %v2157 = vld [vmem:[%s2 + $0x8] sm:$0xff]
    %v2158 = vld [vmem:[%s2 + $0x10] sm:$0xff]
    %v2159 = vld [vmem:[%s2 + $0x18] sm:$0xff]
    %v2160 = vld [vmem:[%s2 + $0x20] sm:$0xff]
    %v2161 = vld [vmem:[%s2 + $0x28] sm:$0xff]
    %v2162 = vld [vmem:[%s2 + $0x30] sm:$0xff]
    %v2163 = vld [vmem:[%s2 + $0x38] sm:$0xff]
    %v2164 = vpack.c.bf16 %v2158, %v2156
    %v2165 = vpack.c.bf16 %v2159, %v2157
    %v2166 = vpack.c.bf16 %v2162, %v2160
    %v2167 = vpack.c.bf16 %v2163, %v2161
    %v2168 = vld [vmem:[%s10] sm:$0xff]
    %v2169 = vld [vmem:[%s10 + $0x8] sm:$0xff]
    %v2170 = vld [vmem:[%s10 + $0x10] sm:$0xff]
    %v2171 = vld [vmem:[%s10 + $0x18] sm:$0xff]
    %v2172 = vld [vmem:[%s10 + $0x20] sm:$0xff]
    %v2173 = vld [vmem:[%s10 + $0x28] sm:$0xff]
    %v2174 = vld [vmem:[%s10 + $0x30] sm:$0xff]
    %v2175 = vld [vmem:[%s10 + $0x38] sm:$0xff]
    %v2176 = vld [vmem:[%s10 + $0x40] sm:$0xff]
    %v2177 = vld [vmem:[%s10 + $0x48] sm:$0xff]
    %v2178 = vld [vmem:[%s10 + $0x50] sm:$0xff]
    %v2179 = vld [vmem:[%s10 + $0x58] sm:$0xff]
    %v2180 = vld [vmem:[%s10 + $0x60] sm:$0xff]
    %v2181 = vld [vmem:[%s10 + $0x68] sm:$0xff]
    %v2182 = vld [vmem:[%s10 + $0x70] sm:$0xff]
    %v2183 = vld [vmem:[%s10 + $0x78] sm:$0xff]
    %v2184 = vld [vmem:[%s10 + $0x80] sm:$0xff]
    %v2185 = vld [vmem:[%s10 + $0x88] sm:$0xff]
    %v2186 = vld [vmem:[%s10 + $0x90] sm:$0xff]
    %v2187 = vld [vmem:[%s10 + $0x98] sm:$0xff]
    %v2188 = vld [vmem:[%s10 + $0xa0] sm:$0xff]
    %v2189 = vld [vmem:[%s10 + $0xa8] sm:$0xff]
    %v2190 = vld [vmem:[%s10 + $0xb0] sm:$0xff]
    %v2191 = vld [vmem:[%s10 + $0xb8] sm:$0xff]
    %v2192 = vld [vmem:[%s10 + $0xc0] sm:$0xff]
    %v2193 = vld [vmem:[%s10 + $0xc8] sm:$0xff]
    %v2194 = vld [vmem:[%s10 + $0xd0] sm:$0xff]
    %v2195 = vld [vmem:[%s10 + $0xd8] sm:$0xff]
    %v2196 = vld [vmem:[%s10 + $0xe0] sm:$0xff]
    %v2197 = vld [vmem:[%s10 + $0xe8] sm:$0xff]
    %v2198 = vld [vmem:[%s10 + $0xf0] sm:$0xff]
    %v2199 = vld [vmem:[%s10 + $0xf8] sm:$0xff]
    %v2200 = vld [vmem:[%s10 + $0x100] sm:$0xff]
    %v2201 = vld [vmem:[%s10 + $0x108] sm:$0xff]
    %v2202 = vld [vmem:[%s10 + $0x110] sm:$0xff]
    %v2203 = vld [vmem:[%s10 + $0x118] sm:$0xff]
    %v2204 = vld [vmem:[%s10 + $0x120] sm:$0xff]
    %v2205 = vld [vmem:[%s10 + $0x128] sm:$0xff]
    %v2206 = vld [vmem:[%s10 + $0x130] sm:$0xff]
    %v2207 = vld [vmem:[%s10 + $0x138] sm:$0xff]
    %v2208 = vld [vmem:[%s10 + $0x140] sm:$0xff]
    %v2209 = vld [vmem:[%s10 + $0x148] sm:$0xff]
    %v2210 = vld [vmem:[%s10 + $0x150] sm:$0xff]
    %v2211 = vld [vmem:[%s10 + $0x158] sm:$0xff]
    %v2212 = vld [vmem:[%s10 + $0x160] sm:$0xff]
    %v2213 = vld [vmem:[%s10 + $0x168] sm:$0xff]
    %v2214 = vld [vmem:[%s10 + $0x170] sm:$0xff]
    %v2215 = vld [vmem:[%s10 + $0x178] sm:$0xff]
    %v2216 = vld [vmem:[%s10 + $0x180] sm:$0xff]
    %v2217 = vld [vmem:[%s10 + $0x188] sm:$0xff]
    %v2218 = vld [vmem:[%s10 + $0x190] sm:$0xff]
    %v2219 = vld [vmem:[%s10 + $0x198] sm:$0xff]
    %v2220 = vld [vmem:[%s10 + $0x1a0] sm:$0xff]
    %v2221 = vld [vmem:[%s10 + $0x1a8] sm:$0xff]
    %v2222 = vld [vmem:[%s10 + $0x1b0] sm:$0xff]
    %v2223 = vld [vmem:[%s10 + $0x1b8] sm:$0xff]
    %v2224 = vld [vmem:[%s10 + $0x1c0] sm:$0xff]
    %v2225 = vld [vmem:[%s10 + $0x1c8] sm:$0xff]
    %v2226 = vld [vmem:[%s10 + $0x1d0] sm:$0xff]
    %v2227 = vld [vmem:[%s10 + $0x1d8] sm:$0xff]
    %v2228 = vld [vmem:[%s10 + $0x1e0] sm:$0xff]
    %v2229 = vld [vmem:[%s10 + $0x1e8] sm:$0xff]
    %v2230 = vld [vmem:[%s10 + $0x1f0] sm:$0xff]
    %v2231 = vld [vmem:[%s10 + $0x1f8] sm:$0xff]
    %v2232 = vld [vmem:[%s11] sm:$0xf]
    %v2234 = vperm.slane %v2232, 0
    %v2235 = vperm.slane %v2232, 1
    %v2236 = vperm.slane %v2232, 2
    %v2237 = vperm.slane %v2232, 3
    %v2306 = vunpack.c.l.b16 %v2168
    %v2307 = vunpack.c.h.b16 %v2168
    %v2308 = vunpack.c.l.b16 %v2169
    %v2309 = vunpack.c.h.b16 %v2169
    %v2310 = vunpack.c.l.b16 %v2170
    %v2311 = vunpack.c.h.b16 %v2170
    %v2312 = vunpack.c.l.b16 %v2171
    %v2313 = vunpack.c.h.b16 %v2171
    %v2314 = vunpack.c.l.b16 %v2172
    %v2315 = vunpack.c.h.b16 %v2172
    %v2316 = vunpack.c.l.b16 %v2173
    %v2317 = vunpack.c.h.b16 %v2173
    %v2318 = vunpack.c.l.b16 %v2174
    %v2319 = vunpack.c.h.b16 %v2174
    %v2320 = vunpack.c.l.b16 %v2175
    %v2321 = vunpack.c.h.b16 %v2175
    %v2322 = vunpack.c.l.b16 %v2176
    %v2323 = vunpack.c.h.b16 %v2176
    %v2324 = vunpack.c.l.b16 %v2177
    %v2325 = vunpack.c.h.b16 %v2177
    %v2326 = vunpack.c.l.b16 %v2178
    %v2327 = vunpack.c.h.b16 %v2178
    %v2328 = vunpack.c.l.b16 %v2179
    %v2329 = vunpack.c.h.b16 %v2179
    %v2330 = vunpack.c.l.b16 %v2180
    %v2331 = vunpack.c.h.b16 %v2180
    %v2332 = vunpack.c.l.b16 %v2181
    %v2333 = vunpack.c.h.b16 %v2181
    %v2334 = vunpack.c.l.b16 %v2182
    %v2335 = vunpack.c.h.b16 %v2182
    %v2336 = vunpack.c.l.b16 %v2183
    %v2337 = vunpack.c.h.b16 %v2183
    %v2338 = vunpack.c.l.b16 %v2184
    %v2339 = vunpack.c.h.b16 %v2184
    %v2340 = vunpack.c.l.b16 %v2185
    %v2341 = vunpack.c.h.b16 %v2185
    %v2342 = vunpack.c.l.b16 %v2186
    %v2343 = vunpack.c.h.b16 %v2186
    %v2344 = vunpack.c.l.b16 %v2187
    %v2345 = vunpack.c.h.b16 %v2187
    %v2346 = vunpack.c.l.b16 %v2188
    %v2347 = vunpack.c.h.b16 %v2188
    %v2348 = vunpack.c.l.b16 %v2189
    %v2349 = vunpack.c.h.b16 %v2189
    %v2350 = vunpack.c.l.b16 %v2190
    %v2351 = vunpack.c.h.b16 %v2190
    %v2352 = vunpack.c.l.b16 %v2191
    %v2353 = vunpack.c.h.b16 %v2191
    %v2354 = vunpack.c.l.b16 %v2192
    %v2355 = vunpack.c.h.b16 %v2192
    %v2356 = vunpack.c.l.b16 %v2193
    %v2357 = vunpack.c.h.b16 %v2193
    %v2358 = vunpack.c.l.b16 %v2194
    %v2359 = vunpack.c.h.b16 %v2194
    %v2360 = vunpack.c.l.b16 %v2195
    %v2361 = vunpack.c.h.b16 %v2195
    %v2362 = vunpack.c.l.b16 %v2196
    %v2363 = vunpack.c.h.b16 %v2196
    %v2364 = vunpack.c.l.b16 %v2197
    %v2365 = vunpack.c.h.b16 %v2197
    %v2366 = vunpack.c.l.b16 %v2198
    %v2367 = vunpack.c.h.b16 %v2198
    %v2368 = vunpack.c.l.b16 %v2199
    %v2369 = vunpack.c.h.b16 %v2199
    %v2370 = vunpack.c.l.b16 %v2200
    %v2371 = vunpack.c.h.b16 %v2200
    %v2372 = vunpack.c.l.b16 %v2201
    %v2373 = vunpack.c.h.b16 %v2201
    %v2374 = vunpack.c.l.b16 %v2202
    %v2375 = vunpack.c.h.b16 %v2202
    %v2376 = vunpack.c.l.b16 %v2203
    %v2377 = vunpack.c.h.b16 %v2203
    %v2378 = vunpack.c.l.b16 %v2204
    %v2379 = vunpack.c.h.b16 %v2204
    %v2380 = vunpack.c.l.b16 %v2205
    %v2381 = vunpack.c.h.b16 %v2205
    %v2382 = vunpack.c.l.b16 %v2206
    %v2383 = vunpack.c.h.b16 %v2206
    %v2384 = vunpack.c.l.b16 %v2207
    %v2385 = vunpack.c.h.b16 %v2207
    %v2386 = vunpack.c.l.b16 %v2208
    %v2387 = vunpack.c.h.b16 %v2208
    %v2388 = vunpack.c.l.b16 %v2209
    %v2389 = vunpack.c.h.b16 %v2209
    %v2390 = vunpack.c.l.b16 %v2210
    %v2391 = vunpack.c.h.b16 %v2210
    %v2392 = vunpack.c.l.b16 %v2211
    %v2393 = vunpack.c.h.b16 %v2211
    %v2394 = vunpack.c.l.b16 %v2212
    %v2395 = vunpack.c.h.b16 %v2212
    %v2396 = vunpack.c.l.b16 %v2213
    %v2397 = vunpack.c.h.b16 %v2213
    %v2398 = vunpack.c.l.b16 %v2214
    %v2399 = vunpack.c.h.b16 %v2214
    %v2400 = vunpack.c.l.b16 %v2215
    %v2401 = vunpack.c.h.b16 %v2215
    %v2402 = vunpack.c.l.b16 %v2216
    %v2403 = vunpack.c.h.b16 %v2216
    %v2404 = vunpack.c.l.b16 %v2217
    %v2405 = vunpack.c.h.b16 %v2217
    %v2406 = vunpack.c.l.b16 %v2218
    %v2407 = vunpack.c.h.b16 %v2218
    %v2408 = vunpack.c.l.b16 %v2219
    %v2409 = vunpack.c.h.b16 %v2219
    %v2410 = vunpack.c.l.b16 %v2220
    %v2411 = vunpack.c.h.b16 %v2220
    %v2412 = vunpack.c.l.b16 %v2221
    %v2413 = vunpack.c.h.b16 %v2221
    %v2414 = vunpack.c.l.b16 %v2222
    %v2415 = vunpack.c.h.b16 %v2222
    %v2416 = vunpack.c.l.b16 %v2223
    %v2417 = vunpack.c.h.b16 %v2223
    %v2418 = vunpack.c.l.b16 %v2224
    %v2419 = vunpack.c.h.b16 %v2224
    %v2420 = vunpack.c.l.b16 %v2225
    %v2421 = vunpack.c.h.b16 %v2225
    %v2422 = vunpack.c.l.b16 %v2226
    %v2423 = vunpack.c.h.b16 %v2226
    %v2424 = vunpack.c.l.b16 %v2227
    %v2425 = vunpack.c.h.b16 %v2227
    %v2426 = vunpack.c.l.b16 %v2228
    %v2427 = vunpack.c.h.b16 %v2228
    %v2428 = vunpack.c.l.b16 %v2229
    %v2429 = vunpack.c.h.b16 %v2229
    %v2430 = vunpack.c.l.b16 %v2230
    %v2431 = vunpack.c.h.b16 %v2230
    %v2432 = vunpack.c.l.b16 %v2231
    %v2433 = vunpack.c.h.b16 %v2231
    %v2434 = vpack.c.b16 %v2310, %v2306
    %v2435 = vpack.c.b16 %v2311, %v2307
    %v2436 = vpack.c.b16 %v2312, %v2308
    %v2437 = vpack.c.b16 %v2313, %v2309
    %v2438 = vpack.c.b16 %v2318, %v2314
    %v2439 = vpack.c.b16 %v2319, %v2315
    %v2440 = vpack.c.b16 %v2320, %v2316
    %v2441 = vpack.c.b16 %v2321, %v2317
    %v2442 = vpack.c.b16 %v2326, %v2322
    %v2443 = vpack.c.b16 %v2327, %v2323
    %v2444 = vpack.c.b16 %v2328, %v2324
    %v2445 = vpack.c.b16 %v2329, %v2325
    %v2446 = vpack.c.b16 %v2334, %v2330
    %v2447 = vpack.c.b16 %v2335, %v2331
    %v2448 = vpack.c.b16 %v2336, %v2332
    %v2449 = vpack.c.b16 %v2337, %v2333
    %v2450 = vpack.c.b16 %v2342, %v2338
    %v2451 = vpack.c.b16 %v2343, %v2339
    %v2452 = vpack.c.b16 %v2344, %v2340
    %v2453 = vpack.c.b16 %v2345, %v2341
    %v2454 = vpack.c.b16 %v2350, %v2346
    %v2455 = vpack.c.b16 %v2351, %v2347
    %v2456 = vpack.c.b16 %v2352, %v2348
    %v2457 = vpack.c.b16 %v2353, %v2349
    %v2458 = vpack.c.b16 %v2358, %v2354
    %v2459 = vpack.c.b16 %v2359, %v2355
    %v2460 = vpack.c.b16 %v2360, %v2356
    %v2461 = vpack.c.b16 %v2361, %v2357
    %v2462 = vpack.c.b16 %v2366, %v2362
    %v2463 = vpack.c.b16 %v2367, %v2363
    %v2464 = vpack.c.b16 %v2368, %v2364
    %v2465 = vpack.c.b16 %v2369, %v2365
    %v2466 = vpack.c.b16 %v2374, %v2370
    %v2467 = vpack.c.b16 %v2375, %v2371
    %v2468 = vpack.c.b16 %v2376, %v2372
    %v2469 = vpack.c.b16 %v2377, %v2373
    %v2470 = vpack.c.b16 %v2382, %v2378
    %v2471 = vpack.c.b16 %v2383, %v2379
    %v2472 = vpack.c.b16 %v2384, %v2380
    %v2473 = vpack.c.b16 %v2385, %v2381
    %v2474 = vpack.c.b16 %v2390, %v2386
    %v2475 = vpack.c.b16 %v2391, %v2387
    %v2476 = vpack.c.b16 %v2392, %v2388
    %v2477 = vpack.c.b16 %v2393, %v2389
    %v2478 = vpack.c.b16 %v2398, %v2394
    %v2479 = vpack.c.b16 %v2399, %v2395
    %v2480 = vpack.c.b16 %v2400, %v2396
    %v2481 = vpack.c.b16 %v2401, %v2397
    %v2482 = vpack.c.b16 %v2406, %v2402
    %v2483 = vpack.c.b16 %v2407, %v2403
    %v2484 = vpack.c.b16 %v2408, %v2404
    %v2485 = vpack.c.b16 %v2409, %v2405
    %v2486 = vpack.c.b16 %v2414, %v2410
    %v2487 = vpack.c.b16 %v2415, %v2411
    %v2488 = vpack.c.b16 %v2416, %v2412
    %v2489 = vpack.c.b16 %v2417, %v2413
    %v2490 = vpack.c.b16 %v2422, %v2418
    %v2491 = vpack.c.b16 %v2423, %v2419
    %v2492 = vpack.c.b16 %v2424, %v2420
    %v2493 = vpack.c.b16 %v2425, %v2421
    %v2494 = vpack.c.b16 %v2430, %v2426
    %v2495 = vpack.c.b16 %v2431, %v2427
    %v2496 = vpack.c.b16 %v2432, %v2428
    %v2497 = vpack.c.b16 %v2433, %v2429
    %2562 = vmatpush.bf16.msra.mxu0 %v2462
    %2563 = vmatpush.bf16.msra.mxu0 %v2458
    %2564 = vmatpush.bf16.msra.mxu0 %v2454
    %2565 = vmatpush.bf16.msra.mxu0 %v2450
    %2566 = vmatpush.bf16.msra.mxu0 %v2446
    %2567 = vmatpush.bf16.msra.mxu0 %v2442
    %2568 = vmatpush.bf16.msra.mxu0 %v2438
    %2569 = vmatpush.bf16.msra.mxu0 %v2434
    %2570 = vmatmul.bf16.gmra.mxu0 %v2164
    %v2571 = vpop.f32.mrf.mxu0
    %v2572 = vadd.f32 %v2234, %v2571
    %v2573 = vpop.f32.mrf.mxu0
    %v2574 = vadd.f32 %v2234, %v2573
    %2575 = vmatmul.bf16.gmra.mxu0 %v2166
    %v2576 = vpop.f32.mrf.mxu0
    %v2577 = vadd.f32 %v2234, %v2576
    %v2578 = vpop.f32.mrf.mxu0
    %v2579 = vadd.f32 %v2234, %v2578
    %2580 = vdwg.mxu0
    %2581 = vmatpush.bf16.msra.mxu0 %v2494
    %2582 = vmatpush.bf16.msra.mxu0 %v2490
    %2583 = vmatpush.bf16.msra.mxu0 %v2486
    %2584 = vmatpush.bf16.msra.mxu0 %v2482
    %2585 = vmatpush.bf16.msra.mxu0 %v2478
    %2586 = vmatpush.bf16.msra.mxu0 %v2474
    %2587 = vmatpush.bf16.msra.mxu0 %v2470
    %2588 = vmatpush.bf16.msra.mxu0 %v2466
    %2589 = vmatmul.bf16.gmra.mxu0 %v2165
    %v2590 = vpop.f32.mrf.mxu0
    %v2591 = vadd.f32 %v2572, %v2590
    %v2592 = vpop.f32.mrf.mxu0
    %v2593 = vadd.f32 %v2574, %v2592
    %2594 = vmatmul.bf16.gmra.mxu0 %v2167
    %v2595 = vpop.f32.mrf.mxu0
    %v2596 = vadd.f32 %v2577, %v2595
    %v2597 = vpop.f32.mrf.mxu0
    %v2598 = vadd.f32 %v2579, %v2597
    %2599 = vdwg.mxu0
    %2600 = vmatpush.bf16.msra.mxu0 %v2463
    %2601 = vmatpush.bf16.msra.mxu0 %v2459
    %2602 = vmatpush.bf16.msra.mxu0 %v2455
    %2603 = vmatpush.bf16.msra.mxu0 %v2451
    %2604 = vmatpush.bf16.msra.mxu0 %v2447
    %2605 = vmatpush.bf16.msra.mxu0 %v2443
    %2606 = vmatpush.bf16.msra.mxu0 %v2439
    %2607 = vmatpush.bf16.msra.mxu0 %v2435
    %2608 = vmatmul.bf16.gmra.mxu0 %v2164
    %v2609 = vpop.f32.mrf.mxu0
    %v2610 = vadd.f32 %v2235, %v2609
    %v2611 = vpop.f32.mrf.mxu0
    %v2612 = vadd.f32 %v2235, %v2611
    %2613 = vmatmul.bf16.gmra.mxu0 %v2166
    %v2614 = vpop.f32.mrf.mxu0
    %v2615 = vadd.f32 %v2235, %v2614
    %v2616 = vpop.f32.mrf.mxu0
    %v2617 = vadd.f32 %v2235, %v2616
    %2618 = vdwg.mxu0
    %2619 = vmatpush.bf16.msra.mxu0 %v2495
    %2620 = vmatpush.bf16.msra.mxu0 %v2491
    %2621 = vmatpush.bf16.msra.mxu0 %v2487
    %2622 = vmatpush.bf16.msra.mxu0 %v2483
    %2623 = vmatpush.bf16.msra.mxu0 %v2479
    %2624 = vmatpush.bf16.msra.mxu0 %v2475
    %2625 = vmatpush.bf16.msra.mxu0 %v2471
    %2626 = vmatpush.bf16.msra.mxu0 %v2467
    %2627 = vmatmul.bf16.gmra.mxu0 %v2165
    %v2628 = vpop.f32.mrf.mxu0
    %v2629 = vadd.f32 %v2610, %v2628
    %v2630 = vpop.f32.mrf.mxu0
    %v2631 = vadd.f32 %v2612, %v2630
    %2632 = vmatmul.bf16.gmra.mxu0 %v2167
    %v2633 = vpop.f32.mrf.mxu0
    %v2634 = vadd.f32 %v2615, %v2633
    %v2635 = vpop.f32.mrf.mxu0
    %v2636 = vadd.f32 %v2617, %v2635
    %2637 = vdwg.mxu0
    %2638 = vmatpush.bf16.msra.mxu0 %v2464
    %2639 = vmatpush.bf16.msra.mxu0 %v2460
    %2640 = vmatpush.bf16.msra.mxu0 %v2456
    %2641 = vmatpush.bf16.msra.mxu0 %v2452
    %2642 = vmatpush.bf16.msra.mxu0 %v2448
    %2643 = vmatpush.bf16.msra.mxu0 %v2444
    %2644 = vmatpush.bf16.msra.mxu0 %v2440
    %2645 = vmatpush.bf16.msra.mxu0 %v2436
    %2646 = vmatmul.bf16.gmra.mxu0 %v2164
    %v2647 = vpop.f32.mrf.mxu0
    %v2648 = vadd.f32 %v2236, %v2647
    %v2649 = vpop.f32.mrf.mxu0
    %v2650 = vadd.f32 %v2236, %v2649
    %2651 = vmatmul.bf16.gmra.mxu0 %v2166
    %v2652 = vpop.f32.mrf.mxu0
    %v2653 = vadd.f32 %v2236, %v2652
    %v2654 = vpop.f32.mrf.mxu0
    %v2655 = vadd.f32 %v2236, %v2654
    %2656 = vdwg.mxu0
    %2657 = vmatpush.bf16.msra.mxu0 %v2496
    %2658 = vmatpush.bf16.msra.mxu0 %v2492
    %2659 = vmatpush.bf16.msra.mxu0 %v2488
    %2660 = vmatpush.bf16.msra.mxu0 %v2484
    %2661 = vmatpush.bf16.msra.mxu0 %v2480
    %2662 = vmatpush.bf16.msra.mxu0 %v2476
    %2663 = vmatpush.bf16.msra.mxu0 %v2472
    %2664 = vmatpush.bf16.msra.mxu0 %v2468
    %2665 = vmatmul.bf16.gmra.mxu0 %v2165
    %v2666 = vpop.f32.mrf.mxu0
    %v2667 = vadd.f32 %v2648, %v2666
    %v2668 = vpop.f32.mrf.mxu0
    %v2669 = vadd.f32 %v2650, %v2668
    %2670 = vmatmul.bf16.gmra.mxu0 %v2167
    %v2671 = vpop.f32.mrf.mxu0
    %v2672 = vadd.f32 %v2653, %v2671
    %v2673 = vpop.f32.mrf.mxu0
    %v2674 = vadd.f32 %v2655, %v2673
    %2675 = vdwg.mxu0
    %2676 = vmatpush.bf16.msra.mxu0 %v2465
    %2677 = vmatpush.bf16.msra.mxu0 %v2461
    %2678 = vmatpush.bf16.msra.mxu0 %v2457
    %2679 = vmatpush.bf16.msra.mxu0 %v2453
    %2680 = vmatpush.bf16.msra.mxu0 %v2449
    %2681 = vmatpush.bf16.msra.mxu0 %v2445
    %2682 = vmatpush.bf16.msra.mxu0 %v2441
    %2683 = vmatpush.bf16.msra.mxu0 %v2437
    %2684 = vmatmul.bf16.gmra.mxu0 %v2164
    %v2685 = vpop.f32.mrf.mxu0
    %v2686 = vadd.f32 %v2237, %v2685
    %v2687 = vpop.f32.mrf.mxu0
    %v2688 = vadd.f32 %v2237, %v2687
    %2689 = vmatmul.bf16.gmra.mxu0 %v2166
    %v2690 = vpop.f32.mrf.mxu0
    %v2691 = vadd.f32 %v2237, %v2690
    %v2692 = vpop.f32.mrf.mxu0
    %v2693 = vadd.f32 %v2237, %v2692
    %2694 = vdwg.mxu0
    %2695 = vmatpush.bf16.msra.mxu0 %v2497
    %2696 = vmatpush.bf16.msra.mxu0 %v2493
    %2697 = vmatpush.bf16.msra.mxu0 %v2489
    %2698 = vmatpush.bf16.msra.mxu0 %v2485
    %2699 = vmatpush.bf16.msra.mxu0 %v2481
    %2700 = vmatpush.bf16.msra.mxu0 %v2477
    %2701 = vmatpush.bf16.msra.mxu0 %v2473
    %2702 = vmatpush.bf16.msra.mxu0 %v2469
    %2703 = vmatmul.bf16.gmra.mxu0 %v2165
    %v2704 = vpop.f32.mrf.mxu0
    %v2705 = vadd.f32 %v2686, %v2704
    %v2706 = vpop.f32.mrf.mxu0
    %v2707 = vadd.f32 %v2688, %v2706
    %2708 = vmatmul.bf16.gmra.mxu0 %v2167
    %v2709 = vpop.f32.mrf.mxu0
    %v2710 = vadd.f32 %v2691, %v2709
    %v2711 = vpop.f32.mrf.mxu0
    %v2712 = vadd.f32 %v2693, %v2711
    %2713 = vdwg.mxu0
    %v2714 = vpack.c.bf16 %v2629, %v2591
    %v2715 = vpack.c.bf16 %v2705, %v2667
    %v2716 = vpack.c.bf16 %v2631, %v2593
    %v2717 = vpack.c.bf16 %v2707, %v2669
    %v2718 = vpack.c.bf16 %v2634, %v2596
    %v2719 = vpack.c.bf16 %v2710, %v2672
    %v2720 = vpack.c.bf16 %v2636, %v2598
    %v2721 = vpack.c.bf16 %v2712, %v2674
    %v2722 = vld [vmem:[#allocation8] sm:$0xff]
    %v2723 = vld [vmem:[#allocation8 + $0x8] sm:$0xff]
    %v2724 = vld [vmem:[#allocation8 + $0x10] sm:$0xff]
    %v2725 = vld [vmem:[#allocation8 + $0x18] sm:$0xff]
    %v2726 = vld [vmem:[#allocation8 + $0x20] sm:$0xff]
    %v2727 = vld [vmem:[#allocation8 + $0x28] sm:$0xff]
    %v2728 = vld [vmem:[#allocation8 + $0x30] sm:$0xff]
    %v2729 = vld [vmem:[#allocation8 + $0x38] sm:$0xff]
    %v2730 = vld [vmem:[#allocation8 + $0x40] sm:$0xff]
    %v2731 = vld [vmem:[#allocation8 + $0x48] sm:$0xff]
    %v2732 = vld [vmem:[#allocation8 + $0x50] sm:$0xff]
    %v2733 = vld [vmem:[#allocation8 + $0x58] sm:$0xff]
    %v2734 = vld [vmem:[#allocation8 + $0x60] sm:$0xff]
    %v2735 = vld [vmem:[#allocation8 + $0x68] sm:$0xff]
    %v2736 = vld [vmem:[#allocation8 + $0x70] sm:$0xff]
    %v2737 = vld [vmem:[#allocation8 + $0x78] sm:$0xff]
    %v2738 = vld [vmem:[#allocation8 + $0x80] sm:$0xff]
    %v2739 = vld [vmem:[#allocation8 + $0x88] sm:$0xff]
    %v2740 = vld [vmem:[#allocation8 + $0x90] sm:$0xff]
    %v2741 = vld [vmem:[#allocation8 + $0x98] sm:$0xff]
    %v2742 = vld [vmem:[#allocation8 + $0xa0] sm:$0xff]
    %v2743 = vld [vmem:[#allocation8 + $0xa8] sm:$0xff]
    %v2744 = vld [vmem:[#allocation8 + $0xb0] sm:$0xff]
    %v2745 = vld [vmem:[#allocation8 + $0xb8] sm:$0xff]
    %v2746 = vld [vmem:[#allocation8 + $0xc0] sm:$0xff]
    %v2747 = vld [vmem:[#allocation8 + $0xc8] sm:$0xff]
    %v2748 = vld [vmem:[#allocation8 + $0xd0] sm:$0xff]
    %v2749 = vld [vmem:[#allocation8 + $0xd8] sm:$0xff]
    %v2750 = vld [vmem:[#allocation8 + $0xe0] sm:$0xff]
    %v2751 = vld [vmem:[#allocation8 + $0xe8] sm:$0xff]
    %v2752 = vld [vmem:[#allocation8 + $0xf0] sm:$0xff]
    %v2753 = vld [vmem:[#allocation8 + $0xf8] sm:$0xff]
    %v2754 = vld [vmem:[%s13] sm:$0x3]
    %v2757 = vunpack.c.l.b16 %v2152
    %v2758 = vunpack.c.l.b16 %v2153
    %v2759 = vpack.c.b16 %v2758, %v2757
    %v2763 = vunpack.c.l.b16 %v2714
    %v2764 = vunpack.c.l.b16 %v2716
    %v2765 = vpack.c.b16 %v2764, %v2763
    %2767 = vmatpush.bf16.xpose.msra.mxu0 0
    %2768 = vmatpush.bf16.xpose.msra.mxu0 0
    %2769 = vmatpush.bf16.xpose.msra.mxu0 0
    %2770 = vmatpush.bf16.xpose.msra.mxu0 0
    %2771 = vmatpush.bf16.xpose.msra.mxu0 0
    %2772 = vmatpush.bf16.xpose.msra.mxu0 0
    %2773 = vmatpush.bf16.xpose.msra.mxu0 0
    %2774 = vmatpush.bf16.xpose.msra.mxu0 %v2765
    %2775 = vmatmul.bf16.gmra.mxu0 %v2759
    %v2776 = vpop.f32.mrf.mxu0
    %v2777 = vadd.f32 %v254, %v2776
    %v2778 = vpop.f32.mrf.mxu0
    %v2779 = vadd.f32 %v255, %v2778
    %2780 = vdwg.mxu0
    %v2783 = vunpack.c.l.b16 %v2154
    %v2784 = vunpack.c.l.b16 %v2155
    %v2785 = vpack.c.b16 %v2784, %v2783
    %v2789 = vunpack.c.l.b16 %v2718
    %v2790 = vunpack.c.l.b16 %v2720
    %v2791 = vpack.c.b16 %v2790, %v2789
    %2793 = vmatpush.bf16.xpose.msra.mxu0 0
    %2794 = vmatpush.bf16.xpose.msra.mxu0 0
    %2795 = vmatpush.bf16.xpose.msra.mxu0 0
    %2796 = vmatpush.bf16.xpose.msra.mxu0 0
    %2797 = vmatpush.bf16.xpose.msra.mxu0 0
    %2798 = vmatpush.bf16.xpose.msra.mxu0 0
    %2799 = vmatpush.bf16.xpose.msra.mxu0 0
    %2800 = vmatpush.bf16.xpose.msra.mxu0 %v2791
    %2801 = vmatmul.bf16.gmra.mxu0 %v2785
    %v2802 = vpop.f32.mrf.mxu0
    %v2803 = vadd.f32 %v256, %v2802
    %v2804 = vpop.f32.mrf.mxu0
    %v2805 = vadd.f32 %v257, %v2804
    %2806 = vdwg.mxu0
    %v2807 = vsel %vm1205, %v2777, -inf
    %2808 = vmax.xlane.f32.xlu0 %v2807
    %v2809 = vpop.xlane.xlu0 %2808
    %v2810 = vsel %vm1205, %v2779, -inf
    %2811 = vmax.xlane.f32.xlu0 %v2810
    %v2812 = vpop.xlane.xlu0 %2811
    %v2813 = vsel %vm1205, %v2803, -inf
    %2814 = vmax.xlane.f32.xlu0 %v2813
    %v2815 = vpop.xlane.xlu0 %2814
    %v2816 = vsel %vm1205, %v2805, -inf
    %2817 = vmax.xlane.f32.xlu0 %v2816
    %v2818 = vpop.xlane.xlu0 %2817
    %v2819 = vsub.f32 %v2777, %v2809
    %v2820 = vsub.f32 %v2779, %v2812
    %v2821 = vsub.f32 %v2803, %v2815
    %v2822 = vsub.f32 %v2805, %v2818
    %v2823 = vmul.f32 %v2819, 1.442695
    %v2824 = vpow.pop %v2823
    %v2825 = vmul.f32 %v2820, 1.442695
    %v2826 = vpow.pop %v2825
    %v2827 = vmul.f32 %v2821, 1.442695
    %v2828 = vpow.pop %v2827
    %v2829 = vmul.f32 %v2822, 1.442695
    %v2830 = vpow.pop %v2829
    %v2831 = vsel %vm1205, %v2824, 0.0
    %2832 = vadd.xlane.f32.xlu0 %v2831
    %v2833 = vpop.xlane.xlu0 %2832
    %v2834 = vsel %vm1205, %v2826, 0.0
    %2835 = vadd.xlane.f32.xlu0 %v2834
    %v2836 = vpop.xlane.xlu0 %2835
    %v2837 = vsel %vm1205, %v2828, 0.0
    %2838 = vadd.xlane.f32.xlu0 %v2837
    %v2839 = vpop.xlane.xlu0 %2838
    %v2840 = vsel %vm1205, %v2830, 0.0
    %2841 = vadd.xlane.f32.xlu0 %v2840
    %v2842 = vpop.xlane.xlu0 %2841
    %v2843 = vrcp.pop %v2833
    %v2844 = vrcp.pop %v2836
    %v2845 = vrcp.pop %v2839
    %v2846 = vrcp.pop %v2842
    %v2847 = vmul.f32 %v2824, %v2843
    %v2848 = vmul.f32 %v2826, %v2844
    %v2849 = vmul.f32 %v2828, %v2845
    %v2850 = vmul.f32 %v2830, %v2846
    %v2851 = vpack.c.bf16 %v2847, %v2847
    %v2852 = vpack.c.bf16 %v2848, %v2848
    %v2853 = vpack.c.bf16 %v2849, %v2849
    %v2854 = vpack.c.bf16 %v2850, %v2850
    %v2857 = vunpack.c.l.b16 %v2851
    %v2858 = vunpack.c.l.b16 %v2852
    %v2859 = vpack.c.b16 %v2858, %v2857
    %v2862 = vunpack.c.l.b16 %v2715
    %v2863 = vunpack.c.l.b16 %v2717
    %v2864 = vpack.c.b16 %v2863, %v2862
    %v2867 = vsel %vm1205, %v2859, 0
    %2869 = vmatpush.bf16.msra.mxu0 0
    %2870 = vmatpush.bf16.msra.mxu0 0
    %2871 = vmatpush.bf16.msra.mxu0 0
    %2872 = vmatpush.bf16.msra.mxu0 0
    %2873 = vmatpush.bf16.msra.mxu0 0
    %2874 = vmatpush.bf16.msra.mxu0 0
    %2875 = vmatpush.bf16.msra.mxu0 0
    %2876 = vmatpush.bf16.msra.mxu0 %v2864
    %2877 = vmatmul.bf16.gmra.mxu0 %v2867
    %v2878 = vpop.f32.mrf.mxu0
    %v2879 = vadd.f32 0.0, %v2878
    %v2880 = vpop.f32.mrf.mxu0
    %v2881 = vadd.f32 0.0, %v2880
    %2882 = vdwg.mxu0
    %v2885 = vunpack.c.l.b16 %v2853
    %v2886 = vunpack.c.l.b16 %v2854
    %v2887 = vpack.c.b16 %v2886, %v2885
    %v2890 = vunpack.c.l.b16 %v2719
    %v2891 = vunpack.c.l.b16 %v2721
    %v2892 = vpack.c.b16 %v2891, %v2890
    %v2895 = vsel %vm1205, %v2887, 0
    %2897 = vmatpush.bf16.msra.mxu0 0
    %2898 = vmatpush.bf16.msra.mxu0 0
    %2899 = vmatpush.bf16.msra.mxu0 0
    %2900 = vmatpush.bf16.msra.mxu0 0
    %2901 = vmatpush.bf16.msra.mxu0 0
    %2902 = vmatpush.bf16.msra.mxu0 0
    %2903 = vmatpush.bf16.msra.mxu0 0
    %2904 = vmatpush.bf16.msra.mxu0 %v2892
    %2905 = vmatmul.bf16.gmra.mxu0 %v2895
    %v2906 = vpop.f32.mrf.mxu0
    %v2907 = vadd.f32 0.0, %v2906
    %v2908 = vpop.f32.mrf.mxu0
    %v2909 = vadd.f32 0.0, %v2908
    %2910 = vdwg.mxu0
    %v2911 = vrot.slane %v2152, 4
    %v2912 = vrot.slane %v2153, 4
    %v2913 = vrot.slane %v2714, 4
    %v2914 = vrot.slane %v2716, 4
    %v2915 = vunpack.c.l.b16 %v2911
    %v2916 = vunpack.c.l.b16 %v2912
    %v2917 = vpack.c.b16 %v2916, %v2915
    %v2919 = vunpack.c.l.b16 %v2913
    %v2920 = vunpack.c.l.b16 %v2914
    %v2921 = vpack.c.b16 %v2920, %v2919
    %2923 = vmatpush.bf16.xpose.msra.mxu0 0
    %2924 = vmatpush.bf16.xpose.msra.mxu0 0
    %2925 = vmatpush.bf16.xpose.msra.mxu0 0
    %2926 = vmatpush.bf16.xpose.msra.mxu0 0
    %2927 = vmatpush.bf16.xpose.msra.mxu0 0
    %2928 = vmatpush.bf16.xpose.msra.mxu0 0
    %2929 = vmatpush.bf16.xpose.msra.mxu0 0
    %2930 = vmatpush.bf16.xpose.msra.mxu0 %v2921
    %2931 = vmatmul.bf16.gmra.mxu0 %v2917
    %v2932 = vpop.f32.mrf.mxu0
    %v2933 = vadd.f32 %v254, %v2932
    %v2934 = vpop.f32.mrf.mxu0
    %v2935 = vadd.f32 %v255, %v2934
    %2936 = vdwg.mxu0
    %v2937 = vrot.slane %v2154, 4
    %v2938 = vrot.slane %v2155, 4
    %v2939 = vrot.slane %v2718, 4
    %v2940 = vrot.slane %v2720, 4
    %v2941 = vunpack.c.l.b16 %v2937
    %v2942 = vunpack.c.l.b16 %v2938
    %v2943 = vpack.c.b16 %v2942, %v2941
    %v2945 = vunpack.c.l.b16 %v2939
    %v2946 = vunpack.c.l.b16 %v2940
    %v2947 = vpack.c.b16 %v2946, %v2945
    %2949 = vmatpush.bf16.xpose.msra.mxu0 0
    %2950 = vmatpush.bf16.xpose.msra.mxu0 0
    %2951 = vmatpush.bf16.xpose.msra.mxu0 0
    %2952 = vmatpush.bf16.xpose.msra.mxu0 0
    %2953 = vmatpush.bf16.xpose.msra.mxu0 0
    %2954 = vmatpush.bf16.xpose.msra.mxu0 0
    %2955 = vmatpush.bf16.xpose.msra.mxu0 0
    %2956 = vmatpush.bf16.xpose.msra.mxu0 %v2947
    %2957 = vmatmul.bf16.gmra.mxu0 %v2943
    %v2958 = vpop.f32.mrf.mxu0
    %v2959 = vadd.f32 %v256, %v2958
    %v2960 = vpop.f32.mrf.mxu0
    %v2961 = vadd.f32 %v257, %v2960
    %2962 = vdwg.mxu0
    %v2963 = vsel %vm1205, %v2933, -inf
    %2964 = vmax.xlane.f32.xlu0 %v2963
    %v2965 = vpop.xlane.xlu0 %2964
    %v2966 = vsel %vm1205, %v2935, -inf
    %2967 = vmax.xlane.f32.xlu0 %v2966
    %v2968 = vpop.xlane.xlu0 %2967
    %v2969 = vsel %vm1205, %v2959, -inf
    %2970 = vmax.xlane.f32.xlu0 %v2969
    %v2971 = vpop.xlane.xlu0 %2970
    %v2972 = vsel %vm1205, %v2961, -inf
    %2973 = vmax.xlane.f32.xlu0 %v2972
    %v2974 = vpop.xlane.xlu0 %2973
    %v2975 = vsub.f32 %v2933, %v2965
    %v2976 = vsub.f32 %v2935, %v2968
    %v2977 = vsub.f32 %v2959, %v2971
    %v2978 = vsub.f32 %v2961, %v2974
    %v2979 = vmul.f32 %v2975, 1.442695
    %v2980 = vpow.pop %v2979
    %v2981 = vmul.f32 %v2976, 1.442695
    %v2982 = vpow.pop %v2981
    %v2983 = vmul.f32 %v2977, 1.442695
    %v2984 = vpow.pop %v2983
    %v2985 = vmul.f32 %v2978, 1.442695
    %v2986 = vpow.pop %v2985
    %v2987 = vsel %vm1205, %v2980, 0.0
    %2988 = vadd.xlane.f32.xlu0 %v2987
    %v2989 = vpop.xlane.xlu0 %2988
    %v2990 = vsel %vm1205, %v2982, 0.0
    %2991 = vadd.xlane.f32.xlu0 %v2990
    %v2992 = vpop.xlane.xlu0 %2991
    %v2993 = vsel %vm1205, %v2984, 0.0
    %2994 = vadd.xlane.f32.xlu0 %v2993
    %v2995 = vpop.xlane.xlu0 %2994
    %v2996 = vsel %vm1205, %v2986, 0.0
    %2997 = vadd.xlane.f32.xlu0 %v2996
    %v2998 = vpop.xlane.xlu0 %2997
    %v2999 = vrcp.pop %v2989
    %v3000 = vrcp.pop %v2992
    %v3001 = vrcp.pop %v2995
    %v3002 = vrcp.pop %v2998
    %v3003 = vmul.f32 %v2980, %v2999
    %v3004 = vmul.f32 %v2982, %v3000
    %v3005 = vmul.f32 %v2984, %v3001
    %v3006 = vmul.f32 %v2986, %v3002
    %v3007 = vpack.c.bf16 %v3003, %v3003
    %v3008 = vpack.c.bf16 %v3004, %v3004
    %v3009 = vpack.c.bf16 %v3005, %v3005
    %v3010 = vpack.c.bf16 %v3006, %v3006
    %v3011 = vrot.slane %v2715, 4
    %v3012 = vrot.slane %v2717, 4
    %v3015 = vunpack.c.l.b16 %v3007
    %v3016 = vunpack.c.l.b16 %v3008
    %v3017 = vpack.c.b16 %v3016, %v3015
    %v3018 = vunpack.c.l.b16 %v3011
    %v3019 = vunpack.c.l.b16 %v3012
    %v3020 = vpack.c.b16 %v3019, %v3018
    %v3023 = vsel %vm1205, %v3017, 0
    %3025 = vmatpush.bf16.msra.mxu0 0
    %3026 = vmatpush.bf16.msra.mxu0 0
    %3027 = vmatpush.bf16.msra.mxu0 0
    %3028 = vmatpush.bf16.msra.mxu0 0
    %3029 = vmatpush.bf16.msra.mxu0 0
    %3030 = vmatpush.bf16.msra.mxu0 0
    %3031 = vmatpush.bf16.msra.mxu0 0
    %3032 = vmatpush.bf16.msra.mxu0 %v3020
    %3033 = vmatmul.bf16.gmra.mxu0 %v3023
    %v3034 = vpop.f32.mrf.mxu0
    %v3035 = vadd.f32 0.0, %v3034
    %v3036 = vpop.f32.mrf.mxu0
    %v3037 = vadd.f32 0.0, %v3036
    %3038 = vdwg.mxu0
    %v3039 = vrot.slane %v2719, 4
    %v3040 = vrot.slane %v2721, 4
    %v3043 = vunpack.c.l.b16 %v3009
    %v3044 = vunpack.c.l.b16 %v3010
    %v3045 = vpack.c.b16 %v3044, %v3043
    %v3046 = vunpack.c.l.b16 %v3039
    %v3047 = vunpack.c.l.b16 %v3040
    %v3048 = vpack.c.b16 %v3047, %v3046
    %v3051 = vsel %vm1205, %v3045, 0
    %3053 = vmatpush.bf16.msra.mxu0 0
    %3054 = vmatpush.bf16.msra.mxu0 0
    %3055 = vmatpush.bf16.msra.mxu0 0
    %3056 = vmatpush.bf16.msra.mxu0 0
    %3057 = vmatpush.bf16.msra.mxu0 0
    %3058 = vmatpush.bf16.msra.mxu0 0
    %3059 = vmatpush.bf16.msra.mxu0 0
    %3060 = vmatpush.bf16.msra.mxu0 %v3048
    %3061 = vmatmul.bf16.gmra.mxu0 %v3051
    %v3062 = vpop.f32.mrf.mxu0
    %v3063 = vadd.f32 0.0, %v3062
    %v3064 = vpop.f32.mrf.mxu0
    %v3065 = vadd.f32 0.0, %v3064
    %3066 = vdwg.mxu0
    %v3067 = vpack.c.bf16 %v3035, %v2879
    %v3068 = vpack.c.bf16 %v3037, %v2881
    %v3069 = vpack.c.bf16 %v3063, %v2907
    %v3070 = vpack.c.bf16 %v3065, %v2909
    %v3072 = vperm.slane %v2754, 0
    %v3073 = vperm.slane %v2754, 1
    %v3080 = vunpack.c.l.b16 %v3067
    %v3081 = vunpack.c.h.b16 %v3067
    %v3082 = vunpack.c.l.b16 %v3068
    %v3083 = vunpack.c.h.b16 %v3068
    %v3084 = vunpack.c.l.b16 %v3069
    %v3085 = vunpack.c.h.b16 %v3069
    %v3086 = vunpack.c.l.b16 %v3070
    %v3087 = vunpack.c.h.b16 %v3070
    %v3088 = vpack.c.b16 %v3082, %v3080
    %v3089 = vpack.c.b16 %v3083, %v3081
    %v3090 = vpack.c.b16 %v3086, %v3084
    %v3091 = vpack.c.b16 %v3087, %v3085
    %v3128 = vunpack.c.l.b16 %v2722
    %v3129 = vunpack.c.h.b16 %v2722
    %v3130 = vunpack.c.l.b16 %v2723
    %v3131 = vunpack.c.h.b16 %v2723
    %v3132 = vunpack.c.l.b16 %v2724
    %v3133 = vunpack.c.h.b16 %v2724
    %v3134 = vunpack.c.l.b16 %v2725
    %v3135 = vunpack.c.h.b16 %v2725
    %v3136 = vunpack.c.l.b16 %v2726
    %v3137 = vunpack.c.h.b16 %v2726
    %v3138 = vunpack.c.l.b16 %v2727
    %v3139 = vunpack.c.h.b16 %v2727
    %v3140 = vunpack.c.l.b16 %v2728
    %v3141 = vunpack.c.h.b16 %v2728
    %v3142 = vunpack.c.l.b16 %v2729
    %v3143 = vunpack.c.h.b16 %v2729
    %v3144 = vunpack.c.l.b16 %v2730
    %v3145 = vunpack.c.h.b16 %v2730
    %v3146 = vunpack.c.l.b16 %v2731
    %v3147 = vunpack.c.h.b16 %v2731
    %v3148 = vunpack.c.l.b16 %v2732
    %v3149 = vunpack.c.h.b16 %v2732
    %v3150 = vunpack.c.l.b16 %v2733
    %v3151 = vunpack.c.h.b16 %v2733
    %v3152 = vunpack.c.l.b16 %v2734
    %v3153 = vunpack.c.h.b16 %v2734
    %v3154 = vunpack.c.l.b16 %v2735
    %v3155 = vunpack.c.h.b16 %v2735
    %v3156 = vunpack.c.l.b16 %v2736
    %v3157 = vunpack.c.h.b16 %v2736
    %v3158 = vunpack.c.l.b16 %v2737
    %v3159 = vunpack.c.h.b16 %v2737
    %v3160 = vunpack.c.l.b16 %v2738
    %v3161 = vunpack.c.h.b16 %v2738
    %v3162 = vunpack.c.l.b16 %v2739
    %v3163 = vunpack.c.h.b16 %v2739
    %v3164 = vunpack.c.l.b16 %v2740
    %v3165 = vunpack.c.h.b16 %v2740
    %v3166 = vunpack.c.l.b16 %v2741
    %v3167 = vunpack.c.h.b16 %v2741
    %v3168 = vunpack.c.l.b16 %v2742
    %v3169 = vunpack.c.h.b16 %v2742
    %v3170 = vunpack.c.l.b16 %v2743
    %v3171 = vunpack.c.h.b16 %v2743
    %v3172 = vunpack.c.l.b16 %v2744
    %v3173 = vunpack.c.h.b16 %v2744
    %v3174 = vunpack.c.l.b16 %v2745
    %v3175 = vunpack.c.h.b16 %v2745
    %v3176 = vunpack.c.l.b16 %v2746
    %v3177 = vunpack.c.h.b16 %v2746
    %v3178 = vunpack.c.l.b16 %v2747
    %v3179 = vunpack.c.h.b16 %v2747
    %v3180 = vunpack.c.l.b16 %v2748
    %v3181 = vunpack.c.h.b16 %v2748
    %v3182 = vunpack.c.l.b16 %v2749
    %v3183 = vunpack.c.h.b16 %v2749
    %v3184 = vunpack.c.l.b16 %v2750
    %v3185 = vunpack.c.h.b16 %v2750
    %v3186 = vunpack.c.l.b16 %v2751
    %v3187 = vunpack.c.h.b16 %v2751
    %v3188 = vunpack.c.l.b16 %v2752
    %v3189 = vunpack.c.h.b16 %v2752
    %v3190 = vunpack.c.l.b16 %v2753
    %v3191 = vunpack.c.h.b16 %v2753
    %v3192 = vpack.c.b16 %v3130, %v3128
    %v3193 = vpack.c.b16 %v3131, %v3129
    %v3194 = vpack.c.b16 %v3134, %v3132
    %v3195 = vpack.c.b16 %v3135, %v3133
    %v3196 = vpack.c.b16 %v3138, %v3136
    %v3197 = vpack.c.b16 %v3139, %v3137
    %v3198 = vpack.c.b16 %v3142, %v3140
    %v3199 = vpack.c.b16 %v3143, %v3141
    %v3200 = vpack.c.b16 %v3146, %v3144
    %v3201 = vpack.c.b16 %v3147, %v3145
    %v3202 = vpack.c.b16 %v3150, %v3148
    %v3203 = vpack.c.b16 %v3151, %v3149
    %v3204 = vpack.c.b16 %v3154, %v3152
    %v3205 = vpack.c.b16 %v3155, %v3153
    %v3206 = vpack.c.b16 %v3158, %v3156
    %v3207 = vpack.c.b16 %v3159, %v3157
    %v3208 = vpack.c.b16 %v3162, %v3160
    %v3209 = vpack.c.b16 %v3163, %v3161
    %v3210 = vpack.c.b16 %v3166, %v3164
    %v3211 = vpack.c.b16 %v3167, %v3165
    %v3212 = vpack.c.b16 %v3170, %v3168
    %v3213 = vpack.c.b16 %v3171, %v3169
    %v3214 = vpack.c.b16 %v3174, %v3172
    %v3215 = vpack.c.b16 %v3175, %v3173
    %v3216 = vpack.c.b16 %v3178, %v3176
    %v3217 = vpack.c.b16 %v3179, %v3177
    %v3218 = vpack.c.b16 %v3182, %v3180
    %v3219 = vpack.c.b16 %v3183, %v3181
    %v3220 = vpack.c.b16 %v3186, %v3184
    %v3221 = vpack.c.b16 %v3187, %v3185
    %v3222 = vpack.c.b16 %v3190, %v3188
    %v3223 = vpack.c.b16 %v3191, %v3189
    %3256 = vmatpush.bf16.msra.mxu0 %v3206
    %3257 = vmatpush.bf16.msra.mxu0 %v3204
    %3258 = vmatpush.bf16.msra.mxu0 %v3202
    %3259 = vmatpush.bf16.msra.mxu0 %v3200
    %3260 = vmatpush.bf16.msra.mxu0 %v3198
    %3261 = vmatpush.bf16.msra.mxu0 %v3196
    %3262 = vmatpush.bf16.msra.mxu0 %v3194
    %3263 = vmatpush.bf16.msra.mxu0 %v3192
    %3264 = vmatmul.bf16.gmra.mxu0 %v3088
    %v3265 = vpop.f32.mrf.mxu0
    %v3266 = vadd.f32 %v3072, %v3265
    %v3267 = vpop.f32.mrf.mxu0
    %v3268 = vadd.f32 %v3072, %v3267
    %3269 = vmatmul.bf16.gmra.mxu0 %v3090
    %v3270 = vpop.f32.mrf.mxu0
    %v3271 = vadd.f32 %v3072, %v3270
    %v3272 = vpop.f32.mrf.mxu0
    %v3273 = vadd.f32 %v3072, %v3272
    %3274 = vdwg.mxu0
    %3275 = vmatpush.bf16.msra.mxu0 %v3222
    %3276 = vmatpush.bf16.msra.mxu0 %v3220
    %3277 = vmatpush.bf16.msra.mxu0 %v3218
    %3278 = vmatpush.bf16.msra.mxu0 %v3216
    %3279 = vmatpush.bf16.msra.mxu0 %v3214
    %3280 = vmatpush.bf16.msra.mxu0 %v3212
    %3281 = vmatpush.bf16.msra.mxu0 %v3210
    %3282 = vmatpush.bf16.msra.mxu0 %v3208
    %3283 = vmatmul.bf16.gmra.mxu0 %v3089
    %v3284 = vpop.f32.mrf.mxu0
    %v3285 = vadd.f32 %v3266, %v3284
    %v3286 = vpop.f32.mrf.mxu0
    %v3287 = vadd.f32 %v3268, %v3286
    %3288 = vmatmul.bf16.gmra.mxu0 %v3091
    %v3289 = vpop.f32.mrf.mxu0
    %v3290 = vadd.f32 %v3271, %v3289
    %v3291 = vpop.f32.mrf.mxu0
    %v3292 = vadd.f32 %v3273, %v3291
    %3293 = vdwg.mxu0
    %3294 = vmatpush.bf16.msra.mxu0 %v3207
    %3295 = vmatpush.bf16.msra.mxu0 %v3205
    %3296 = vmatpush.bf16.msra.mxu0 %v3203
    %3297 = vmatpush.bf16.msra.mxu0 %v3201
    %3298 = vmatpush.bf16.msra.mxu0 %v3199
    %3299 = vmatpush.bf16.msra.mxu0 %v3197
    %3300 = vmatpush.bf16.msra.mxu0 %v3195
    %3301 = vmatpush.bf16.msra.mxu0 %v3193
    %3302 = vmatmul.bf16.gmra.mxu0 %v3088
    %v3303 = vpop.f32.mrf.mxu0
    %v3304 = vadd.f32 %v3073, %v3303
    %v3305 = vpop.f32.mrf.mxu0
    %v3306 = vadd.f32 %v3073, %v3305
    %3307 = vmatmul.bf16.gmra.mxu0 %v3090
    %v3308 = vpop.f32.mrf.mxu0
    %v3309 = vadd.f32 %v3073, %v3308
    %v3310 = vpop.f32.mrf.mxu0
    %v3311 = vadd.f32 %v3073, %v3310
    %3312 = vdwg.mxu0
    %3313 = vmatpush.bf16.msra.mxu0 %v3223
    %3314 = vmatpush.bf16.msra.mxu0 %v3221
    %3315 = vmatpush.bf16.msra.mxu0 %v3219
    %3316 = vmatpush.bf16.msra.mxu0 %v3217
    %3317 = vmatpush.bf16.msra.mxu0 %v3215
    %3318 = vmatpush.bf16.msra.mxu0 %v3213
    %3319 = vmatpush.bf16.msra.mxu0 %v3211
    %3320 = vmatpush.bf16.msra.mxu0 %v3209
    %3321 = vmatmul.bf16.gmra.mxu0 %v3089
    %v3322 = vpop.f32.mrf.mxu0
    %v3323 = vadd.f32 %v3304, %v3322
    %v3324 = vpop.f32.mrf.mxu0
    %v3325 = vadd.f32 %v3306, %v3324
    %3326 = vmatmul.bf16.gmra.mxu0 %v3091
    %v3327 = vpop.f32.mrf.mxu0
    %v3328 = vadd.f32 %v3309, %v3327
    %v3329 = vpop.f32.mrf.mxu0
    %v3330 = vadd.f32 %v3311, %v3329
    %3331 = vdwg.mxu0
    %v3332 = vadd.f32 %v1866, %v3285
    %v3333 = vadd.f32 %v1867, %v3323
    %v3334 = vadd.f32 %v1868, %v3287
    %v3335 = vadd.f32 %v1869, %v3325
    %v3336 = vadd.f32 %v1870, %v3290
    %v3337 = vadd.f32 %v1871, %v3328
    %v3338 = vadd.f32 %v1872, %v3292
    %v3339 = vadd.f32 %v1873, %v3330
    %v3340 = vld [vmem:[%s20] sm:$0x3]
    %v3341 = vld [vmem:[%s21] sm:$0x3]
    %v3342 = vadd.f32 %v3332, %v3333
    %3343 = vadd.xlane.f32.xlu0 %v3342
    %v3344 = vpop.xlane.xlu0 %3343
    %v3345 = vadd.f32 %v3334, %v3335
    %3346 = vadd.xlane.f32.xlu0 %v3345
    %v3347 = vpop.xlane.xlu0 %3346
    %v3348 = vadd.f32 %v3336, %v3337
    %3349 = vadd.xlane.f32.xlu0 %v3348
    %v3350 = vpop.xlane.xlu0 %3349
    %v3351 = vadd.f32 %v3338, %v3339
    %3352 = vadd.xlane.f32.xlu0 %v3351
    %v3353 = vpop.xlane.xlu0 %3352
    %v3354 = vmul.f32 %v3344, %v1759
    %v3355 = vmul.f32 %v3347, %v1759
    %v3356 = vmul.f32 %v3350, %v1759
    %v3357 = vmul.f32 %v3353, %v1759
    %v3358 = vsub.f32 %v3332, %v3354
    %v3359 = vsub.f32 %v3333, %v3354
    %v3360 = vsub.f32 %v3334, %v3355
    %v3361 = vsub.f32 %v3335, %v3355
    %v3362 = vsub.f32 %v3336, %v3356
    %v3363 = vsub.f32 %v3337, %v3356
    %v3364 = vsub.f32 %v3338, %v3357
    %v3365 = vsub.f32 %v3339, %v3357
    %v3366 = vmul.f32 %v3358, %v3358
    %v3367 = vmul.f32 %v3359, %v3359
    %v3368 = vmul.f32 %v3360, %v3360
    %v3369 = vmul.f32 %v3361, %v3361
    %v3370 = vmul.f32 %v3362, %v3362
    %v3371 = vmul.f32 %v3363, %v3363
    %v3372 = vmul.f32 %v3364, %v3364
    %v3373 = vmul.f32 %v3365, %v3365
    %v3374 = vadd.f32 %v3366, %v3367
    %3375 = vadd.xlane.f32.xlu0 %v3374
    %v3376 = vpop.xlane.xlu0 %3375
    %v3377 = vadd.f32 %v3368, %v3369
    %3378 = vadd.xlane.f32.xlu0 %v3377
    %v3379 = vpop.xlane.xlu0 %3378
    %v3380 = vadd.f32 %v3370, %v3371
    %3381 = vadd.xlane.f32.xlu0 %v3380
    %v3382 = vpop.xlane.xlu0 %3381
    %v3383 = vadd.f32 %v3372, %v3373
    %3384 = vadd.xlane.f32.xlu0 %v3383
    %v3385 = vpop.xlane.xlu0 %3384
    %v3386 = vmul.f32 %v3376, %v1759
    %v3387 = vmul.f32 %v3379, %v1759
    %v3388 = vmul.f32 %v3382, %v1759
    %v3389 = vmul.f32 %v3385, %v1759
    %v3390 = vadd.f32 %v3386, 1e-05
    %v3391 = vadd.f32 %v3387, 1e-05
    %v3392 = vadd.f32 %v3388, 1e-05
    %v3393 = vadd.f32 %v3389, 1e-05
    %v3394 = vrsqrt.pop %v3390
    %v3395 = vmul.f32 %v3394, %v3390
    %v3396 = vmul.f32 %v3395, %v3394
    %v3397 = vmul.f32 0.5, %v3396
    %v3398 = vsub.f32 1.5, %v3397
    %v3399 = vmul.f32 %v3394, %v3398
    %vm3400 = vweird.f32 %v3390
    %vm3401 = vweird.f32 %v3394
    %vm3402 = vmor %vm3400, %vm3401
    %v3403 = vsel %vm3402, %v3394, %v3399
    %v3404 = vrsqrt.pop %v3391
    %v3405 = vmul.f32 %v3404, %v3391
    %v3406 = vmul.f32 %v3405, %v3404
    %v3407 = vmul.f32 0.5, %v3406
    %v3408 = vsub.f32 1.5, %v3407
    %v3409 = vmul.f32 %v3404, %v3408
    %vm3410 = vweird.f32 %v3391
    %vm3411 = vweird.f32 %v3404
    %vm3412 = vmor %vm3410, %vm3411
    %v3413 = vsel %vm3412, %v3404, %v3409
    %v3414 = vrsqrt.pop %v3392
    %v3415 = vmul.f32 %v3414, %v3392
    %v3416 = vmul.f32 %v3415, %v3414
    %v3417 = vmul.f32 0.5, %v3416
    %v3418 = vsub.f32 1.5, %v3417
    %v3419 = vmul.f32 %v3414, %v3418
    %vm3420 = vweird.f32 %v3392
    %vm3421 = vweird.f32 %v3414
    %vm3422 = vmor %vm3420, %vm3421
    %v3423 = vsel %vm3422, %v3414, %v3419
    %v3424 = vrsqrt.pop %v3393
    %v3425 = vmul.f32 %v3424, %v3393
    %v3426 = vmul.f32 %v3425, %v3424
    %v3427 = vmul.f32 0.5, %v3426
    %v3428 = vsub.f32 1.5, %v3427
    %v3429 = vmul.f32 %v3424, %v3428
    %vm3430 = vweird.f32 %v3393
    %vm3431 = vweird.f32 %v3424
    %vm3432 = vmor %vm3430, %vm3431
    %v3433 = vsel %vm3432, %v3424, %v3429
    %v3434 = vmul.f32 %v3358, %v3403
    %v3435 = vmul.f32 %v3359, %v3403
    %v3436 = vmul.f32 %v3360, %v3413
    %v3437 = vmul.f32 %v3361, %v3413
    %v3438 = vmul.f32 %v3362, %v3423
    %v3439 = vmul.f32 %v3363, %v3423
    %v3440 = vmul.f32 %v3364, %v3433
    %v3441 = vmul.f32 %v3365, %v3433
    %v3443 = vperm.slane %v3340, 0
    %v3444 = vperm.slane %v3340, 1
    %v3447 = vmul.f32 %v3434, %v3443
    %v3448 = vmul.f32 %v3435, %v3444
    %v3449 = vmul.f32 %v3436, %v3443
    %v3450 = vmul.f32 %v3437, %v3444
    %v3451 = vmul.f32 %v3438, %v3443
    %v3452 = vmul.f32 %v3439, %v3444
    %v3453 = vmul.f32 %v3440, %v3443
    %v3454 = vmul.f32 %v3441, %v3444
    %v3456 = vperm.slane %v3341, 0
    %v3457 = vperm.slane %v3341, 1
    %v3460 = vadd.f32 %v3447, %v3456
    %v3461 = vadd.f32 %v3448, %v3457
    %v3462 = vadd.f32 %v3449, %v3456
    %v3463 = vadd.f32 %v3450, %v3457
    %v3464 = vadd.f32 %v3451, %v3456
    %v3465 = vadd.f32 %v3452, %v3457
    %v3466 = vadd.f32 %v3453, %v3456
    %v3467 = vadd.f32 %v3454, %v3457
    %v3468 = vpack.c.bf16 %v3462, %v3460
    %v3469 = vpack.c.bf16 %v3463, %v3461
    %v3470 = vpack.c.bf16 %v3466, %v3464
    %v3471 = vpack.c.bf16 %v3467, %v3465
    %v3472 = vld [vmem:[#allocation10] sm:$0xff]
    %v3473 = vld [vmem:[#allocation10 + $0x8] sm:$0xff]
    %v3474 = vld [vmem:[#allocation10 + $0x10] sm:$0xff]
    %v3475 = vld [vmem:[#allocation10 + $0x18] sm:$0xff]
    %v3476 = vld [vmem:[#allocation10 + $0x20] sm:$0xff]
    %v3477 = vld [vmem:[#allocation10 + $0x28] sm:$0xff]
    %v3478 = vld [vmem:[#allocation10 + $0x30] sm:$0xff]
    %v3479 = vld [vmem:[#allocation10 + $0x38] sm:$0xff]
    %v3480 = vld [vmem:[#allocation10 + $0x40] sm:$0xff]
    %v3481 = vld [vmem:[#allocation10 + $0x48] sm:$0xff]
    %v3482 = vld [vmem:[#allocation10 + $0x50] sm:$0xff]
    %v3483 = vld [vmem:[#allocation10 + $0x58] sm:$0xff]
    %v3484 = vld [vmem:[#allocation10 + $0x60] sm:$0xff]
    %v3485 = vld [vmem:[#allocation10 + $0x68] sm:$0xff]
    %v3486 = vld [vmem:[#allocation10 + $0x70] sm:$0xff]
    %v3487 = vld [vmem:[#allocation10 + $0x78] sm:$0xff]
    %v3488 = vld [vmem:[#allocation10 + $0x80] sm:$0xff]
    %v3489 = vld [vmem:[#allocation10 + $0x88] sm:$0xff]
    %v3490 = vld [vmem:[#allocation10 + $0x90] sm:$0xff]
    %v3491 = vld [vmem:[#allocation10 + $0x98] sm:$0xff]
    %v3492 = vld [vmem:[#allocation10 + $0xa0] sm:$0xff]
    %v3493 = vld [vmem:[#allocation10 + $0xa8] sm:$0xff]
    %v3494 = vld [vmem:[#allocation10 + $0xb0] sm:$0xff]
    %v3495 = vld [vmem:[#allocation10 + $0xb8] sm:$0xff]
    %v3496 = vld [vmem:[#allocation10 + $0xc0] sm:$0xff]
    %v3497 = vld [vmem:[#allocation10 + $0xc8] sm:$0xff]
    %v3498 = vld [vmem:[#allocation10 + $0xd0] sm:$0xff]
    %v3499 = vld [vmem:[#allocation10 + $0xd8] sm:$0xff]
    %v3500 = vld [vmem:[#allocation10 + $0xe0] sm:$0xff]
    %v3501 = vld [vmem:[#allocation10 + $0xe8] sm:$0xff]
    %v3502 = vld [vmem:[#allocation10 + $0xf0] sm:$0xff]
    %v3503 = vld [vmem:[#allocation10 + $0xf8] sm:$0xff]
    %v3504 = vld [vmem:[#allocation10 + $0x100] sm:$0xff]
    %v3505 = vld [vmem:[#allocation10 + $0x108] sm:$0xff]
    %v3506 = vld [vmem:[#allocation10 + $0x110] sm:$0xff]
    %v3507 = vld [vmem:[#allocation10 + $0x118] sm:$0xff]
    %v3508 = vld [vmem:[#allocation10 + $0x120] sm:$0xff]
    %v3509 = vld [vmem:[#allocation10 + $0x128] sm:$0xff]
    %v3510 = vld [vmem:[#allocation10 + $0x130] sm:$0xff]
    %v3511 = vld [vmem:[#allocation10 + $0x138] sm:$0xff]
    %v3512 = vld [vmem:[#allocation10 + $0x140] sm:$0xff]
    %v3513 = vld [vmem:[#allocation10 + $0x148] sm:$0xff]
    %v3514 = vld [vmem:[#allocation10 + $0x150] sm:$0xff]
    %v3515 = vld [vmem:[#allocation10 + $0x158] sm:$0xff]
    %v3516 = vld [vmem:[#allocation10 + $0x160] sm:$0xff]
    %v3517 = vld [vmem:[#allocation10 + $0x168] sm:$0xff]
    %v3518 = vld [vmem:[#allocation10 + $0x170] sm:$0xff]
    %v3519 = vld [vmem:[#allocation10 + $0x178] sm:$0xff]
    %v3520 = vld [vmem:[#allocation10 + $0x180] sm:$0xff]
    %v3521 = vld [vmem:[#allocation10 + $0x188] sm:$0xff]
    %v3522 = vld [vmem:[#allocation10 + $0x190] sm:$0xff]
    %v3523 = vld [vmem:[#allocation10 + $0x198] sm:$0xff]
    %v3524 = vld [vmem:[#allocation10 + $0x1a0] sm:$0xff]
    %v3525 = vld [vmem:[#allocation10 + $0x1a8] sm:$0xff]
    %v3526 = vld [vmem:[#allocation10 + $0x1b0] sm:$0xff]
    %v3527 = vld [vmem:[#allocation10 + $0x1b8] sm:$0xff]
    %v3528 = vld [vmem:[#allocation10 + $0x1c0] sm:$0xff]
    %v3529 = vld [vmem:[#allocation10 + $0x1c8] sm:$0xff]
    %v3530 = vld [vmem:[#allocation10 + $0x1d0] sm:$0xff]
    %v3531 = vld [vmem:[#allocation10 + $0x1d8] sm:$0xff]
    %v3532 = vld [vmem:[#allocation10 + $0x1e0] sm:$0xff]
    %v3533 = vld [vmem:[#allocation10 + $0x1e8] sm:$0xff]
    %v3534 = vld [vmem:[#allocation10 + $0x1f0] sm:$0xff]
    %v3535 = vld [vmem:[#allocation10 + $0x1f8] sm:$0xff]
    %v3536 = vld [vmem:[%s15] sm:$0xf]
    %v3538 = vperm.slane %v3536, 0
    %v3539 = vperm.slane %v3536, 1
    %v3540 = vperm.slane %v3536, 2
    %v3541 = vperm.slane %v3536, 3
    %v3610 = vunpack.c.l.b16 %v3472
    %v3611 = vunpack.c.h.b16 %v3472
    %v3612 = vunpack.c.l.b16 %v3473
    %v3613 = vunpack.c.h.b16 %v3473
    %v3614 = vunpack.c.l.b16 %v3474
    %v3615 = vunpack.c.h.b16 %v3474
    %v3616 = vunpack.c.l.b16 %v3475
    %v3617 = vunpack.c.h.b16 %v3475
    %v3618 = vunpack.c.l.b16 %v3476
    %v3619 = vunpack.c.h.b16 %v3476
    %v3620 = vunpack.c.l.b16 %v3477
    %v3621 = vunpack.c.h.b16 %v3477
    %v3622 = vunpack.c.l.b16 %v3478
    %v3623 = vunpack.c.h.b16 %v3478
    %v3624 = vunpack.c.l.b16 %v3479
    %v3625 = vunpack.c.h.b16 %v3479
    %v3626 = vunpack.c.l.b16 %v3480
    %v3627 = vunpack.c.h.b16 %v3480
    %v3628 = vunpack.c.l.b16 %v3481
    %v3629 = vunpack.c.h.b16 %v3481
    %v3630 = vunpack.c.l.b16 %v3482
    %v3631 = vunpack.c.h.b16 %v3482
    %v3632 = vunpack.c.l.b16 %v3483
    %v3633 = vunpack.c.h.b16 %v3483
    %v3634 = vunpack.c.l.b16 %v3484
    %v3635 = vunpack.c.h.b16 %v3484
    %v3636 = vunpack.c.l.b16 %v3485
    %v3637 = vunpack.c.h.b16 %v3485
    %v3638 = vunpack.c.l.b16 %v3486
    %v3639 = vunpack.c.h.b16 %v3486
    %v3640 = vunpack.c.l.b16 %v3487
    %v3641 = vunpack.c.h.b16 %v3487
    %v3642 = vunpack.c.l.b16 %v3488
    %v3643 = vunpack.c.h.b16 %v3488
    %v3644 = vunpack.c.l.b16 %v3489
    %v3645 = vunpack.c.h.b16 %v3489
    %v3646 = vunpack.c.l.b16 %v3490
    %v3647 = vunpack.c.h.b16 %v3490
    %v3648 = vunpack.c.l.b16 %v3491
    %v3649 = vunpack.c.h.b16 %v3491
    %v3650 = vunpack.c.l.b16 %v3492
    %v3651 = vunpack.c.h.b16 %v3492
    %v3652 = vunpack.c.l.b16 %v3493
    %v3653 = vunpack.c.h.b16 %v3493
    %v3654 = vunpack.c.l.b16 %v3494
    %v3655 = vunpack.c.h.b16 %v3494
    %v3656 = vunpack.c.l.b16 %v3495
    %v3657 = vunpack.c.h.b16 %v3495
    %v3658 = vunpack.c.l.b16 %v3496
    %v3659 = vunpack.c.h.b16 %v3496
    %v3660 = vunpack.c.l.b16 %v3497
    %v3661 = vunpack.c.h.b16 %v3497
    %v3662 = vunpack.c.l.b16 %v3498
    %v3663 = vunpack.c.h.b16 %v3498
    %v3664 = vunpack.c.l.b16 %v3499
    %v3665 = vunpack.c.h.b16 %v3499
    %v3666 = vunpack.c.l.b16 %v3500
    %v3667 = vunpack.c.h.b16 %v3500
    %v3668 = vunpack.c.l.b16 %v3501
    %v3669 = vunpack.c.h.b16 %v3501
    %v3670 = vunpack.c.l.b16 %v3502
    %v3671 = vunpack.c.h.b16 %v3502
    %v3672 = vunpack.c.l.b16 %v3503
    %v3673 = vunpack.c.h.b16 %v3503
    %v3674 = vunpack.c.l.b16 %v3504
    %v3675 = vunpack.c.h.b16 %v3504
    %v3676 = vunpack.c.l.b16 %v3505
    %v3677 = vunpack.c.h.b16 %v3505
    %v3678 = vunpack.c.l.b16 %v3506
    %v3679 = vunpack.c.h.b16 %v3506
    %v3680 = vunpack.c.l.b16 %v3507
    %v3681 = vunpack.c.h.b16 %v3507
    %v3682 = vunpack.c.l.b16 %v3508
    %v3683 = vunpack.c.h.b16 %v3508
    %v3684 = vunpack.c.l.b16 %v3509
    %v3685 = vunpack.c.h.b16 %v3509
    %v3686 = vunpack.c.l.b16 %v3510
    %v3687 = vunpack.c.h.b16 %v3510
    %v3688 = vunpack.c.l.b16 %v3511
    %v3689 = vunpack.c.h.b16 %v3511
    %v3690 = vunpack.c.l.b16 %v3512
    %v3691 = vunpack.c.h.b16 %v3512
    %v3692 = vunpack.c.l.b16 %v3513
    %v3693 = vunpack.c.h.b16 %v3513
    %v3694 = vunpack.c.l.b16 %v3514
    %v3695 = vunpack.c.h.b16 %v3514
    %v3696 = vunpack.c.l.b16 %v3515
    %v3697 = vunpack.c.h.b16 %v3515
    %v3698 = vunpack.c.l.b16 %v3516
    %v3699 = vunpack.c.h.b16 %v3516
    %v3700 = vunpack.c.l.b16 %v3517
    %v3701 = vunpack.c.h.b16 %v3517
    %v3702 = vunpack.c.l.b16 %v3518
    %v3703 = vunpack.c.h.b16 %v3518
    %v3704 = vunpack.c.l.b16 %v3519
    %v3705 = vunpack.c.h.b16 %v3519
    %v3706 = vunpack.c.l.b16 %v3520
    %v3707 = vunpack.c.h.b16 %v3520
    %v3708 = vunpack.c.l.b16 %v3521
    %v3709 = vunpack.c.h.b16 %v3521
    %v3710 = vunpack.c.l.b16 %v3522
    %v3711 = vunpack.c.h.b16 %v3522
    %v3712 = vunpack.c.l.b16 %v3523
    %v3713 = vunpack.c.h.b16 %v3523
    %v3714 = vunpack.c.l.b16 %v3524
    %v3715 = vunpack.c.h.b16 %v3524
    %v3716 = vunpack.c.l.b16 %v3525
    %v3717 = vunpack.c.h.b16 %v3525
    %v3718 = vunpack.c.l.b16 %v3526
    %v3719 = vunpack.c.h.b16 %v3526
    %v3720 = vunpack.c.l.b16 %v3527
    %v3721 = vunpack.c.h.b16 %v3527
    %v3722 = vunpack.c.l.b16 %v3528
    %v3723 = vunpack.c.h.b16 %v3528
    %v3724 = vunpack.c.l.b16 %v3529
    %v3725 = vunpack.c.h.b16 %v3529
    %v3726 = vunpack.c.l.b16 %v3530
    %v3727 = vunpack.c.h.b16 %v3530
    %v3728 = vunpack.c.l.b16 %v3531
    %v3729 = vunpack.c.h.b16 %v3531
    %v3730 = vunpack.c.l.b16 %v3532
    %v3731 = vunpack.c.h.b16 %v3532
    %v3732 = vunpack.c.l.b16 %v3533
    %v3733 = vunpack.c.h.b16 %v3533
    %v3734 = vunpack.c.l.b16 %v3534
    %v3735 = vunpack.c.h.b16 %v3534
    %v3736 = vunpack.c.l.b16 %v3535
    %v3737 = vunpack.c.h.b16 %v3535
    %v3738 = vpack.c.b16 %v3614, %v3610
    %v3739 = vpack.c.b16 %v3615, %v3611
    %v3740 = vpack.c.b16 %v3616, %v3612
    %v3741 = vpack.c.b16 %v3617, %v3613
    %v3742 = vpack.c.b16 %v3622, %v3618
    %v3743 = vpack.c.b16 %v3623, %v3619
    %v3744 = vpack.c.b16 %v3624, %v3620
    %v3745 = vpack.c.b16 %v3625, %v3621
    %v3746 = vpack.c.b16 %v3630, %v3626
    %v3747 = vpack.c.b16 %v3631, %v3627
    %v3748 = vpack.c.b16 %v3632, %v3628
    %v3749 = vpack.c.b16 %v3633, %v3629
    %v3750 = vpack.c.b16 %v3638, %v3634
    %v3751 = vpack.c.b16 %v3639, %v3635
    %v3752 = vpack.c.b16 %v3640, %v3636
    %v3753 = vpack.c.b16 %v3641, %v3637
    %v3754 = vpack.c.b16 %v3646, %v3642
    %v3755 = vpack.c.b16 %v3647, %v3643
    %v3756 = vpack.c.b16 %v3648, %v3644
    %v3757 = vpack.c.b16 %v3649, %v3645
    %v3758 = vpack.c.b16 %v3654, %v3650
    %v3759 = vpack.c.b16 %v3655, %v3651
    %v3760 = vpack.c.b16 %v3656, %v3652
    %v3761 = vpack.c.b16 %v3657, %v3653
    %v3762 = vpack.c.b16 %v3662, %v3658
    %v3763 = vpack.c.b16 %v3663, %v3659
    %v3764 = vpack.c.b16 %v3664, %v3660
    %v3765 = vpack.c.b16 %v3665, %v3661
    %v3766 = vpack.c.b16 %v3670, %v3666
    %v3767 = vpack.c.b16 %v3671, %v3667
    %v3768 = vpack.c.b16 %v3672, %v3668
    %v3769 = vpack.c.b16 %v3673, %v3669
    %v3770 = vpack.c.b16 %v3678, %v3674
    %v3771 = vpack.c.b16 %v3679, %v3675
    %v3772 = vpack.c.b16 %v3680, %v3676
    %v3773 = vpack.c.b16 %v3681, %v3677
    %v3774 = vpack.c.b16 %v3686, %v3682
    %v3775 = vpack.c.b16 %v3687, %v3683
    %v3776 = vpack.c.b16 %v3688, %v3684
    %v3777 = vpack.c.b16 %v3689, %v3685
    %v3778 = vpack.c.b16 %v3694, %v3690
    %v3779 = vpack.c.b16 %v3695, %v3691
    %v3780 = vpack.c.b16 %v3696, %v3692
    %v3781 = vpack.c.b16 %v3697, %v3693
    %v3782 = vpack.c.b16 %v3702, %v3698
    %v3783 = vpack.c.b16 %v3703, %v3699
    %v3784 = vpack.c.b16 %v3704, %v3700
    %v3785 = vpack.c.b16 %v3705, %v3701
    %v3786 = vpack.c.b16 %v3710, %v3706
    %v3787 = vpack.c.b16 %v3711, %v3707
    %v3788 = vpack.c.b16 %v3712, %v3708
    %v3789 = vpack.c.b16 %v3713, %v3709
    %v3790 = vpack.c.b16 %v3718, %v3714
    %v3791 = vpack.c.b16 %v3719, %v3715
    %v3792 = vpack.c.b16 %v3720, %v3716
    %v3793 = vpack.c.b16 %v3721, %v3717
    %v3794 = vpack.c.b16 %v3726, %v3722
    %v3795 = vpack.c.b16 %v3727, %v3723
    %v3796 = vpack.c.b16 %v3728, %v3724
    %v3797 = vpack.c.b16 %v3729, %v3725
    %v3798 = vpack.c.b16 %v3734, %v3730
    %v3799 = vpack.c.b16 %v3735, %v3731
    %v3800 = vpack.c.b16 %v3736, %v3732
    %v3801 = vpack.c.b16 %v3737, %v3733
    %3866 = vmatpush.bf16.msra.mxu0 %v3766
    %3867 = vmatpush.bf16.msra.mxu0 %v3762
    %3868 = vmatpush.bf16.msra.mxu0 %v3758
    %3869 = vmatpush.bf16.msra.mxu0 %v3754
    %3870 = vmatpush.bf16.msra.mxu0 %v3750
    %3871 = vmatpush.bf16.msra.mxu0 %v3746
    %3872 = vmatpush.bf16.msra.mxu0 %v3742
    %3873 = vmatpush.bf16.msra.mxu0 %v3738
    %3874 = vmatmul.bf16.gmra.mxu0 %v3468
    %v3875 = vpop.f32.mrf.mxu0
    %v3876 = vadd.f32 %v3538, %v3875
    %v3877 = vpop.f32.mrf.mxu0
    %v3878 = vadd.f32 %v3538, %v3877
    %3879 = vmatmul.bf16.gmra.mxu0 %v3470
    %v3880 = vpop.f32.mrf.mxu0
    %v3881 = vadd.f32 %v3538, %v3880
    %v3882 = vpop.f32.mrf.mxu0
    %v3883 = vadd.f32 %v3538, %v3882
    %3884 = vdwg.mxu0
    %3885 = vmatpush.bf16.msra.mxu0 %v3798
    %3886 = vmatpush.bf16.msra.mxu0 %v3794
    %3887 = vmatpush.bf16.msra.mxu0 %v3790
    %3888 = vmatpush.bf16.msra.mxu0 %v3786
    %3889 = vmatpush.bf16.msra.mxu0 %v3782
    %3890 = vmatpush.bf16.msra.mxu0 %v3778
    %3891 = vmatpush.bf16.msra.mxu0 %v3774
    %3892 = vmatpush.bf16.msra.mxu0 %v3770
    %3893 = vmatmul.bf16.gmra.mxu0 %v3469
    %v3894 = vpop.f32.mrf.mxu0
    %v3895 = vadd.f32 %v3876, %v3894
    %v3896 = vpop.f32.mrf.mxu0
    %v3897 = vadd.f32 %v3878, %v3896
    %3898 = vmatmul.bf16.gmra.mxu0 %v3471
    %v3899 = vpop.f32.mrf.mxu0
    %v3900 = vadd.f32 %v3881, %v3899
    %v3901 = vpop.f32.mrf.mxu0
    %v3902 = vadd.f32 %v3883, %v3901
    %3903 = vdwg.mxu0
    %3904 = vmatpush.bf16.msra.mxu0 %v3767
    %3905 = vmatpush.bf16.msra.mxu0 %v3763
    %3906 = vmatpush.bf16.msra.mxu0 %v3759
    %3907 = vmatpush.bf16.msra.mxu0 %v3755
    %3908 = vmatpush.bf16.msra.mxu0 %v3751
    %3909 = vmatpush.bf16.msra.mxu0 %v3747
    %3910 = vmatpush.bf16.msra.mxu0 %v3743
    %3911 = vmatpush.bf16.msra.mxu0 %v3739
    %3912 = vmatmul.bf16.gmra.mxu0 %v3468
    %v3913 = vpop.f32.mrf.mxu0
    %v3914 = vadd.f32 %v3539, %v3913
    %v3915 = vpop.f32.mrf.mxu0
    %v3916 = vadd.f32 %v3539, %v3915
    %3917 = vmatmul.bf16.gmra.mxu0 %v3470
    %v3918 = vpop.f32.mrf.mxu0
    %v3919 = vadd.f32 %v3539, %v3918
    %v3920 = vpop.f32.mrf.mxu0
    %v3921 = vadd.f32 %v3539, %v3920
    %3922 = vdwg.mxu0
    %3923 = vmatpush.bf16.msra.mxu0 %v3799
    %3924 = vmatpush.bf16.msra.mxu0 %v3795
    %3925 = vmatpush.bf16.msra.mxu0 %v3791
    %3926 = vmatpush.bf16.msra.mxu0 %v3787
    %3927 = vmatpush.bf16.msra.mxu0 %v3783
    %3928 = vmatpush.bf16.msra.mxu0 %v3779
    %3929 = vmatpush.bf16.msra.mxu0 %v3775
    %3930 = vmatpush.bf16.msra.mxu0 %v3771
    %3931 = vmatmul.bf16.gmra.mxu0 %v3469
    %v3932 = vpop.f32.mrf.mxu0
    %v3933 = vadd.f32 %v3914, %v3932
    %v3934 = vpop.f32.mrf.mxu0
    %v3935 = vadd.f32 %v3916, %v3934
    %3936 = vmatmul.bf16.gmra.mxu0 %v3471
    %v3937 = vpop.f32.mrf.mxu0
    %v3938 = vadd.f32 %v3919, %v3937
    %v3939 = vpop.f32.mrf.mxu0
    %v3940 = vadd.f32 %v3921, %v3939
    %3941 = vdwg.mxu0
    %3942 = vmatpush.bf16.msra.mxu0 %v3768
    %3943 = vmatpush.bf16.msra.mxu0 %v3764
    %3944 = vmatpush.bf16.msra.mxu0 %v3760
    %3945 = vmatpush.bf16.msra.mxu0 %v3756
    %3946 = vmatpush.bf16.msra.mxu0 %v3752
    %3947 = vmatpush.bf16.msra.mxu0 %v3748
    %3948 = vmatpush.bf16.msra.mxu0 %v3744
    %3949 = vmatpush.bf16.msra.mxu0 %v3740
    %3950 = vmatmul.bf16.gmra.mxu0 %v3468
    %v3951 = vpop.f32.mrf.mxu0
    %v3952 = vadd.f32 %v3540, %v3951
    %v3953 = vpop.f32.mrf.mxu0
    %v3954 = vadd.f32 %v3540, %v3953
    %3955 = vmatmul.bf16.gmra.mxu0 %v3470
    %v3956 = vpop.f32.mrf.mxu0
    %v3957 = vadd.f32 %v3540, %v3956
    %v3958 = vpop.f32.mrf.mxu0
    %v3959 = vadd.f32 %v3540, %v3958
    %3960 = vdwg.mxu0
    %3961 = vmatpush.bf16.msra.mxu0 %v3800
    %3962 = vmatpush.bf16.msra.mxu0 %v3796
    %3963 = vmatpush.bf16.msra.mxu0 %v3792
    %3964 = vmatpush.bf16.msra.mxu0 %v3788
    %3965 = vmatpush.bf16.msra.mxu0 %v3784
    %3966 = vmatpush.bf16.msra.mxu0 %v3780
    %3967 = vmatpush.bf16.msra.mxu0 %v3776
    %3968 = vmatpush.bf16.msra.mxu0 %v3772
    %3969 = vmatmul.bf16.gmra.mxu0 %v3469
    %v3970 = vpop.f32.mrf.mxu0
    %v3971 = vadd.f32 %v3952, %v3970
    %v3972 = vpop.f32.mrf.mxu0
    %v3973 = vadd.f32 %v3954, %v3972
    %3974 = vmatmul.bf16.gmra.mxu0 %v3471
    %v3975 = vpop.f32.mrf.mxu0
    %v3976 = vadd.f32 %v3957, %v3975
    %v3977 = vpop.f32.mrf.mxu0
    %v3978 = vadd.f32 %v3959, %v3977
    %3979 = vdwg.mxu0
    %3980 = vmatpush.bf16.msra.mxu0 %v3769
    %3981 = vmatpush.bf16.msra.mxu0 %v3765
    %3982 = vmatpush.bf16.msra.mxu0 %v3761
    %3983 = vmatpush.bf16.msra.mxu0 %v3757
    %3984 = vmatpush.bf16.msra.mxu0 %v3753
    %3985 = vmatpush.bf16.msra.mxu0 %v3749
    %3986 = vmatpush.bf16.msra.mxu0 %v3745
    %3987 = vmatpush.bf16.msra.mxu0 %v3741
    %3988 = vmatmul.bf16.gmra.mxu0 %v3468
    %v3989 = vpop.f32.mrf.mxu0
    %v3990 = vadd.f32 %v3541, %v3989
    %v3991 = vpop.f32.mrf.mxu0
    %v3992 = vadd.f32 %v3541, %v3991
    %3993 = vmatmul.bf16.gmra.mxu0 %v3470
    %v3994 = vpop.f32.mrf.mxu0
    %v3995 = vadd.f32 %v3541, %v3994
    %v3996 = vpop.f32.mrf.mxu0
    %v3997 = vadd.f32 %v3541, %v3996
    %3998 = vdwg.mxu0
    %3999 = vmatpush.bf16.msra.mxu0 %v3801
    %4000 = vmatpush.bf16.msra.mxu0 %v3797
    %4001 = vmatpush.bf16.msra.mxu0 %v3793
    %4002 = vmatpush.bf16.msra.mxu0 %v3789
    %4003 = vmatpush.bf16.msra.mxu0 %v3785
    %4004 = vmatpush.bf16.msra.mxu0 %v3781
    %4005 = vmatpush.bf16.msra.mxu0 %v3777
    %4006 = vmatpush.bf16.msra.mxu0 %v3773
    %4007 = vmatmul.bf16.gmra.mxu0 %v3469
    %v4008 = vpop.f32.mrf.mxu0
    %v4009 = vadd.f32 %v3990, %v4008
    %v4010 = vpop.f32.mrf.mxu0
    %v4011 = vadd.f32 %v3992, %v4010
    %4012 = vmatmul.bf16.gmra.mxu0 %v3471
    %v4013 = vpop.f32.mrf.mxu0
    %v4014 = vadd.f32 %v3995, %v4013
    %v4015 = vpop.f32.mrf.mxu0
    %v4016 = vadd.f32 %v3997, %v4015
    %4017 = vdwg.mxu0
    %v4018 = vmax.f32 %v3895, 0.0
    %v4019 = vmax.f32 %v3933, 0.0
    %v4020 = vmax.f32 %v3971, 0.0
    %v4021 = vmax.f32 %v4009, 0.0
    %v4022 = vmax.f32 %v3897, 0.0
    %v4023 = vmax.f32 %v3935, 0.0
    %v4024 = vmax.f32 %v3973, 0.0
    %v4025 = vmax.f32 %v4011, 0.0
    %v4026 = vmax.f32 %v3900, 0.0
    %v4027 = vmax.f32 %v3938, 0.0
    %v4028 = vmax.f32 %v3976, 0.0
    %v4029 = vmax.f32 %v4014, 0.0
    %v4030 = vmax.f32 %v3902, 0.0
    %v4031 = vmax.f32 %v3940, 0.0
    %v4032 = vmax.f32 %v3978, 0.0
    %v4033 = vmax.f32 %v4016, 0.0
    %v4034 = vpack.c.bf16 %v4022, %v4018
    %v4035 = vpack.c.bf16 %v4023, %v4019
    %v4036 = vpack.c.bf16 %v4024, %v4020
    %v4037 = vpack.c.bf16 %v4025, %v4021
    %v4038 = vpack.c.bf16 %v4030, %v4026
    %v4039 = vpack.c.bf16 %v4031, %v4027
    %v4040 = vpack.c.bf16 %v4032, %v4028
    %v4041 = vpack.c.bf16 %v4033, %v4029
    %v4042 = vld [vmem:[#allocation11] sm:$0xff]
    %v4043 = vld [vmem:[#allocation11 + $0x8] sm:$0xff]
    %v4044 = vld [vmem:[#allocation11 + $0x10] sm:$0xff]
    %v4045 = vld [vmem:[#allocation11 + $0x18] sm:$0xff]
    %v4046 = vld [vmem:[#allocation11 + $0x20] sm:$0xff]
    %v4047 = vld [vmem:[#allocation11 + $0x28] sm:$0xff]
    %v4048 = vld [vmem:[#allocation11 + $0x30] sm:$0xff]
    %v4049 = vld [vmem:[#allocation11 + $0x38] sm:$0xff]
    %v4050 = vld [vmem:[#allocation11 + $0x40] sm:$0xff]
    %v4051 = vld [vmem:[#allocation11 + $0x48] sm:$0xff]
    %v4052 = vld [vmem:[#allocation11 + $0x50] sm:$0xff]
    %v4053 = vld [vmem:[#allocation11 + $0x58] sm:$0xff]
    %v4054 = vld [vmem:[#allocation11 + $0x60] sm:$0xff]
    %v4055 = vld [vmem:[#allocation11 + $0x68] sm:$0xff]
    %v4056 = vld [vmem:[#allocation11 + $0x70] sm:$0xff]
    %v4057 = vld [vmem:[#allocation11 + $0x78] sm:$0xff]
    %v4058 = vld [vmem:[#allocation11 + $0x80] sm:$0xff]
    %v4059 = vld [vmem:[#allocation11 + $0x88] sm:$0xff]
    %v4060 = vld [vmem:[#allocation11 + $0x90] sm:$0xff]
    %v4061 = vld [vmem:[#allocation11 + $0x98] sm:$0xff]
    %v4062 = vld [vmem:[#allocation11 + $0xa0] sm:$0xff]
    %v4063 = vld [vmem:[#allocation11 + $0xa8] sm:$0xff]
    %v4064 = vld [vmem:[#allocation11 + $0xb0] sm:$0xff]
    %v4065 = vld [vmem:[#allocation11 + $0xb8] sm:$0xff]
    %v4066 = vld [vmem:[#allocation11 + $0xc0] sm:$0xff]
    %v4067 = vld [vmem:[#allocation11 + $0xc8] sm:$0xff]
    %v4068 = vld [vmem:[#allocation11 + $0xd0] sm:$0xff]
    %v4069 = vld [vmem:[#allocation11 + $0xd8] sm:$0xff]
    %v4070 = vld [vmem:[#allocation11 + $0xe0] sm:$0xff]
    %v4071 = vld [vmem:[#allocation11 + $0xe8] sm:$0xff]
    %v4072 = vld [vmem:[#allocation11 + $0xf0] sm:$0xff]
    %v4073 = vld [vmem:[#allocation11 + $0xf8] sm:$0xff]
    %v4074 = vld [vmem:[#allocation11 + $0x100] sm:$0xff]
    %v4075 = vld [vmem:[#allocation11 + $0x108] sm:$0xff]
    %v4076 = vld [vmem:[#allocation11 + $0x110] sm:$0xff]
    %v4077 = vld [vmem:[#allocation11 + $0x118] sm:$0xff]
    %v4078 = vld [vmem:[#allocation11 + $0x120] sm:$0xff]
    %v4079 = vld [vmem:[#allocation11 + $0x128] sm:$0xff]
    %v4080 = vld [vmem:[#allocation11 + $0x130] sm:$0xff]
    %v4081 = vld [vmem:[#allocation11 + $0x138] sm:$0xff]
    %v4082 = vld [vmem:[#allocation11 + $0x140] sm:$0xff]
    %v4083 = vld [vmem:[#allocation11 + $0x148] sm:$0xff]
    %v4084 = vld [vmem:[#allocation11 + $0x150] sm:$0xff]
    %v4085 = vld [vmem:[#allocation11 + $0x158] sm:$0xff]
    %v4086 = vld [vmem:[#allocation11 + $0x160] sm:$0xff]
    %v4087 = vld [vmem:[#allocation11 + $0x168] sm:$0xff]
    %v4088 = vld [vmem:[#allocation11 + $0x170] sm:$0xff]
    %v4089 = vld [vmem:[#allocation11 + $0x178] sm:$0xff]
    %v4090 = vld [vmem:[#allocation11 + $0x180] sm:$0xff]
    %v4091 = vld [vmem:[#allocation11 + $0x188] sm:$0xff]
    %v4092 = vld [vmem:[#allocation11 + $0x190] sm:$0xff]
    %v4093 = vld [vmem:[#allocation11 + $0x198] sm:$0xff]
    %v4094 = vld [vmem:[#allocation11 + $0x1a0] sm:$0xff]
    %v4095 = vld [vmem:[#allocation11 + $0x1a8] sm:$0xff]
    %v4096 = vld [vmem:[#allocation11 + $0x1b0] sm:$0xff]
    %v4097 = vld [vmem:[#allocation11 + $0x1b8] sm:$0xff]
    %v4098 = vld [vmem:[#allocation11 + $0x1c0] sm:$0xff]
    %v4099 = vld [vmem:[#allocation11 + $0x1c8] sm:$0xff]
    %v4100 = vld [vmem:[#allocation11 + $0x1d0] sm:$0xff]
    %v4101 = vld [vmem:[#allocation11 + $0x1d8] sm:$0xff]
    %v4102 = vld [vmem:[#allocation11 + $0x1e0] sm:$0xff]
    %v4103 = vld [vmem:[#allocation11 + $0x1e8] sm:$0xff]
    %v4104 = vld [vmem:[#allocation11 + $0x1f0] sm:$0xff]
    %v4105 = vld [vmem:[#allocation11 + $0x1f8] sm:$0xff]
    %v4106 = vld [vmem:[%s17] sm:$0x3]
    %v4108 = vperm.slane %v4106, 0
    %v4109 = vperm.slane %v4106, 1
    %v4176 = vunpack.c.l.b16 %v4042
    %v4177 = vunpack.c.h.b16 %v4042
    %v4178 = vunpack.c.l.b16 %v4043
    %v4179 = vunpack.c.h.b16 %v4043
    %v4180 = vunpack.c.l.b16 %v4044
    %v4181 = vunpack.c.h.b16 %v4044
    %v4182 = vunpack.c.l.b16 %v4045
    %v4183 = vunpack.c.h.b16 %v4045
    %v4184 = vunpack.c.l.b16 %v4046
    %v4185 = vunpack.c.h.b16 %v4046
    %v4186 = vunpack.c.l.b16 %v4047
    %v4187 = vunpack.c.h.b16 %v4047
    %v4188 = vunpack.c.l.b16 %v4048
    %v4189 = vunpack.c.h.b16 %v4048
    %v4190 = vunpack.c.l.b16 %v4049
    %v4191 = vunpack.c.h.b16 %v4049
    %v4192 = vunpack.c.l.b16 %v4050
    %v4193 = vunpack.c.h.b16 %v4050
    %v4194 = vunpack.c.l.b16 %v4051
    %v4195 = vunpack.c.h.b16 %v4051
    %v4196 = vunpack.c.l.b16 %v4052
    %v4197 = vunpack.c.h.b16 %v4052
    %v4198 = vunpack.c.l.b16 %v4053
    %v4199 = vunpack.c.h.b16 %v4053
    %v4200 = vunpack.c.l.b16 %v4054
    %v4201 = vunpack.c.h.b16 %v4054
    %v4202 = vunpack.c.l.b16 %v4055
    %v4203 = vunpack.c.h.b16 %v4055
    %v4204 = vunpack.c.l.b16 %v4056
    %v4205 = vunpack.c.h.b16 %v4056
    %v4206 = vunpack.c.l.b16 %v4057
    %v4207 = vunpack.c.h.b16 %v4057
    %v4208 = vunpack.c.l.b16 %v4058
    %v4209 = vunpack.c.h.b16 %v4058
    %v4210 = vunpack.c.l.b16 %v4059
    %v4211 = vunpack.c.h.b16 %v4059
    %v4212 = vunpack.c.l.b16 %v4060
    %v4213 = vunpack.c.h.b16 %v4060
    %v4214 = vunpack.c.l.b16 %v4061
    %v4215 = vunpack.c.h.b16 %v4061
    %v4216 = vunpack.c.l.b16 %v4062
    %v4217 = vunpack.c.h.b16 %v4062
    %v4218 = vunpack.c.l.b16 %v4063
    %v4219 = vunpack.c.h.b16 %v4063
    %v4220 = vunpack.c.l.b16 %v4064
    %v4221 = vunpack.c.h.b16 %v4064
    %v4222 = vunpack.c.l.b16 %v4065
    %v4223 = vunpack.c.h.b16 %v4065
    %v4224 = vunpack.c.l.b16 %v4066
    %v4225 = vunpack.c.h.b16 %v4066
    %v4226 = vunpack.c.l.b16 %v4067
    %v4227 = vunpack.c.h.b16 %v4067
    %v4228 = vunpack.c.l.b16 %v4068
    %v4229 = vunpack.c.h.b16 %v4068
    %v4230 = vunpack.c.l.b16 %v4069
    %v4231 = vunpack.c.h.b16 %v4069
    %v4232 = vunpack.c.l.b16 %v4070
    %v4233 = vunpack.c.h.b16 %v4070
    %v4234 = vunpack.c.l.b16 %v4071
    %v4235 = vunpack.c.h.b16 %v4071
    %v4236 = vunpack.c.l.b16 %v4072
    %v4237 = vunpack.c.h.b16 %v4072
    %v4238 = vunpack.c.l.b16 %v4073
    %v4239 = vunpack.c.h.b16 %v4073
    %v4240 = vunpack.c.l.b16 %v4074
    %v4241 = vunpack.c.h.b16 %v4074
    %v4242 = vunpack.c.l.b16 %v4075
    %v4243 = vunpack.c.h.b16 %v4075
    %v4244 = vunpack.c.l.b16 %v4076
    %v4245 = vunpack.c.h.b16 %v4076
    %v4246 = vunpack.c.l.b16 %v4077
    %v4247 = vunpack.c.h.b16 %v4077
    %v4248 = vunpack.c.l.b16 %v4078
    %v4249 = vunpack.c.h.b16 %v4078
    %v4250 = vunpack.c.l.b16 %v4079
    %v4251 = vunpack.c.h.b16 %v4079
    %v4252 = vunpack.c.l.b16 %v4080
    %v4253 = vunpack.c.h.b16 %v4080
    %v4254 = vunpack.c.l.b16 %v4081
    %v4255 = vunpack.c.h.b16 %v4081
    %v4256 = vunpack.c.l.b16 %v4082
    %v4257 = vunpack.c.h.b16 %v4082
    %v4258 = vunpack.c.l.b16 %v4083
    %v4259 = vunpack.c.h.b16 %v4083
    %v4260 = vunpack.c.l.b16 %v4084
    %v4261 = vunpack.c.h.b16 %v4084
    %v4262 = vunpack.c.l.b16 %v4085
    %v4263 = vunpack.c.h.b16 %v4085
    %v4264 = vunpack.c.l.b16 %v4086
    %v4265 = vunpack.c.h.b16 %v4086
    %v4266 = vunpack.c.l.b16 %v4087
    %v4267 = vunpack.c.h.b16 %v4087
    %v4268 = vunpack.c.l.b16 %v4088
    %v4269 = vunpack.c.h.b16 %v4088
    %v4270 = vunpack.c.l.b16 %v4089
    %v4271 = vunpack.c.h.b16 %v4089
    %v4272 = vunpack.c.l.b16 %v4090
    %v4273 = vunpack.c.h.b16 %v4090
    %v4274 = vunpack.c.l.b16 %v4091
    %v4275 = vunpack.c.h.b16 %v4091
    %v4276 = vunpack.c.l.b16 %v4092
    %v4277 = vunpack.c.h.b16 %v4092
    %v4278 = vunpack.c.l.b16 %v4093
    %v4279 = vunpack.c.h.b16 %v4093
    %v4280 = vunpack.c.l.b16 %v4094
    %v4281 = vunpack.c.h.b16 %v4094
    %v4282 = vunpack.c.l.b16 %v4095
    %v4283 = vunpack.c.h.b16 %v4095
    %v4284 = vunpack.c.l.b16 %v4096
    %v4285 = vunpack.c.h.b16 %v4096
    %v4286 = vunpack.c.l.b16 %v4097
    %v4287 = vunpack.c.h.b16 %v4097
    %v4288 = vunpack.c.l.b16 %v4098
    %v4289 = vunpack.c.h.b16 %v4098
    %v4290 = vunpack.c.l.b16 %v4099
    %v4291 = vunpack.c.h.b16 %v4099
    %v4292 = vunpack.c.l.b16 %v4100
    %v4293 = vunpack.c.h.b16 %v4100
    %v4294 = vunpack.c.l.b16 %v4101
    %v4295 = vunpack.c.h.b16 %v4101
    %v4296 = vunpack.c.l.b16 %v4102
    %v4297 = vunpack.c.h.b16 %v4102
    %v4298 = vunpack.c.l.b16 %v4103
    %v4299 = vunpack.c.h.b16 %v4103
    %v4300 = vunpack.c.l.b16 %v4104
    %v4301 = vunpack.c.h.b16 %v4104
    %v4302 = vunpack.c.l.b16 %v4105
    %v4303 = vunpack.c.h.b16 %v4105
    %v4304 = vpack.c.b16 %v4178, %v4176
    %v4305 = vpack.c.b16 %v4179, %v4177
    %v4306 = vpack.c.b16 %v4182, %v4180
    %v4307 = vpack.c.b16 %v4183, %v4181
    %v4308 = vpack.c.b16 %v4186, %v4184
    %v4309 = vpack.c.b16 %v4187, %v4185
    %v4310 = vpack.c.b16 %v4190, %v4188
    %v4311 = vpack.c.b16 %v4191, %v4189
    %v4312 = vpack.c.b16 %v4194, %v4192
    %v4313 = vpack.c.b16 %v4195, %v4193
    %v4314 = vpack.c.b16 %v4198, %v4196
    %v4315 = vpack.c.b16 %v4199, %v4197
    %v4316 = vpack.c.b16 %v4202, %v4200
    %v4317 = vpack.c.b16 %v4203, %v4201
    %v4318 = vpack.c.b16 %v4206, %v4204
    %v4319 = vpack.c.b16 %v4207, %v4205
    %v4320 = vpack.c.b16 %v4210, %v4208
    %v4321 = vpack.c.b16 %v4211, %v4209
    %v4322 = vpack.c.b16 %v4214, %v4212
    %v4323 = vpack.c.b16 %v4215, %v4213
    %v4324 = vpack.c.b16 %v4218, %v4216
    %v4325 = vpack.c.b16 %v4219, %v4217
    %v4326 = vpack.c.b16 %v4222, %v4220
    %v4327 = vpack.c.b16 %v4223, %v4221
    %v4328 = vpack.c.b16 %v4226, %v4224
    %v4329 = vpack.c.b16 %v4227, %v4225
    %v4330 = vpack.c.b16 %v4230, %v4228
    %v4331 = vpack.c.b16 %v4231, %v4229
    %v4332 = vpack.c.b16 %v4234, %v4232
    %v4333 = vpack.c.b16 %v4235, %v4233
    %v4334 = vpack.c.b16 %v4238, %v4236
    %v4335 = vpack.c.b16 %v4239, %v4237
    %v4336 = vpack.c.b16 %v4242, %v4240
    %v4337 = vpack.c.b16 %v4243, %v4241
    %v4338 = vpack.c.b16 %v4246, %v4244
    %v4339 = vpack.c.b16 %v4247, %v4245
    %v4340 = vpack.c.b16 %v4250, %v4248
    %v4341 = vpack.c.b16 %v4251, %v4249
    %v4342 = vpack.c.b16 %v4254, %v4252
    %v4343 = vpack.c.b16 %v4255, %v4253
    %v4344 = vpack.c.b16 %v4258, %v4256
    %v4345 = vpack.c.b16 %v4259, %v4257
    %v4346 = vpack.c.b16 %v4262, %v4260
    %v4347 = vpack.c.b16 %v4263, %v4261
    %v4348 = vpack.c.b16 %v4266, %v4264
    %v4349 = vpack.c.b16 %v4267, %v4265
    %v4350 = vpack.c.b16 %v4270, %v4268
    %v4351 = vpack.c.b16 %v4271, %v4269
    %v4352 = vpack.c.b16 %v4274, %v4272
    %v4353 = vpack.c.b16 %v4275, %v4273
    %v4354 = vpack.c.b16 %v4278, %v4276
    %v4355 = vpack.c.b16 %v4279, %v4277
    %v4356 = vpack.c.b16 %v4282, %v4280
    %v4357 = vpack.c.b16 %v4283, %v4281
    %v4358 = vpack.c.b16 %v4286, %v4284
    %v4359 = vpack.c.b16 %v4287, %v4285
    %v4360 = vpack.c.b16 %v4290, %v4288
    %v4361 = vpack.c.b16 %v4291, %v4289
    %v4362 = vpack.c.b16 %v4294, %v4292
    %v4363 = vpack.c.b16 %v4295, %v4293
    %v4364 = vpack.c.b16 %v4298, %v4296
    %v4365 = vpack.c.b16 %v4299, %v4297
    %v4366 = vpack.c.b16 %v4302, %v4300
    %v4367 = vpack.c.b16 %v4303, %v4301
    %4432 = vmatpush.bf16.msra.mxu0 %v4318
    %4433 = vmatpush.bf16.msra.mxu0 %v4316
    %4434 = vmatpush.bf16.msra.mxu0 %v4314
    %4435 = vmatpush.bf16.msra.mxu0 %v4312
    %4436 = vmatpush.bf16.msra.mxu0 %v4310
    %4437 = vmatpush.bf16.msra.mxu0 %v4308
    %4438 = vmatpush.bf16.msra.mxu0 %v4306
    %4439 = vmatpush.bf16.msra.mxu0 %v4304
    %4440 = vmatmul.bf16.gmra.mxu0 %v4034
    %v4441 = vpop.f32.mrf.mxu0
    %v4442 = vadd.f32 %v4108, %v4441
    %v4443 = vpop.f32.mrf.mxu0
    %v4444 = vadd.f32 %v4108, %v4443
    %4445 = vmatmul.bf16.gmra.mxu0 %v4038
    %v4446 = vpop.f32.mrf.mxu0
    %v4447 = vadd.f32 %v4108, %v4446
    %v4448 = vpop.f32.mrf.mxu0
    %v4449 = vadd.f32 %v4108, %v4448
    %4450 = vdwg.mxu0
    %4451 = vmatpush.bf16.msra.mxu0 %v4334
    %4452 = vmatpush.bf16.msra.mxu0 %v4332
    %4453 = vmatpush.bf16.msra.mxu0 %v4330
    %4454 = vmatpush.bf16.msra.mxu0 %v4328
    %4455 = vmatpush.bf16.msra.mxu0 %v4326
    %4456 = vmatpush.bf16.msra.mxu0 %v4324
    %4457 = vmatpush.bf16.msra.mxu0 %v4322
    %4458 = vmatpush.bf16.msra.mxu0 %v4320
    %4459 = vmatmul.bf16.gmra.mxu0 %v4035
    %v4460 = vpop.f32.mrf.mxu0
    %v4461 = vadd.f32 %v4442, %v4460
    %v4462 = vpop.f32.mrf.mxu0
    %v4463 = vadd.f32 %v4444, %v4462
    %4464 = vmatmul.bf16.gmra.mxu0 %v4039
    %v4465 = vpop.f32.mrf.mxu0
    %v4466 = vadd.f32 %v4447, %v4465
    %v4467 = vpop.f32.mrf.mxu0
    %v4468 = vadd.f32 %v4449, %v4467
    %4469 = vdwg.mxu0
    %4470 = vmatpush.bf16.msra.mxu0 %v4350
    %4471 = vmatpush.bf16.msra.mxu0 %v4348
    %4472 = vmatpush.bf16.msra.mxu0 %v4346
    %4473 = vmatpush.bf16.msra.mxu0 %v4344
    %4474 = vmatpush.bf16.msra.mxu0 %v4342
    %4475 = vmatpush.bf16.msra.mxu0 %v4340
    %4476 = vmatpush.bf16.msra.mxu0 %v4338
    %4477 = vmatpush.bf16.msra.mxu0 %v4336
    %4478 = vmatmul.bf16.gmra.mxu0 %v4036
    %v4479 = vpop.f32.mrf.mxu0
    %v4480 = vadd.f32 %v4461, %v4479
    %v4481 = vpop.f32.mrf.mxu0
    %v4482 = vadd.f32 %v4463, %v4481
    %4483 = vmatmul.bf16.gmra.mxu0 %v4040
    %v4484 = vpop.f32.mrf.mxu0
    %v4485 = vadd.f32 %v4466, %v4484
    %v4486 = vpop.f32.mrf.mxu0
    %v4487 = vadd.f32 %v4468, %v4486
    %4488 = vdwg.mxu0
    %4489 = vmatpush.bf16.msra.mxu0 %v4366
    %4490 = vmatpush.bf16.msra.mxu0 %v4364
    %4491 = vmatpush.bf16.msra.mxu0 %v4362
    %4492 = vmatpush.bf16.msra.mxu0 %v4360
    %4493 = vmatpush.bf16.msra.mxu0 %v4358
    %4494 = vmatpush.bf16.msra.mxu0 %v4356
    %4495 = vmatpush.bf16.msra.mxu0 %v4354
    %4496 = vmatpush.bf16.msra.mxu0 %v4352
    %4497 = vmatmul.bf16.gmra.mxu0 %v4037
    %v4498 = vpop.f32.mrf.mxu0
    %v4499 = vadd.f32 %v4480, %v4498
    %v4500 = vpop.f32.mrf.mxu0
    %v4501 = vadd.f32 %v4482, %v4500
    %4502 = vmatmul.bf16.gmra.mxu0 %v4041
    %v4503 = vpop.f32.mrf.mxu0
    %v4504 = vadd.f32 %v4485, %v4503
    %v4505 = vpop.f32.mrf.mxu0
    %v4506 = vadd.f32 %v4487, %v4505
    %4507 = vdwg.mxu0
    %4508 = vmatpush.bf16.msra.mxu0 %v4319
    %4509 = vmatpush.bf16.msra.mxu0 %v4317
    %4510 = vmatpush.bf16.msra.mxu0 %v4315
    %4511 = vmatpush.bf16.msra.mxu0 %v4313
    %4512 = vmatpush.bf16.msra.mxu0 %v4311
    %4513 = vmatpush.bf16.msra.mxu0 %v4309
    %4514 = vmatpush.bf16.msra.mxu0 %v4307
    %4515 = vmatpush.bf16.msra.mxu0 %v4305
    %4516 = vmatmul.bf16.gmra.mxu0 %v4034
    %v4517 = vpop.f32.mrf.mxu0
    %v4518 = vadd.f32 %v4109, %v4517
    %v4519 = vpop.f32.mrf.mxu0
    %v4520 = vadd.f32 %v4109, %v4519
    %4521 = vmatmul.bf16.gmra.mxu0 %v4038
    %v4522 = vpop.f32.mrf.mxu0
    %v4523 = vadd.f32 %v4109, %v4522
    %v4524 = vpop.f32.mrf.mxu0
    %v4525 = vadd.f32 %v4109, %v4524
    %4526 = vdwg.mxu0
    %4527 = vmatpush.bf16.msra.mxu0 %v4335
    %4528 = vmatpush.bf16.msra.mxu0 %v4333
    %4529 = vmatpush.bf16.msra.mxu0 %v4331
    %4530 = vmatpush.bf16.msra.mxu0 %v4329
    %4531 = vmatpush.bf16.msra.mxu0 %v4327
    %4532 = vmatpush.bf16.msra.mxu0 %v4325
    %4533 = vmatpush.bf16.msra.mxu0 %v4323
    %4534 = vmatpush.bf16.msra.mxu0 %v4321
    %4535 = vmatmul.bf16.gmra.mxu0 %v4035
    %v4536 = vpop.f32.mrf.mxu0
    %v4537 = vadd.f32 %v4518, %v4536
    %v4538 = vpop.f32.mrf.mxu0
    %v4539 = vadd.f32 %v4520, %v4538
    %4540 = vmatmul.bf16.gmra.mxu0 %v4039
    %v4541 = vpop.f32.mrf.mxu0
    %v4542 = vadd.f32 %v4523, %v4541
    %v4543 = vpop.f32.mrf.mxu0
    %v4544 = vadd.f32 %v4525, %v4543
    %4545 = vdwg.mxu0
    %4546 = vmatpush.bf16.msra.mxu0 %v4351
    %4547 = vmatpush.bf16.msra.mxu0 %v4349
    %4548 = vmatpush.bf16.msra.mxu0 %v4347
    %4549 = vmatpush.bf16.msra.mxu0 %v4345
    %4550 = vmatpush.bf16.msra.mxu0 %v4343
    %4551 = vmatpush.bf16.msra.mxu0 %v4341
    %4552 = vmatpush.bf16.msra.mxu0 %v4339
    %4553 = vmatpush.bf16.msra.mxu0 %v4337
    %4554 = vmatmul.bf16.gmra.mxu0 %v4036
    %v4555 = vpop.f32.mrf.mxu0
    %v4556 = vadd.f32 %v4537, %v4555
    %v4557 = vpop.f32.mrf.mxu0
    %v4558 = vadd.f32 %v4539, %v4557
    %4559 = vmatmul.bf16.gmra.mxu0 %v4040
    %v4560 = vpop.f32.mrf.mxu0
    %v4561 = vadd.f32 %v4542, %v4560
    %v4562 = vpop.f32.mrf.mxu0
    %v4563 = vadd.f32 %v4544, %v4562
    %4564 = vdwg.mxu0
    %4565 = vmatpush.bf16.msra.mxu0 %v4367
    %4566 = vmatpush.bf16.msra.mxu0 %v4365
    %4567 = vmatpush.bf16.msra.mxu0 %v4363
    %4568 = vmatpush.bf16.msra.mxu0 %v4361
    %4569 = vmatpush.bf16.msra.mxu0 %v4359
    %4570 = vmatpush.bf16.msra.mxu0 %v4357
    %4571 = vmatpush.bf16.msra.mxu0 %v4355
    %4572 = vmatpush.bf16.msra.mxu0 %v4353
    %4573 = vmatmul.bf16.gmra.mxu0 %v4037
    %v4574 = vpop.f32.mrf.mxu0
    %v4575 = vadd.f32 %v4556, %v4574
    %v4576 = vpop.f32.mrf.mxu0
    %v4577 = vadd.f32 %v4558, %v4576
    %4578 = vmatmul.bf16.gmra.mxu0 %v4041
    %v4579 = vpop.f32.mrf.mxu0
    %v4580 = vadd.f32 %v4561, %v4579
    %v4581 = vpop.f32.mrf.mxu0
    %v4582 = vadd.f32 %v4563, %v4581
    %4583 = vdwg.mxu0
    %v4584 = vadd.f32 %v4499, %v3460
    %v4585 = vadd.f32 %v4575, %v3461
    %v4586 = vadd.f32 %v4501, %v3462
    %v4587 = vadd.f32 %v4577, %v3463
    %v4588 = vadd.f32 %v4504, %v3464
    %v4589 = vadd.f32 %v4580, %v3465
    %v4590 = vadd.f32 %v4506, %v3466
    %v4591 = vadd.f32 %v4582, %v3467
    %v4592 = vld [vmem:[%s22] sm:$0x3]
    %v4593 = vld [vmem:[%s23] sm:$0x3]
    %v4594 = vadd.f32 %v4584, %v4585
    %4595 = vadd.xlane.f32.xlu0 %v4594
    %v4596 = vpop.xlane.xlu0 %4595
    %v4597 = vadd.f32 %v4586, %v4587
    %4598 = vadd.xlane.f32.xlu0 %v4597
    %v4599 = vpop.xlane.xlu0 %4598
    %v4600 = vadd.f32 %v4588, %v4589
    %4601 = vadd.xlane.f32.xlu0 %v4600
    %v4602 = vpop.xlane.xlu0 %4601
    %v4603 = vadd.f32 %v4590, %v4591
    %4604 = vadd.xlane.f32.xlu0 %v4603
    %v4605 = vpop.xlane.xlu0 %4604
    %v4606 = vmul.f32 %v4596, %v1759
    %v4607 = vmul.f32 %v4599, %v1759
    %v4608 = vmul.f32 %v4602, %v1759
    %v4609 = vmul.f32 %v4605, %v1759
    %v4610 = vsub.f32 %v4584, %v4606
    %v4611 = vsub.f32 %v4585, %v4606
    %v4612 = vsub.f32 %v4586, %v4607
    %v4613 = vsub.f32 %v4587, %v4607
    %v4614 = vsub.f32 %v4588, %v4608
    %v4615 = vsub.f32 %v4589, %v4608
    %v4616 = vsub.f32 %v4590, %v4609
    %v4617 = vsub.f32 %v4591, %v4609
    %v4618 = vmul.f32 %v4610, %v4610
    %v4619 = vmul.f32 %v4611, %v4611
    %v4620 = vmul.f32 %v4612, %v4612
    %v4621 = vmul.f32 %v4613, %v4613
    %v4622 = vmul.f32 %v4614, %v4614
    %v4623 = vmul.f32 %v4615, %v4615
    %v4624 = vmul.f32 %v4616, %v4616
    %v4625 = vmul.f32 %v4617, %v4617
    %v4626 = vadd.f32 %v4618, %v4619
    %4627 = vadd.xlane.f32.xlu0 %v4626
    %v4628 = vpop.xlane.xlu0 %4627
    %v4629 = vadd.f32 %v4620, %v4621
    %4630 = vadd.xlane.f32.xlu0 %v4629
    %v4631 = vpop.xlane.xlu0 %4630
    %v4632 = vadd.f32 %v4622, %v4623
    %4633 = vadd.xlane.f32.xlu0 %v4632
    %v4634 = vpop.xlane.xlu0 %4633
    %v4635 = vadd.f32 %v4624, %v4625
    %4636 = vadd.xlane.f32.xlu0 %v4635
    %v4637 = vpop.xlane.xlu0 %4636
    %v4638 = vmul.f32 %v4628, %v1759
    %v4639 = vmul.f32 %v4631, %v1759
    %v4640 = vmul.f32 %v4634, %v1759
    %v4641 = vmul.f32 %v4637, %v1759
    %v4642 = vadd.f32 %v4638, 1e-05
    %v4643 = vadd.f32 %v4639, 1e-05
    %v4644 = vadd.f32 %v4640, 1e-05
    %v4645 = vadd.f32 %v4641, 1e-05
    %v4646 = vrsqrt.pop %v4642
    %v4647 = vmul.f32 %v4646, %v4642
    %v4648 = vmul.f32 %v4647, %v4646
    %v4649 = vmul.f32 0.5, %v4648
    %v4650 = vsub.f32 1.5, %v4649
    %v4651 = vmul.f32 %v4646, %v4650
    %vm4652 = vweird.f32 %v4642
    %vm4653 = vweird.f32 %v4646
    %vm4654 = vmor %vm4652, %vm4653
    %v4655 = vsel %vm4654, %v4646, %v4651
    %v4656 = vrsqrt.pop %v4643
    %v4657 = vmul.f32 %v4656, %v4643
    %v4658 = vmul.f32 %v4657, %v4656
    %v4659 = vmul.f32 0.5, %v4658
    %v4660 = vsub.f32 1.5, %v4659
    %v4661 = vmul.f32 %v4656, %v4660
    %vm4662 = vweird.f32 %v4643
    %vm4663 = vweird.f32 %v4656
    %vm4664 = vmor %vm4662, %vm4663
    %v4665 = vsel %vm4664, %v4656, %v4661
    %v4666 = vrsqrt.pop %v4644
    %v4667 = vmul.f32 %v4666, %v4644
    %v4668 = vmul.f32 %v4667, %v4666
    %v4669 = vmul.f32 0.5, %v4668
    %v4670 = vsub.f32 1.5, %v4669
    %v4671 = vmul.f32 %v4666, %v4670
    %vm4672 = vweird.f32 %v4644
    %vm4673 = vweird.f32 %v4666
    %vm4674 = vmor %vm4672, %vm4673
    %v4675 = vsel %vm4674, %v4666, %v4671
    %v4676 = vrsqrt.pop %v4645
    %v4677 = vmul.f32 %v4676, %v4645
    %v4678 = vmul.f32 %v4677, %v4676
    %v4679 = vmul.f32 0.5, %v4678
    %v4680 = vsub.f32 1.5, %v4679
    %v4681 = vmul.f32 %v4676, %v4680
    %vm4682 = vweird.f32 %v4645
    %vm4683 = vweird.f32 %v4676
    %vm4684 = vmor %vm4682, %vm4683
    %v4685 = vsel %vm4684, %v4676, %v4681
    %v4686 = vmul.f32 %v4610, %v4655
    %v4687 = vmul.f32 %v4611, %v4655
    %v4688 = vmul.f32 %v4612, %v4665
    %v4689 = vmul.f32 %v4613, %v4665
    %v4690 = vmul.f32 %v4614, %v4675
    %v4691 = vmul.f32 %v4615, %v4675
    %v4692 = vmul.f32 %v4616, %v4685
    %v4693 = vmul.f32 %v4617, %v4685
    %v4695 = vperm.slane %v4592, 0
    %v4696 = vperm.slane %v4592, 1
    %v4699 = vmul.f32 %v4686, %v4695
    %v4700 = vmul.f32 %v4687, %v4696
    %v4701 = vmul.f32 %v4688, %v4695
    %v4702 = vmul.f32 %v4689, %v4696
    %v4703 = vmul.f32 %v4690, %v4695
    %v4704 = vmul.f32 %v4691, %v4696
    %v4705 = vmul.f32 %v4692, %v4695
    %v4706 = vmul.f32 %v4693, %v4696
    %v4708 = vperm.slane %v4593, 0
    %v4709 = vperm.slane %v4593, 1
    %v4712 = vadd.f32 %v4699, %v4708
    %v4713 = vadd.f32 %v4700, %v4709
    %v4714 = vadd.f32 %v4701, %v4708
    %v4715 = vadd.f32 %v4702, %v4709
    %v4716 = vadd.f32 %v4703, %v4708
    %v4717 = vadd.f32 %v4704, %v4709
    %v4718 = vadd.f32 %v4705, %v4708
    %v4719 = vadd.f32 %v4706, %v4709
    %v4720 = vpack.c.bf16 %v4714, %v4712
    %v4721 = vpack.c.bf16 %v4715, %v4713
    %v4722 = vpack.c.bf16 %v4718, %v4716
    %v4723 = vpack.c.bf16 %v4719, %v4717
    %v4724 = vld [vmem:[#allocation13] sm:$0xff]
    %v4725 = vld [vmem:[#allocation13 + $0x8] sm:$0xff]
    %v4726 = vld [vmem:[#allocation13 + $0x10] sm:$0xff]
    %v4727 = vld [vmem:[#allocation13 + $0x18] sm:$0xff]
    %v4728 = vld [vmem:[#allocation13 + $0x20] sm:$0xff]
    %v4729 = vld [vmem:[#allocation13 + $0x28] sm:$0xff]
    %v4730 = vld [vmem:[#allocation13 + $0x30] sm:$0xff]
    %v4731 = vld [vmem:[#allocation13 + $0x38] sm:$0xff]
    %v4732 = vld [vmem:[#allocation13 + $0x40] sm:$0xff]
    %v4733 = vld [vmem:[#allocation13 + $0x48] sm:$0xff]
    %v4734 = vld [vmem:[#allocation13 + $0x50] sm:$0xff]
    %v4735 = vld [vmem:[#allocation13 + $0x58] sm:$0xff]
    %v4736 = vld [vmem:[#allocation13 + $0x60] sm:$0xff]
    %v4737 = vld [vmem:[#allocation13 + $0x68] sm:$0xff]
    %v4738 = vld [vmem:[#allocation13 + $0x70] sm:$0xff]
    %v4739 = vld [vmem:[#allocation13 + $0x78] sm:$0xff]
    %v4740 = vld [vmem:[#allocation13 + $0x80] sm:$0xff]
    %v4741 = vld [vmem:[#allocation13 + $0x88] sm:$0xff]
    %v4742 = vld [vmem:[#allocation13 + $0x90] sm:$0xff]
    %v4743 = vld [vmem:[#allocation13 + $0x98] sm:$0xff]
    %v4744 = vld [vmem:[#allocation13 + $0xa0] sm:$0xff]
    %v4745 = vld [vmem:[#allocation13 + $0xa8] sm:$0xff]
    %v4746 = vld [vmem:[#allocation13 + $0xb0] sm:$0xff]
    %v4747 = vld [vmem:[#allocation13 + $0xb8] sm:$0xff]
    %v4748 = vld [vmem:[#allocation13 + $0xc0] sm:$0xff]
    %v4749 = vld [vmem:[#allocation13 + $0xc8] sm:$0xff]
    %v4750 = vld [vmem:[#allocation13 + $0xd0] sm:$0xff]
    %v4751 = vld [vmem:[#allocation13 + $0xd8] sm:$0xff]
    %v4752 = vld [vmem:[#allocation13 + $0xe0] sm:$0xff]
    %v4753 = vld [vmem:[#allocation13 + $0xe8] sm:$0xff]
    %v4754 = vld [vmem:[#allocation13 + $0xf0] sm:$0xff]
    %v4755 = vld [vmem:[#allocation13 + $0xf8] sm:$0xff]
    %v4756 = vld [vmem:[%s25] sm:$0x3]
    %v4758 = vperm.slane %v4756, 0
    %v4759 = vperm.slane %v4756, 1
    %v4794 = vunpack.c.l.b16 %v4724
    %v4795 = vunpack.c.h.b16 %v4724
    %v4796 = vunpack.c.l.b16 %v4725
    %v4797 = vunpack.c.h.b16 %v4725
    %v4798 = vunpack.c.l.b16 %v4726
    %v4799 = vunpack.c.h.b16 %v4726
    %v4800 = vunpack.c.l.b16 %v4727
    %v4801 = vunpack.c.h.b16 %v4727
    %v4802 = vunpack.c.l.b16 %v4728
    %v4803 = vunpack.c.h.b16 %v4728
    %v4804 = vunpack.c.l.b16 %v4729
    %v4805 = vunpack.c.h.b16 %v4729
    %v4806 = vunpack.c.l.b16 %v4730
    %v4807 = vunpack.c.h.b16 %v4730
    %v4808 = vunpack.c.l.b16 %v4731
    %v4809 = vunpack.c.h.b16 %v4731
    %v4810 = vunpack.c.l.b16 %v4732
    %v4811 = vunpack.c.h.b16 %v4732
    %v4812 = vunpack.c.l.b16 %v4733
    %v4813 = vunpack.c.h.b16 %v4733
    %v4814 = vunpack.c.l.b16 %v4734
    %v4815 = vunpack.c.h.b16 %v4734
    %v4816 = vunpack.c.l.b16 %v4735
    %v4817 = vunpack.c.h.b16 %v4735
    %v4818 = vunpack.c.l.b16 %v4736
    %v4819 = vunpack.c.h.b16 %v4736
    %v4820 = vunpack.c.l.b16 %v4737
    %v4821 = vunpack.c.h.b16 %v4737
    %v4822 = vunpack.c.l.b16 %v4738
    %v4823 = vunpack.c.h.b16 %v4738
    %v4824 = vunpack.c.l.b16 %v4739
    %v4825 = vunpack.c.h.b16 %v4739
    %v4826 = vunpack.c.l.b16 %v4740
    %v4827 = vunpack.c.h.b16 %v4740
    %v4828 = vunpack.c.l.b16 %v4741
    %v4829 = vunpack.c.h.b16 %v4741
    %v4830 = vunpack.c.l.b16 %v4742
    %v4831 = vunpack.c.h.b16 %v4742
    %v4832 = vunpack.c.l.b16 %v4743
    %v4833 = vunpack.c.h.b16 %v4743
    %v4834 = vunpack.c.l.b16 %v4744
    %v4835 = vunpack.c.h.b16 %v4744
    %v4836 = vunpack.c.l.b16 %v4745
    %v4837 = vunpack.c.h.b16 %v4745
    %v4838 = vunpack.c.l.b16 %v4746
    %v4839 = vunpack.c.h.b16 %v4746
    %v4840 = vunpack.c.l.b16 %v4747
    %v4841 = vunpack.c.h.b16 %v4747
    %v4842 = vunpack.c.l.b16 %v4748
    %v4843 = vunpack.c.h.b16 %v4748
    %v4844 = vunpack.c.l.b16 %v4749
    %v4845 = vunpack.c.h.b16 %v4749
    %v4846 = vunpack.c.l.b16 %v4750
    %v4847 = vunpack.c.h.b16 %v4750
    %v4848 = vunpack.c.l.b16 %v4751
    %v4849 = vunpack.c.h.b16 %v4751
    %v4850 = vunpack.c.l.b16 %v4752
    %v4851 = vunpack.c.h.b16 %v4752
    %v4852 = vunpack.c.l.b16 %v4753
    %v4853 = vunpack.c.h.b16 %v4753
    %v4854 = vunpack.c.l.b16 %v4754
    %v4855 = vunpack.c.h.b16 %v4754
    %v4856 = vunpack.c.l.b16 %v4755
    %v4857 = vunpack.c.h.b16 %v4755
    %v4858 = vpack.c.b16 %v4796, %v4794
    %v4859 = vpack.c.b16 %v4797, %v4795
    %v4860 = vpack.c.b16 %v4800, %v4798
    %v4861 = vpack.c.b16 %v4801, %v4799
    %v4862 = vpack.c.b16 %v4804, %v4802
    %v4863 = vpack.c.b16 %v4805, %v4803
    %v4864 = vpack.c.b16 %v4808, %v4806
    %v4865 = vpack.c.b16 %v4809, %v4807
    %v4866 = vpack.c.b16 %v4812, %v4810
    %v4867 = vpack.c.b16 %v4813, %v4811
    %v4868 = vpack.c.b16 %v4816, %v4814
    %v4869 = vpack.c.b16 %v4817, %v4815
    %v4870 = vpack.c.b16 %v4820, %v4818
    %v4871 = vpack.c.b16 %v4821, %v4819
    %v4872 = vpack.c.b16 %v4824, %v4822
    %v4873 = vpack.c.b16 %v4825, %v4823
    %v4874 = vpack.c.b16 %v4828, %v4826
    %v4875 = vpack.c.b16 %v4829, %v4827
    %v4876 = vpack.c.b16 %v4832, %v4830
    %v4877 = vpack.c.b16 %v4833, %v4831
    %v4878 = vpack.c.b16 %v4836, %v4834
    %v4879 = vpack.c.b16 %v4837, %v4835
    %v4880 = vpack.c.b16 %v4840, %v4838
    %v4881 = vpack.c.b16 %v4841, %v4839
    %v4882 = vpack.c.b16 %v4844, %v4842
    %v4883 = vpack.c.b16 %v4845, %v4843
    %v4884 = vpack.c.b16 %v4848, %v4846
    %v4885 = vpack.c.b16 %v4849, %v4847
    %v4886 = vpack.c.b16 %v4852, %v4850
    %v4887 = vpack.c.b16 %v4853, %v4851
    %v4888 = vpack.c.b16 %v4856, %v4854
    %v4889 = vpack.c.b16 %v4857, %v4855
    %4922 = vmatpush.bf16.msra.mxu0 %v4872
    %4923 = vmatpush.bf16.msra.mxu0 %v4870
    %4924 = vmatpush.bf16.msra.mxu0 %v4868
    %4925 = vmatpush.bf16.msra.mxu0 %v4866
    %4926 = vmatpush.bf16.msra.mxu0 %v4864
    %4927 = vmatpush.bf16.msra.mxu0 %v4862
    %4928 = vmatpush.bf16.msra.mxu0 %v4860
    %4929 = vmatpush.bf16.msra.mxu0 %v4858
    %4930 = vmatmul.bf16.gmra.mxu0 %v4720
    %v4931 = vpop.f32.mrf.mxu0
    %v4932 = vadd.f32 %v4758, %v4931
    %v4933 = vpop.f32.mrf.mxu0
    %v4934 = vadd.f32 %v4758, %v4933
    %4935 = vmatmul.bf16.gmra.mxu0 %v4722
    %v4936 = vpop.f32.mrf.mxu0
    %v4937 = vadd.f32 %v4758, %v4936
    %v4938 = vpop.f32.mrf.mxu0
    %v4939 = vadd.f32 %v4758, %v4938
    %4940 = vdwg.mxu0
    %4941 = vmatpush.bf16.msra.mxu0 %v4888
    %4942 = vmatpush.bf16.msra.mxu0 %v4886
    %4943 = vmatpush.bf16.msra.mxu0 %v4884
    %4944 = vmatpush.bf16.msra.mxu0 %v4882
    %4945 = vmatpush.bf16.msra.mxu0 %v4880
    %4946 = vmatpush.bf16.msra.mxu0 %v4878
    %4947 = vmatpush.bf16.msra.mxu0 %v4876
    %4948 = vmatpush.bf16.msra.mxu0 %v4874
    %4949 = vmatmul.bf16.gmra.mxu0 %v4721
    %v4950 = vpop.f32.mrf.mxu0
    %v4951 = vadd.f32 %v4932, %v4950
    %v4952 = vpop.f32.mrf.mxu0
    %v4953 = vadd.f32 %v4934, %v4952
    %4954 = vmatmul.bf16.gmra.mxu0 %v4723
    %v4955 = vpop.f32.mrf.mxu0
    %v4956 = vadd.f32 %v4937, %v4955
    %v4957 = vpop.f32.mrf.mxu0
    %v4958 = vadd.f32 %v4939, %v4957
    %4959 = vdwg.mxu0
    %4960 = vmatpush.bf16.msra.mxu0 %v4873
    %4961 = vmatpush.bf16.msra.mxu0 %v4871
    %4962 = vmatpush.bf16.msra.mxu0 %v4869
    %4963 = vmatpush.bf16.msra.mxu0 %v4867
    %4964 = vmatpush.bf16.msra.mxu0 %v4865
    %4965 = vmatpush.bf16.msra.mxu0 %v4863
    %4966 = vmatpush.bf16.msra.mxu0 %v4861
    %4967 = vmatpush.bf16.msra.mxu0 %v4859
    %4968 = vmatmul.bf16.gmra.mxu0 %v4720
    %v4969 = vpop.f32.mrf.mxu0
    %v4970 = vadd.f32 %v4759, %v4969
    %v4971 = vpop.f32.mrf.mxu0
    %v4972 = vadd.f32 %v4759, %v4971
    %4973 = vmatmul.bf16.gmra.mxu0 %v4722
    %v4974 = vpop.f32.mrf.mxu0
    %v4975 = vadd.f32 %v4759, %v4974
    %v4976 = vpop.f32.mrf.mxu0
    %v4977 = vadd.f32 %v4759, %v4976
    %4978 = vdwg.mxu0
    %4979 = vmatpush.bf16.msra.mxu0 %v4889
    %4980 = vmatpush.bf16.msra.mxu0 %v4887
    %4981 = vmatpush.bf16.msra.mxu0 %v4885
    %4982 = vmatpush.bf16.msra.mxu0 %v4883
    %4983 = vmatpush.bf16.msra.mxu0 %v4881
    %4984 = vmatpush.bf16.msra.mxu0 %v4879
    %4985 = vmatpush.bf16.msra.mxu0 %v4877
    %4986 = vmatpush.bf16.msra.mxu0 %v4875
    %4987 = vmatmul.bf16.gmra.mxu0 %v4721
    %v4988 = vpop.f32.mrf.mxu0
    %v4989 = vadd.f32 %v4970, %v4988
    %v4990 = vpop.f32.mrf.mxu0
    %v4991 = vadd.f32 %v4972, %v4990
    %4992 = vmatmul.bf16.gmra.mxu0 %v4723
    %v4993 = vpop.f32.mrf.mxu0
    %v4994 = vadd.f32 %v4975, %v4993
    %v4995 = vpop.f32.mrf.mxu0
    %v4996 = vadd.f32 %v4977, %v4995
    %4997 = vdwg.mxu0
    %v4998 = vmax.f32 %v4951, %v4989
    %4999 = vmax.xlane.f32.xlu0 %v4998
    %v5000 = vpop.xlane.xlu0 %4999
    %v5001 = vmax.f32 %v4953, %v4991
    %5002 = vmax.xlane.f32.xlu0 %v5001
    %v5003 = vpop.xlane.xlu0 %5002
    %v5004 = vmax.f32 %v4956, %v4994
    %5005 = vmax.xlane.f32.xlu0 %v5004
    %v5006 = vpop.xlane.xlu0 %5005
    %v5007 = vmax.f32 %v4958, %v4996
    %5008 = vmax.xlane.f32.xlu0 %v5007
    %v5009 = vpop.xlane.xlu0 %5008
    %v5010 = vsub.f32 %v4951, %v5000
    %v5011 = vsub.f32 %v4989, %v5000
    %v5012 = vsub.f32 %v4953, %v5003
    %v5013 = vsub.f32 %v4991, %v5003
    %v5014 = vsub.f32 %v4956, %v5006
    %v5015 = vsub.f32 %v4994, %v5006
    %v5016 = vsub.f32 %v4958, %v5009
    %v5017 = vsub.f32 %v4996, %v5009
    %v5018 = vmul.f32 %v5010, 1.442695
    %v5019 = vpow.pop %v5018
    %v5020 = vmul.f32 %v5011, 1.442695
    %v5021 = vpow.pop %v5020
    %v5022 = vmul.f32 %v5012, 1.442695
    %v5023 = vpow.pop %v5022
    %v5024 = vmul.f32 %v5013, 1.442695
    %v5025 = vpow.pop %v5024
    %v5026 = vmul.f32 %v5014, 1.442695
    %v5027 = vpow.pop %v5026
    %v5028 = vmul.f32 %v5015, 1.442695
    %v5029 = vpow.pop %v5028
    %v5030 = vmul.f32 %v5016, 1.442695
    %v5031 = vpow.pop %v5030
    %v5032 = vmul.f32 %v5017, 1.442695
    %v5033 = vpow.pop %v5032
    %v5034 = vadd.f32 %v5019, %v5021
    %5035 = vadd.xlane.f32.xlu0 %v5034
    %v5036 = vpop.xlane.xlu0 %5035
    %v5037 = vadd.f32 %v5023, %v5025
    %5038 = vadd.xlane.f32.xlu0 %v5037
    %v5039 = vpop.xlane.xlu0 %5038
    %v5040 = vadd.f32 %v5027, %v5029
    %5041 = vadd.xlane.f32.xlu0 %v5040
    %v5042 = vpop.xlane.xlu0 %5041
    %v5043 = vadd.f32 %v5031, %v5033
    %5044 = vadd.xlane.f32.xlu0 %v5043
    %v5045 = vpop.xlane.xlu0 %5044
    %v5046 = vrcp.pop %v5036
    %v5047 = vmul.f32 %v5036, %v5046
    %v5048 = vsub.f32 1.0, %v5047
    %v5049 = vmul.f32 %v5046, %v5048
    %v5050 = vadd.f32 %v5046, %v5049
    %vm5051 = vweird.f32 %v5036
    %vm5052 = vweird.f32 %v5046
    %vm5053 = vmor %vm5051, %vm5052
    %v5054 = vsel %vm5053, %v5046, %v5050
    %v5055 = vand.u32 2147483647, %v5036
    %vm5056 = vcmp.eq.f32.partialorder %v5055, 8.507059e+37
    %v5057 = vand.u32 %v5036, 2147483648
    %v5058 = vor.u32 1.1754944e-38, %v5057
    %v5059 = vsel %vm5056, %v5058, %v5054
    %v5060 = vrcp.pop %v5039
    %v5061 = vmul.f32 %v5039, %v5060
    %v5062 = vsub.f32 1.0, %v5061
    %v5063 = vmul.f32 %v5060, %v5062
    %v5064 = vadd.f32 %v5060, %v5063
    %vm5065 = vweird.f32 %v5039
    %vm5066 = vweird.f32 %v5060
    %vm5067 = vmor %vm5065, %vm5066
    %v5068 = vsel %vm5067, %v5060, %v5064
    %v5069 = vand.u32 2147483647, %v5039
    %vm5070 = vcmp.eq.f32.partialorder %v5069, 8.507059e+37
    %v5071 = vand.u32 %v5039, 2147483648
    %v5072 = vor.u32 1.1754944e-38, %v5071
    %v5073 = vsel %vm5070, %v5072, %v5068
    %v5074 = vrcp.pop %v5042
    %v5075 = vmul.f32 %v5042, %v5074
    %v5076 = vsub.f32 1.0, %v5075
    %v5077 = vmul.f32 %v5074, %v5076
    %v5078 = vadd.f32 %v5074, %v5077
    %vm5079 = vweird.f32 %v5042
    %vm5080 = vweird.f32 %v5074
    %vm5081 = vmor %vm5079, %vm5080
    %v5082 = vsel %vm5081, %v5074, %v5078
    %v5083 = vand.u32 2147483647, %v5042
    %vm5084 = vcmp.eq.f32.partialorder %v5083, 8.507059e+37
    %v5085 = vand.u32 %v5042, 2147483648
    %v5086 = vor.u32 1.1754944e-38, %v5085
    %v5087 = vsel %vm5084, %v5086, %v5082
    %v5088 = vrcp.pop %v5045
    %v5089 = vmul.f32 %v5045, %v5088
    %v5090 = vsub.f32 1.0, %v5089
    %v5091 = vmul.f32 %v5088, %v5090
    %v5092 = vadd.f32 %v5088, %v5091
    %vm5093 = vweird.f32 %v5045
    %vm5094 = vweird.f32 %v5088
    %vm5095 = vmor %vm5093, %vm5094
    %v5096 = vsel %vm5095, %v5088, %v5092
    %v5097 = vand.u32 2147483647, %v5045
    %vm5098 = vcmp.eq.f32.partialorder %v5097, 8.507059e+37
    %v5099 = vand.u32 %v5045, 2147483648
    %v5100 = vor.u32 1.1754944e-38, %v5099
    %v5101 = vsel %vm5098, %v5100, %v5096
    %v5102 = vmul.f32 %v5019, %v5059
    %v5103 = vmul.f32 %v5021, %v5059
    %v5104 = vmul.f32 %v5023, %v5073
    %v5105 = vmul.f32 %v5025, %v5073
    %v5106 = vmul.f32 %v5027, %v5087
    %v5107 = vmul.f32 %v5029, %v5087
    %v5108 = vmul.f32 %v5031, %v5101
    %v5109 = vmul.f32 %v5033, %v5101
    %5110 = vst [vmem:[#allocation14] sm:$0xff] %v5102
    %5111 = vst [vmem:[#allocation14 + $0x8] sm:$0xff] %v5103
    %5112 = vst [vmem:[#allocation14 + $0x10] sm:$0xff] %v5104
    %5113 = vst [vmem:[#allocation14 + $0x18] sm:$0xff] %v5105
    %5114 = vst [vmem:[#allocation14 + $0x20] sm:$0xff] %v5106
    %5115 = vst [vmem:[#allocation14 + $0x28] sm:$0xff] %v5107
    %5116 = vst [vmem:[#allocation14 + $0x30] sm:$0xff] %v5108
    %5117 = vst [vmem:[#allocation14 + $0x38] sm:$0xff] %v5109
    // Predicated region
    $region134: #{transformer_decoder_block.1} parent=1 // pred_check
      _
    $region135: #{transformer_decoder_block.1} parent=1 // pred_check_branch
      %5119 = sbr.rel (0) target = $region137
    $region136: #{transformer_decoder_block.1} parent=1 // pred_region
      %5121 = vsyncadd [#allocation4], 0
      %s5122 = sshll.u32 [#allocation14], 4
      %s5123 = int_to_ptr.vmem [resolvable:$true] %s5122
      %s5124 = sshll.u32 %s26, 4
      %s5125 = int_to_ptr.hbm [resolvable:$true] %s5124
      %5130 = dma.vmem_to_hbm [thread:$0]  %s5123, 1024, %s5125, [#allocation4], 256, 256, 16
    $region137: #{transformer_decoder_block.1} parent=1 // pred_fallthru
      _
    // Predicated region
    $region138: #{transformer_decoder_block.1} parent=1 // pred_check
      _
    $region139: #{transformer_decoder_block.1} parent=1 // pred_check_branch
      %5132 = sbr.rel (0) target = $region141
    $region140: #{transformer_decoder_block.1} parent=1 // pred_region
      %5134 = dma.done [#allocation4], 1024
    $region141: #{transformer_decoder_block.1} parent=1 // pred_fallthru
      _
    %5135 = vsyncpa [#allocation3], 1
    %5136 = vsyncpa [#allocation6], 1
    %5137 = vsyncpa [#allocation9], 1
    %5138 = vsyncpa [#allocation12], 1
    %5139 = vsyncpa [#allocation4], 1

</llo_original>
